<compile_context>
chip_gen: v5e
topology: v5e:2x2
jax: 0.10.0
libtpu: 0.0.40
codegen_flags: <defaults>
</compile_context>

<pallas_src>
import functools

import jax
import jax.numpy as jnp
from jax.experimental import pallas as pl
from jax.experimental.pallas import tpu as pltpu


def _round_up(v, m):
    return -(-v // m) * m


@functools.lru_cache(maxsize=None)
def _vmem_limit_bytes():
    # Per-generation scoped-VMEM budget: ~3/4 of physical, capped at 96 MiB.
    #   v5e/v6e (128 MiB physical) -> 96 MiB ; v7x (64 MiB physical) -> 48 MiB.
    cap = 128 * 1024 * 1024
    try:
        cap = int(getattr(pltpu.get_tpu_info(), "vmem_capacity_bytes", cap))
    except Exception:
        pass
    return int(min((cap * 3) // 4, 96 * 1024 * 1024))


# ----------------------------- Pallas kernels -----------------------------

def conv_relu_pool_kernel(xd_ref, w_ref, b_ref, o_ref, *, cin, wh):
    """Fused Conv2d(3x3, pad=1) + ReLU + MaxPool2d(2,2) on one lane tile.

    xd_ref: (2, 2, Cin, TL) f32  phase-deinterleaved zero-padded activation block.
            Per-image lane stride S (multiple of 128); within an image, lane i*wh + j
            of plane (sy, sx) holds x_pad[2i+sy, 2j+sx].
    w_ref : (Cout, 9*Cin) bf16   conv weights, tap-major (dy*3+dx), cin-minor.
    b_ref : (Cout, 1)  f32
    o_ref : (Cout, TL) f32       pooled output; per-image lane q = yp*wh + xp
            (only yp, xp < wh-1 are valid; over-computed lanes are discarded by
            the wrapper).
    """
    w = w_ref[...]
    # 4 base loads, reused by all taps / phases.
    base = {(sy, sx): xd_ref[sy, sx] for sy in range(2) for sx in range(2)}

    shifted = {}

    def piece(sy, ky, sx, kx):
        # Tap value for output lane q is input lane q + off, off = ky*wh + kx (<= wh+1).
        key = (sy, ky, sx, kx)
        if key not in shifted:
            off = ky * wh + kx
            p = base[(sy, sx)]
            if off:
                # Shift left by `off`; the zero tail only ever lands on over-compute lanes.
                p = jnp.concatenate(
                    [p[:, off:], jnp.zeros((cin, off), p.dtype)], axis=-1)
            shifted[key] = p
        return shifted[key]

    def phase(py, px):
        taps = []
        for dy in range(3):
            for dx in range(3):
                a, c = py + dy, px + dx
                taps.append(piece(a % 2, a // 2, c % 2, c // 2))
        rhs = jnp.concatenate(taps, axis=0).astype(jnp.bfloat16)      # (9*Cin, TL)
        return jax.lax.dot_general(
            w, rhs, dimension_numbers=(((1,), (0,)), ((), ())),
            preferred_element_type=jnp.float32)

    # Elementwise max over the 4 pool phases IS the 2x2 maxpool; bias is phase-invariant
    # and ReLU monotone, so max -> +bias -> relu == conv -> +bias -> relu -> maxpool.
    m = jnp.maximum(jnp.maximum(phase(0, 0), phase(0, 1)),
                    jnp.maximum(phase(1, 0), phase(1, 1)))
    o_ref[...] = jnp.maximum(m + b_ref[...], 0.0)


def mlp_kernel(x_ref, w1_ref, b1_ref, w2_ref, b2_ref, o_ref):
    # Linear -> ReLU -> Linear on a row tile of the batch (shared by localization_fc
    # and the classifier).
    h = jnp.dot(x_ref[...], w1_ref[...], preferred_element_type=jnp.float32) + b1_ref[...]
    h = jnp.maximum(h, 0.0)
    # TODO(synk): nn.Dropout between the classifier Linears is identity in eval mode;
    # training-mode stochastic dropout is not implemented.
    o_ref[...] = jnp.dot(h, w2_ref[...], preferred_element_type=jnp.float32) + b2_ref[...]


def stn_sample_kernel(theta_ref, base_ref, x_ref, o_ref, *, h, w, nb):
    """F.affine_grid + F.grid_sample (bilinear, zeros padding, align_corners=False) for a
    block of `nb` images; theta is precomputed by the batched MLP kernel.

    theta_ref: (NB, 6); base_ref: (2, HW) normalized (x, y) base grid rows;
    x_ref: (NB, 1, H, W); o_ref: (NB, 1, HW) lane-dense resampled images.
    """
    bx = base_ref[0:1, :]
    by = base_ref[1:2, :]
    col_iota = jax.lax.broadcasted_iota(jnp.int32, (w, h * w), 0)     # (W, HW)
    row_iota = jax.lax.broadcasted_iota(jnp.int32, (h, h * w), 0)     # (H, HW)
    theta = theta_ref[...]                                            # (NB, 6)

    for m in range(nb):                        # static unroll over the image block
        th = theta[m:m + 1, :]                                        # (1, 6)
        gx = th[:, 0:1] * bx + th[:, 1:2] * by + th[:, 2:3]
        gy = th[:, 3:4] * bx + th[:, 4:5] * by + th[:, 5:6]
        # unnormalize (align_corners=False): ix = ((gx + 1) * W - 1) / 2
        ix = ((gx + 1.0) * float(w) - 1.0) * 0.5
        iy = ((gy + 1.0) * float(h) - 1.0) * 0.5
        ix0f = jnp.floor(ix)
        iy0f = jnp.floor(iy)
        wx1 = ix - ix0f
        wy1 = iy - iy0f
        ix0 = ix0f.astype(jnp.int32)
        iy0 = iy0f.astype(jnp.int32)
        ix1 = ix0 + 1
        iy1 = iy0 + 1

        img = x_ref[m, 0]                                             # (H, W)
        # x-gather on the MXU (OOB columns -> all-zero one-hot -> zeros padding)
        oh_x0 = (col_iota == ix0).astype(jnp.float32)
        oh_x1 = (col_iota == ix1).astype(jnp.float32)
        col0 = jnp.dot(img, oh_x0, preferred_element_type=jnp.float32)  # (H, HW)
        col1 = jnp.dot(img, oh_x1, preferred_element_type=jnp.float32)  # (H, HW)
        colmix = col0 + wx1 * (col1 - col0)
        # y-gather as weighted one-hot mask + sublane reduction (OOB rows -> zero mask)
        m0 = (row_iota == iy0).astype(jnp.float32)
        m1 = (row_iota == iy1).astype(jnp.float32)
        ymask = m0 + wy1 * (m1 - m0)
        o_ref[m] = jnp.sum(ymask * colmix, axis=0, keepdims=True)       # (1, HW)


# ----------------------------- wrappers (glue) -----------------------------

def _deinterleave(x_cn, s_img):
    # (Cin, N, H, W) -> (2, 2, Cin, N*s_img): pad spatially by 1, split both spatial axes
    # into (half, parity), flatten the (H/2+1, W/2+1) half-grid onto lanes and pad each
    # image's lane region to the 128-aligned stride s_img.
    cin, n, h, w = x_cn.shape
    hh, wh = h // 2 + 1, w // 2 + 1
    xp = jnp.pad(x_cn, ((0, 0), (0, 0), (1, 1), (1, 1)))
    xp = xp.reshape(cin, n, hh, 2, wh, 2)
    xd = jnp.transpose(xp, (3, 5, 0, 1, 2, 4)).reshape(2, 2, cin, n, hh * wh)
    xd = jnp.pad(xd, ((0, 0), (0, 0), (0, 0), (0, 0), (0, s_img - hh * wh)))
    return xd.reshape(2, 2, cin, n * s_img)


def conv3x3_relu_pool(x_cn, w, b, *, imgs_per_tile=16):
    # x_cn: (Cin, N, H, W); w: (Cout, Cin, 3, 3); b: (Cout,) -> (Cout, N, H//2, W//2)
    cin, n, h, wd = x_cn.shape
    assert h % 2 == 0 and wd % 2 == 0
    cout = w.shape[0]
    hp, wp = h // 2, wd // 2
    hh, wh = hp + 1, wp + 1
    s_img = _round_up(hh * wh, 128)            # per-image lane stride (256 for 28x28, 128 for 14x14)

    nb = min(n, imgs_per_tile)
    n_pad = _round_up(n, nb)
    if n_pad != n:
        x_cn = jnp.pad(x_cn, ((0, 0), (0, n_pad - n), (0, 0), (0, 0)))
    xd = _deinterleave(x_cn.astype(jnp.float32), s_img)       # (2, 2, Cin, L)
    lanes = n_pad * s_img
    tl = nb * s_img                                           # lane tile (multiple of 128)

    w_mat = jnp.transpose(w, (0, 2, 3, 1)).reshape(cout, 9 * cin).astype(jnp.bfloat16)
    b_col = b.reshape(cout, 1).astype(jnp.float32)

    kern = functools.partial(conv_relu_pool_kernel, cin=cin, wh=wh)
    out = pl.pallas_call(
        kern,
        out_shape=jax.ShapeDtypeStruct((cout, lanes), jnp.float32),
        grid=(lanes // tl,),
        in_specs=[
            pl.BlockSpec((2, 2, cin, tl), lambda j: (0, 0, 0, j)),
            pl.BlockSpec((cout, 9 * cin), lambda j: (0, 0)),
            pl.BlockSpec((cout, 1), lambda j: (0, 0)),
        ],
        out_specs=pl.BlockSpec((cout, tl), lambda j: (0, j)),
        compiler_params=pltpu.CompilerParams(
            dimension_semantics=("parallel",),
            vmem_limit_bytes=_vmem_limit_bytes()),
    )(xd, w_mat, b_col)

    # Drop the over-computed lanes: (Cout, L) -> (Cout, N, Hp, Wp).
    out = out.reshape(cout, n_pad, s_img)[:, :n, :hh * wh]
    return out.reshape(cout, n, hh, wh)[:, :, :hp, :wp]


def mlp2(x, w1, b1, w2, b2, *, rows_per_tile=256):
    # Linear -> ReLU -> Linear for the whole batch, gridded over row tiles.
    n, fin = x.shape
    hid = w1.shape[1]
    k = w2.shape[1]
    tn = n if n <= rows_per_tile else rows_per_tile
    n_pad = _round_up(n, tn)
    xp = x if n_pad == n else jnp.pad(x, ((0, n_pad - n), (0, 0)))
    out = pl.pallas_call(
        mlp_kernel,
        out_shape=jax.ShapeDtypeStruct((n_pad, k), jnp.float32),
        grid=(n_pad // tn,),
        in_specs=[
            pl.BlockSpec((tn, fin), lambda i: (i, 0)),
            pl.BlockSpec((fin, hid), lambda i: (0, 0)),
            pl.BlockSpec((1, hid), lambda i: (0, 0)),
            pl.BlockSpec((hid, k), lambda i: (0, 0)),
            pl.BlockSpec((1, k), lambda i: (0, 0)),
        ],
        out_specs=pl.BlockSpec((tn, k), lambda i: (i, 0)),
        compiler_params=pltpu.CompilerParams(
            dimension_semantics=("parallel",),
            vmem_limit_bytes=_vmem_limit_bytes()),
    )(xp, w1, b1.reshape(1, -1), w2, b2.reshape(1, -1))
    return out[:n]


def _affine_base_rows(h, w):
    # align_corners=False base grid; lane p = r*W + c; rows = (x_norm, y_norm)
    ys = (2.0 * jnp.arange(h, dtype=jnp.float32) + 1.0) / h - 1.0
    xs = (2.0 * jnp.arange(w, dtype=jnp.float32) + 1.0) / w - 1.0
    return jnp.stack([jnp.tile(xs, h), jnp.repeat(ys, w)], axis=0)     # (2, HW)


def stn_sample(x, theta, *, imgs_per_tile=8):
    # x: (N, 1, H, W); theta: (N, 6) -> resampled (N, 1, H*W)
    n, c, h, w = x.shape
    assert c == 1
    hw = h * w
    nb = min(n, imgs_per_tile)
    n_pad = _round_up(n, nb)
    if n_pad != n:
        x = jnp.pad(x, ((0, n_pad - n), (0, 0), (0, 0), (0, 0)))
        theta = jnp.pad(theta, ((0, n_pad - n), (0, 0)))
    base = _affine_base_rows(h, w)
    kern = functools.partial(stn_sample_kernel, h=h, w=w, nb=nb)
    out = pl.pallas_call(
        kern,
        out_shape=jax.ShapeDtypeStruct((n_pad, 1, hw), jnp.float32),
        grid=(n_pad // nb,),
        in_specs=[
            pl.BlockSpec((nb, 6), lambda i: (i, 0)),
            pl.BlockSpec((2, hw), lambda i: (0, 0)),
            pl.BlockSpec((nb, 1, h, w), lambda i: (i, 0, 0, 0)),
        ],
        out_specs=pl.BlockSpec((nb, 1, hw), lambda i: (i, 0, 0)),
        compiler_params=pltpu.CompilerParams(
            dimension_semantics=("parallel",),
            vmem_limit_bytes=_vmem_limit_bytes()),
    )(theta.astype(jnp.float32), base, x.astype(jnp.float32))
    return out[:n]


# ----------------------------- model -----------------------------

def init_params(key):
    ks = jax.random.split(key, 16)

    def conv_w(k, cout, cin):
        s = 1.0 / jnp.sqrt(cin * 9.0)
        return jax.random.uniform(k, (cout, cin, 3, 3), jnp.float32, -s, s)

    def lin_w(k, fin, fout):
        s = 1.0 / jnp.sqrt(float(fin))
        return jax.random.uniform(k, (fin, fout), jnp.float32, -s, s)

    def vec(k, nn, s=0.1):
        return jax.random.uniform(k, (nn,), jnp.float32, -s, s)

    p = {}
    # localization conv stack
    p['loc_c1_w'] = conv_w(ks[0], 10, 1);   p['loc_c1_b'] = vec(ks[1], 10)
    p['loc_c2_w'] = conv_w(ks[2], 20, 10);  p['loc_c2_b'] = vec(ks[3], 20)
    # localization_fc: last layer zero weight + identity-transform bias (as in __init__)
    p['loc_fc1_w'] = lin_w(ks[4], 980, 100); p['loc_fc1_b'] = vec(ks[5], 100)
    p['loc_fc2_w'] = jnp.zeros((100, 6), jnp.float32)
    p['loc_fc2_b'] = jnp.array([1, 0, 0, 0, 1, 0], jnp.float32)
    # features conv stack
    p['f_c1_w'] = conv_w(ks[6], 10, 1);    p['f_c1_b'] = vec(ks[7], 10)
    p['f_c2_w'] = conv_w(ks[8], 20, 10);   p['f_c2_b'] = vec(ks[9], 20)
    # classifier
    p['cls_fc1_w'] = lin_w(ks[10], 980, 100); p['cls_fc1_b'] = vec(ks[11], 100)
    p['cls_fc2_w'] = lin_w(ks[12], 100, 10);  p['cls_fc2_b'] = vec(ks[13], 10)
    return p


def net_with_stn_forward(x, p, with_stn=True):
    n, c, h, w = x.shape
    assert c == 1
    # channel-major (Cin, N, H, W) between conv layers (c == 1 -> free reshape, no transpose)
    x_cn = x.reshape(1, n, h, w)
    if with_stn:
        # STN: localization conv stack -> batched localization_fc (theta) -> fused sampler
        l = conv3x3_relu_pool(x_cn, p['loc_c1_w'], p['loc_c1_b'])        # (10, N, 14, 14)
        l = conv3x3_relu_pool(l, p['loc_c2_w'], p['loc_c2_b'])           # (20, N, 7, 7)
        # TODO(synk): this (N,980) transpose (and the classifier one below) is a small
        # XLA-side HBM round trip that is not folded into the kernels.
        feat = jnp.transpose(l, (1, 0, 2, 3)).reshape(n, 20 * 7 * 7)
        theta = mlp2(feat, p['loc_fc1_w'], p['loc_fc1_b'],
                     p['loc_fc2_w'], p['loc_fc2_b'])                     # (N, 6)
        xs = stn_sample(x, theta)                                        # (N, 1, H*W)
        x_cn = xs.reshape(1, n, h, w)
    # features
    f = conv3x3_relu_pool(x_cn, p['f_c1_w'], p['f_c1_b'])                # (10, N, 14, 14)
    f = conv3x3_relu_pool(f, p['f_c2_w'], p['f_c2_b'])                   # (20, N, 7, 7)
    f = jnp.transpose(f, (1, 0, 2, 3)).reshape(n, 20 * 7 * 7)
    # classifier (Linear -> ReLU -> [Dropout=identity in eval] -> Linear)
    return mlp2(f, p['cls_fc1_w'], p['cls_fc1_b'], p['cls_fc2_w'], p['cls_fc2_b'])


if __name__ == "__main__":
    key = jax.random.PRNGKey(0)
    pkey, xkey = jax.random.split(key)
    params = init_params(pkey)
    # MNIST-like input: 28x28 is required by the 20*7*7 Linear layers
    x = jax.random.normal(xkey, (2, 1, 28, 28), jnp.float32)

    fwd = jax.jit(net_with_stn_forward)
    logits = fwd(x, params)
    jax.block_until_ready(logits)
    assert logits.shape == (2, 10)
    print("KERNEL_OK")
</pallas_src>

<mosaic_0001>
module attributes {stable_mosaic.version = 11 : i64} {
  func.func @conv_relu_pool_kernel(%arg0: i32, %arg1: memref<2x2x1x512xf32, #tpu.memory_space<vmem>>, %arg2: memref<10x9xbf16, #tpu.memory_space<vmem>>, %arg3: memref<10x1xf32, #tpu.memory_space<vmem>>, %arg4: memref<10x512xf32, #tpu.memory_space<vmem>>) attributes {dimension_semantics = [#tpu.dimension_semantics<parallel>], iteration_bounds = array<i64: 1>, scalar_prefetch = 0 : i64, scratch_operands = 0 : i64, tpu.core_type = #tpu.core_type<tc>, window_params = [{transform_indices = @transform_0, window_bounds = array<i64: 2, 2, 1, 512>}, {pipeline_mode = #tpu.pipeline_mode<synchronous>, transform_indices = @transform_1, window_bounds = array<i64: 10, 9>}, {pipeline_mode = #tpu.pipeline_mode<synchronous>, transform_indices = @transform_2, window_bounds = array<i64: 10, 1>}, {transform_indices = @transform_3, window_bounds = array<i64: 10, 512>}]} {
    %c0 = arith.constant 0 : index
    %c0_0 = arith.constant 0 : index
    %0 = vector.load %arg2[%c0, %c0_0] : memref<10x9xbf16, #tpu.memory_space<vmem>>, vector<10x9xbf16>
    %c0_1 = arith.constant 0 : index
    %c0_2 = arith.constant 0 : index
    %c0_3 = arith.constant 0 : index
    %c0_4 = arith.constant 0 : index
    %1 = vector.load %arg1[%c0_1, %c0_2, %c0_3, %c0_4] : memref<2x2x1x512xf32, #tpu.memory_space<vmem>>, vector<1x1x1x512xf32>
    %2 = vector.shape_cast %1 : vector<1x1x1x512xf32> to vector<1x512xf32>
    %c0_5 = arith.constant 0 : index
    %c1 = arith.constant 1 : index
    %c0_6 = arith.constant 0 : index
    %c0_7 = arith.constant 0 : index
    %3 = vector.load %arg1[%c0_5, %c1, %c0_6, %c0_7] : memref<2x2x1x512xf32, #tpu.memory_space<vmem>>, vector<1x1x1x512xf32>
    %4 = vector.shape_cast %3 : vector<1x1x1x512xf32> to vector<1x512xf32>
    %c1_8 = arith.constant 1 : index
    %c0_9 = arith.constant 0 : index
    %c0_10 = arith.constant 0 : index
    %c0_11 = arith.constant 0 : index
    %5 = vector.load %arg1[%c1_8, %c0_9, %c0_10, %c0_11] : memref<2x2x1x512xf32, #tpu.memory_space<vmem>>, vector<1x1x1x512xf32>
    %6 = vector.shape_cast %5 : vector<1x1x1x512xf32> to vector<1x512xf32>
    %c1_12 = arith.constant 1 : index
    %c1_13 = arith.constant 1 : index
    %c0_14 = arith.constant 0 : index
    %c0_15 = arith.constant 0 : index
    %7 = vector.load %arg1[%c1_12, %c1_13, %c0_14, %c0_15] : memref<2x2x1x512xf32, #tpu.memory_space<vmem>>, vector<1x1x1x512xf32>
    %8 = vector.shape_cast %7 : vector<1x1x1x512xf32> to vector<1x512xf32>
    %9 = vector.extract_strided_slice %2 {offsets = [0, 1], sizes = [1, 511], strides = [1, 1]} : vector<1x512xf32> to vector<1x511xf32>
    %cst = arith.constant 0.000000e+00 : f32
    %10 = vector.broadcast %cst : f32 to vector<1x1xf32>
    %11 = tpu.concatenate %9, %10 in 1 : vector<1x511xf32>, vector<1x1xf32> -> vector<1x512xf32>
    %12 = vector.extract_strided_slice %6 {offsets = [0, 1], sizes = [1, 511], strides = [1, 1]} : vector<1x512xf32> to vector<1x511xf32>
    %cst_16 = arith.constant 0.000000e+00 : f32
    %13 = vector.broadcast %cst_16 : f32 to vector<1x1xf32>
    %14 = tpu.concatenate %12, %13 in 1 : vector<1x511xf32>, vector<1x1xf32> -> vector<1x512xf32>
    %15 = vector.extract_strided_slice %2 {offsets = [0, 15], sizes = [1, 497], strides = [1, 1]} : vector<1x512xf32> to vector<1x497xf32>
    %cst_17 = arith.constant 0.000000e+00 : f32
    %16 = vector.broadcast %cst_17 : f32 to vector<1x15xf32>
    %17 = tpu.concatenate %15, %16 in 1 : vector<1x497xf32>, vector<1x15xf32> -> vector<1x512xf32>
    %18 = vector.extract_strided_slice %4 {offsets = [0, 15], sizes = [1, 497], strides = [1, 1]} : vector<1x512xf32> to vector<1x497xf32>
    %cst_18 = arith.constant 0.000000e+00 : f32
    %19 = vector.broadcast %cst_18 : f32 to vector<1x15xf32>
    %20 = tpu.concatenate %18, %19 in 1 : vector<1x497xf32>, vector<1x15xf32> -> vector<1x512xf32>
    %21 = vector.extract_strided_slice %2 {offsets = [0, 16], sizes = [1, 496], strides = [1, 1]} : vector<1x512xf32> to vector<1x496xf32>
    %cst_19 = arith.constant 0.000000e+00 : f32
    %22 = vector.broadcast %cst_19 : f32 to vector<1x16xf32>
    %23 = tpu.concatenate %21, %22 in 1 : vector<1x496xf32>, vector<1x16xf32> -> vector<1x512xf32>
    %24 = tpu.concatenate %2, %4, %11, %6, %8, %14, %17, %20, %23 in 0 : vector<1x512xf32>, vector<1x512xf32>, vector<1x512xf32>, vector<1x512xf32>, vector<1x512xf32>, vector<1x512xf32>, vector<1x512xf32>, vector<1x512xf32>, vector<1x512xf32> -> vector<9x512xf32>
    %25 = arith.truncf %24 : vector<9x512xf32> to vector<9x512xbf16>
    %cst_20 = arith.constant dense<0.000000e+00> : vector<10x512xf32>
    %26 = tpu.matmul %0, %25, %cst_20 {dimension_numbers = #tpu.dot_dimension_numbers<[1], [0], [0], [1], [0, 0, 1, 1], [], []>} : vector<10x9xbf16>, vector<9x512xbf16>, vector<10x512xf32> -> vector<10x512xf32>
    %27 = vector.extract_strided_slice %4 {offsets = [0, 1], sizes = [1, 511], strides = [1, 1]} : vector<1x512xf32> to vector<1x511xf32>
    %cst_21 = arith.constant 0.000000e+00 : f32
    %28 = vector.broadcast %cst_21 : f32 to vector<1x1xf32>
    %29 = tpu.concatenate %27, %28 in 1 : vector<1x511xf32>, vector<1x1xf32> -> vector<1x512xf32>
    %30 = vector.extract_strided_slice %8 {offsets = [0, 1], sizes = [1, 511], strides = [1, 1]} : vector<1x512xf32> to vector<1x511xf32>
    %cst_22 = arith.constant 0.000000e+00 : f32
    %31 = vector.broadcast %cst_22 : f32 to vector<1x1xf32>
    %32 = tpu.concatenate %30, %31 in 1 : vector<1x511xf32>, vector<1x1xf32> -> vector<1x512xf32>
    %33 = vector.extract_strided_slice %4 {offsets = [0, 16], sizes = [1, 496], strides = [1, 1]} : vector<1x512xf32> to vector<1x496xf32>
    %cst_23 = arith.constant 0.000000e+00 : f32
    %34 = vector.broadcast %cst_23 : f32 to vector<1x16xf32>
    %35 = tpu.concatenate %33, %34 in 1 : vector<1x496xf32>, vector<1x16xf32> -> vector<1x512xf32>
    %36 = tpu.concatenate %4, %11, %29, %8, %14, %32, %20, %23, %35 in 0 : vector<1x512xf32>, vector<1x512xf32>, vector<1x512xf32>, vector<1x512xf32>, vector<1x512xf32>, vector<1x512xf32>, vector<1x512xf32>, vector<1x512xf32>, vector<1x512xf32> -> vector<9x512xf32>
    %37 = arith.truncf %36 : vector<9x512xf32> to vector<9x512xbf16>
    %cst_24 = arith.constant dense<0.000000e+00> : vector<10x512xf32>
    %38 = tpu.matmul %0, %37, %cst_24 {dimension_numbers = #tpu.dot_dimension_numbers<[1], [0], [0], [1], [0, 0, 1, 1], [], []>} : vector<10x9xbf16>, vector<9x512xbf16>, vector<10x512xf32> -> vector<10x512xf32>
    %39 = arith.maximumf %26, %38 : vector<10x512xf32>
    %40 = vector.extract_strided_slice %6 {offsets = [0, 15], sizes = [1, 497], strides = [1, 1]} : vector<1x512xf32> to vector<1x497xf32>
    %cst_25 = arith.constant 0.000000e+00 : f32
    %41 = vector.broadcast %cst_25 : f32 to vector<1x15xf32>
    %42 = tpu.concatenate %40, %41 in 1 : vector<1x497xf32>, vector<1x15xf32> -> vector<1x512xf32>
    %43 = vector.extract_strided_slice %8 {offsets = [0, 15], sizes = [1, 497], strides = [1, 1]} : vector<1x512xf32> to vector<1x497xf32>
    %cst_26 = arith.constant 0.000000e+00 : f32
    %44 = vector.broadcast %cst_26 : f32 to vector<1x15xf32>
    %45 = tpu.concatenate %43, %44 in 1 : vector<1x497xf32>, vector<1x15xf32> -> vector<1x512xf32>
    %46 = vector.extract_strided_slice %6 {offsets = [0, 16], sizes = [1, 496], strides = [1, 1]} : vector<1x512xf32> to vector<1x496xf32>
    %cst_27 = arith.constant 0.000000e+00 : f32
    %47 = vector.broadcast %cst_27 : f32 to vector<1x16xf32>
    %48 = tpu.concatenate %46, %47 in 1 : vector<1x496xf32>, vector<1x16xf32> -> vector<1x512xf32>
    %49 = tpu.concatenate %6, %8, %14, %17, %20, %23, %42, %45, %48 in 0 : vector<1x512xf32>, vector<1x512xf32>, vector<1x512xf32>, vector<1x512xf32>, vector<1x512xf32>, vector<1x512xf32>, vector<1x512xf32>, vector<1x512xf32>, vector<1x512xf32> -> vector<9x512xf32>
    %50 = arith.truncf %49 : vector<9x512xf32> to vector<9x512xbf16>
    %cst_28 = arith.constant dense<0.000000e+00> : vector<10x512xf32>
    %51 = tpu.matmul %0, %50, %cst_28 {dimension_numbers = #tpu.dot_dimension_numbers<[1], [0], [0], [1], [0, 0, 1, 1], [], []>} : vector<10x9xbf16>, vector<9x512xbf16>, vector<10x512xf32> -> vector<10x512xf32>
    %52 = vector.extract_strided_slice %8 {offsets = [0, 16], sizes = [1, 496], strides = [1, 1]} : vector<1x512xf32> to vector<1x496xf32>
    %cst_29 = arith.constant 0.000000e+00 : f32
    %53 = vector.broadcast %cst_29 : f32 to vector<1x16xf32>
    %54 = tpu.concatenate %52, %53 in 1 : vector<1x496xf32>, vector<1x16xf32> -> vector<1x512xf32>
    %55 = tpu.concatenate %8, %14, %32, %20, %23, %35, %45, %48, %54 in 0 : vector<1x512xf32>, vector<1x512xf32>, vector<1x512xf32>, vector<1x512xf32>, vector<1x512xf32>, vector<1x512xf32>, vector<1x512xf32>, vector<1x512xf32>, vector<1x512xf32> -> vector<9x512xf32>
    %56 = arith.truncf %55 : vector<9x512xf32> to vector<9x512xbf16>
    %cst_30 = arith.constant dense<0.000000e+00> : vector<10x512xf32>
    %57 = tpu.matmul %0, %56, %cst_30 {dimension_numbers = #tpu.dot_dimension_numbers<[1], [0], [0], [1], [0, 0, 1, 1], [], []>} : vector<10x9xbf16>, vector<9x512xbf16>, vector<10x512xf32> -> vector<10x512xf32>
    %58 = arith.maximumf %51, %57 : vector<10x512xf32>
    %59 = arith.maximumf %39, %58 : vector<10x512xf32>
    %c0_31 = arith.constant 0 : index
    %c0_32 = arith.constant 0 : index
    %60 = vector.load %arg3[%c0_31, %c0_32] : memref<10x1xf32, #tpu.memory_space<vmem>>, vector<10x1xf32>
    %61 = vector.broadcast %60 : vector<10x1xf32> to vector<10x512xf32>
    %62 = arith.addf %59, %61 : vector<10x512xf32>
    %cst_33 = arith.constant 0.000000e+00 : f32
    %63 = vector.broadcast %cst_33 : f32 to vector<10x512xf32>
    %64 = arith.maximumf %62, %63 : vector<10x512xf32>
    %c0_34 = arith.constant 0 : index
    %c0_35 = arith.constant 0 : index
    %65 = vector.load %arg4[%c0_34, %c0_35] : memref<10x512xf32, #tpu.memory_space<vmem>>, vector<10x512xf32>
    tpu.vector_store %arg4[%c0_34, %c0_35], %64 {strides = array<i32>} : memref<10x512xf32, #tpu.memory_space<vmem>>, vector<10x512xf32>,
    return
  }
  func.func @transform_0(%arg0: i32) -> (i32, i32, i32, i32) {
    %c0_i32 = arith.constant 0 : i32
    %c0_i32_0 = arith.constant 0 : i32
    %c0_i32_1 = arith.constant 0 : i32
    %c0_i32_2 = arith.constant 0 : i32
    return %c0_i32, %c0_i32_0, %c0_i32_1, %arg0 : i32, i32, i32, i32
  }
  func.func @transform_1(%arg0: i32) -> (i32, i32) {
    %c0_i32 = arith.constant 0 : i32
    %c0_i32_0 = arith.constant 0 : i32
    %c0_i32_1 = arith.constant 0 : i32
    return %c0_i32, %c0_i32_0 : i32, i32
  }
  func.func @transform_2(%arg0: i32) -> (i32, i32) {
    %c0_i32 = arith.constant 0 : i32
    %c0_i32_0 = arith.constant 0 : i32
    %c0_i32_1 = arith.constant 0 : i32
    return %c0_i32, %c0_i32_0 : i32, i32
  }
  func.func @transform_3(%arg0: i32) -> (i32, i32) {
    %c0_i32 = arith.constant 0 : i32
    %c0_i32_0 = arith.constant 0 : i32
    return %c0_i32, %arg0 : i32, i32
  }
}

module attributes {stable_mosaic.version = 11 : i64} {
  func.func @conv_relu_pool_kernel(%arg0: i32, %arg1: memref<2x2x10x256xf32, #tpu.memory_space<vmem>>, %arg2: memref<20x90xbf16, #tpu.memory_space<vmem>>, %arg3: memref<20x1xf32, #tpu.memory_space<vmem>>, %arg4: memref<20x256xf32, #tpu.memory_space<vmem>>) attributes {dimension_semantics = [#tpu.dimension_semantics<parallel>], iteration_bounds = array<i64: 1>, scalar_prefetch = 0 : i64, scratch_operands = 0 : i64, tpu.core_type = #tpu.core_type<tc>, window_params = [{transform_indices = @transform_0, window_bounds = array<i64: 2, 2, 10, 256>}, {pipeline_mode = #tpu.pipeline_mode<synchronous>, transform_indices = @transform_1, window_bounds = array<i64: 20, 90>}, {pipeline_mode = #tpu.pipeline_mode<synchronous>, transform_indices = @transform_2, window_bounds = array<i64: 20, 1>}, {transform_indices = @transform_3, window_bounds = array<i64: 20, 256>}]} {
    %c0 = arith.constant 0 : index
    %c0_0 = arith.constant 0 : index
    %0 = vector.load %arg2[%c0, %c0_0] : memref<20x90xbf16, #tpu.memory_space<vmem>>, vector<20x90xbf16>
    %c0_1 = arith.constant 0 : index
    %c0_2 = arith.constant 0 : index
    %c0_3 = arith.constant 0 : index
    %c0_4 = arith.constant 0 : index
    %1 = vector.load %arg1[%c0_1, %c0_2, %c0_3, %c0_4] : memref<2x2x10x256xf32, #tpu.memory_space<vmem>>, vector<1x1x10x256xf32>
    %2 = vector.shape_cast %1 : vector<1x1x10x256xf32> to vector<10x256xf32>
    %c0_5 = arith.constant 0 : index
    %c1 = arith.constant 1 : index
    %c0_6 = arith.constant 0 : index
    %c0_7 = arith.constant 0 : index
    %3 = vector.load %arg1[%c0_5, %c1, %c0_6, %c0_7] : memref<2x2x10x256xf32, #tpu.memory_space<vmem>>, vector<1x1x10x256xf32>
    %4 = vector.shape_cast %3 : vector<1x1x10x256xf32> to vector<10x256xf32>
    %c1_8 = arith.constant 1 : index
    %c0_9 = arith.constant 0 : index
    %c0_10 = arith.constant 0 : index
    %c0_11 = arith.constant 0 : index
    %5 = vector.load %arg1[%c1_8, %c0_9, %c0_10, %c0_11] : memref<2x2x10x256xf32, #tpu.memory_space<vmem>>, vector<1x1x10x256xf32>
    %6 = vector.shape_cast %5 : vector<1x1x10x256xf32> to vector<10x256xf32>
    %c1_12 = arith.constant 1 : index
    %c1_13 = arith.constant 1 : index
    %c0_14 = arith.constant 0 : index
    %c0_15 = arith.constant 0 : index
    %7 = vector.load %arg1[%c1_12, %c1_13, %c0_14, %c0_15] : memref<2x2x10x256xf32, #tpu.memory_space<vmem>>, vector<1x1x10x256xf32>
    %8 = vector.shape_cast %7 : vector<1x1x10x256xf32> to vector<10x256xf32>
    %9 = vector.extract_strided_slice %2 {offsets = [0, 1], sizes = [10, 255], strides = [1, 1]} : vector<10x256xf32> to vector<10x255xf32>
    %cst = arith.constant 0.000000e+00 : f32
    %10 = vector.broadcast %cst : f32 to vector<10x1xf32>
    %11 = tpu.concatenate %9, %10 in 1 : vector<10x255xf32>, vector<10x1xf32> -> vector<10x256xf32>
    %12 = vector.extract_strided_slice %6 {offsets = [0, 1], sizes = [10, 255], strides = [1, 1]} : vector<10x256xf32> to vector<10x255xf32>
    %cst_16 = arith.constant 0.000000e+00 : f32
    %13 = vector.broadcast %cst_16 : f32 to vector<10x1xf32>
    %14 = tpu.concatenate %12, %13 in 1 : vector<10x255xf32>, vector<10x1xf32> -> vector<10x256xf32>
    %15 = vector.extract_strided_slice %2 {offsets = [0, 8], sizes = [10, 248], strides = [1, 1]} : vector<10x256xf32> to vector<10x248xf32>
    %cst_17 = arith.constant 0.000000e+00 : f32
    %16 = vector.broadcast %cst_17 : f32 to vector<10x8xf32>
    %17 = tpu.concatenate %15, %16 in 1 : vector<10x248xf32>, vector<10x8xf32> -> vector<10x256xf32>
    %18 = vector.extract_strided_slice %4 {offsets = [0, 8], sizes = [10, 248], strides = [1, 1]} : vector<10x256xf32> to vector<10x248xf32>
    %cst_18 = arith.constant 0.000000e+00 : f32
    %19 = vector.broadcast %cst_18 : f32 to vector<10x8xf32>
    %20 = tpu.concatenate %18, %19 in 1 : vector<10x248xf32>, vector<10x8xf32> -> vector<10x256xf32>
    %21 = vector.extract_strided_slice %2 {offsets = [0, 9], sizes = [10, 247], strides = [1, 1]} : vector<10x256xf32> to vector<10x247xf32>
    %cst_19 = arith.constant 0.000000e+00 : f32
    %22 = vector.broadcast %cst_19 : f32 to vector<10x9xf32>
    %23 = tpu.concatenate %21, %22 in 1 : vector<10x247xf32>, vector<10x9xf32> -> vector<10x256xf32>
    %24 = tpu.concatenate %2, %4, %11, %6, %8, %14, %17, %20, %23 in 0 : vector<10x256xf32>, vector<10x256xf32>, vector<10x256xf32>, vector<10x256xf32>, vector<10x256xf32>, vector<10x256xf32>, vector<10x256xf32>, vector<10x256xf32>, vector<10x256xf32> -> vector<90x256xf32>
    %25 = arith.truncf %24 : vector<90x256xf32> to vector<90x256xbf16>
    %cst_20 = arith.constant dense<0.000000e+00> : vector<20x256xf32>
    %26 = tpu.matmul %0, %25, %cst_20 {dimension_numbers = #tpu.dot_dimension_numbers<[1], [0], [0], [1], [0, 0, 1, 1], [], []>} : vector<20x90xbf16>, vector<90x256xbf16>, vector<20x256xf32> -> vector<20x256xf32>
    %27 = vector.extract_strided_slice %4 {offsets = [0, 1], sizes = [10, 255], strides = [1, 1]} : vector<10x256xf32> to vector<10x255xf32>
    %cst_21 = arith.constant 0.000000e+00 : f32
    %28 = vector.broadcast %cst_21 : f32 to vector<10x1xf32>
    %29 = tpu.concatenate %27, %28 in 1 : vector<10x255xf32>, vector<10x1xf32> -> vector<10x256xf32>
    %30 = vector.extract_strided_slice %8 {offsets = [0, 1], sizes = [10, 255], strides = [1, 1]} : vector<10x256xf32> to vector<10x255xf32>
    %cst_22 = arith.constant 0.000000e+00 : f32
    %31 = vector.broadcast %cst_22 : f32 to vector<10x1xf32>
    %32 = tpu.concatenate %30, %31 in 1 : vector<10x255xf32>, vector<10x1xf32> -> vector<10x256xf32>
    %33 = vector.extract_strided_slice %4 {offsets = [0, 9], sizes = [10, 247], strides = [1, 1]} : vector<10x256xf32> to vector<10x247xf32>
    %cst_23 = arith.constant 0.000000e+00 : f32
    %34 = vector.broadcast %cst_23 : f32 to vector<10x9xf32>
    %35 = tpu.concatenate %33, %34 in 1 : vector<10x247xf32>, vector<10x9xf32> -> vector<10x256xf32>
    %36 = tpu.concatenate %4, %11, %29, %8, %14, %32, %20, %23, %35 in 0 : vector<10x256xf32>, vector<10x256xf32>, vector<10x256xf32>, vector<10x256xf32>, vector<10x256xf32>, vector<10x256xf32>, vector<10x256xf32>, vector<10x256xf32>, vector<10x256xf32> -> vector<90x256xf32>
    %37 = arith.truncf %36 : vector<90x256xf32> to vector<90x256xbf16>
    %cst_24 = arith.constant dense<0.000000e+00> : vector<20x256xf32>
    %38 = tpu.matmul %0, %37, %cst_24 {dimension_numbers = #tpu.dot_dimension_numbers<[1], [0], [0], [1], [0, 0, 1, 1], [], []>} : vector<20x90xbf16>, vector<90x256xbf16>, vector<20x256xf32> -> vector<20x256xf32>
    %39 = arith.maximumf %26, %38 : vector<20x256xf32>
    %40 = vector.extract_strided_slice %6 {offsets = [0, 8], sizes = [10, 248], strides = [1, 1]} : vector<10x256xf32> to vector<10x248xf32>
    %cst_25 = arith.constant 0.000000e+00 : f32
    %41 = vector.broadcast %cst_25 : f32 to vector<10x8xf32>
    %42 = tpu.concatenate %40, %41 in 1 : vector<10x248xf32>, vector<10x8xf32> -> vector<10x256xf32>
    %43 = vector.extract_strided_slice %8 {offsets = [0, 8], sizes = [10, 248], strides = [1, 1]} : vector<10x256xf32> to vector<10x248xf32>
    %cst_26 = arith.constant 0.000000e+00 : f32
    %44 = vector.broadcast %cst_26 : f32 to vector<10x8xf32>
    %45 = tpu.concatenate %43, %44 in 1 : vector<10x248xf32>, vector<10x8xf32> -> vector<10x256xf32>
    %46 = vector.extract_strided_slice %6 {offsets = [0, 9], sizes = [10, 247], strides = [1, 1]} : vector<10x256xf32> to vector<10x247xf32>
    %cst_27 = arith.constant 0.000000e+00 : f32
    %47 = vector.broadcast %cst_27 : f32 to vector<10x9xf32>
    %48 = tpu.concatenate %46, %47 in 1 : vector<10x247xf32>, vector<10x9xf32> -> vector<10x256xf32>
    %49 = tpu.concatenate %6, %8, %14, %17, %20, %23, %42, %45, %48 in 0 : vector<10x256xf32>, vector<10x256xf32>, vector<10x256xf32>, vector<10x256xf32>, vector<10x256xf32>, vector<10x256xf32>, vector<10x256xf32>, vector<10x256xf32>, vector<10x256xf32> -> vector<90x256xf32>
    %50 = arith.truncf %49 : vector<90x256xf32> to vector<90x256xbf16>
    %cst_28 = arith.constant dense<0.000000e+00> : vector<20x256xf32>
    %51 = tpu.matmul %0, %50, %cst_28 {dimension_numbers = #tpu.dot_dimension_numbers<[1], [0], [0], [1], [0, 0, 1, 1], [], []>} : vector<20x90xbf16>, vector<90x256xbf16>, vector<20x256xf32> -> vector<20x256xf32>
    %52 = vector.extract_strided_slice %8 {offsets = [0, 9], sizes = [10, 247], strides = [1, 1]} : vector<10x256xf32> to vector<10x247xf32>
    %cst_29 = arith.constant 0.000000e+00 : f32
    %53 = vector.broadcast %cst_29 : f32 to vector<10x9xf32>
    %54 = tpu.concatenate %52, %53 in 1 : vector<10x247xf32>, vector<10x9xf32> -> vector<10x256xf32>
    %55 = tpu.concatenate %8, %14, %32, %20, %23, %35, %45, %48, %54 in 0 : vector<10x256xf32>, vector<10x256xf32>, vector<10x256xf32>, vector<10x256xf32>, vector<10x256xf32>, vector<10x256xf32>, vector<10x256xf32>, vector<10x256xf32>, vector<10x256xf32> -> vector<90x256xf32>
    %56 = arith.truncf %55 : vector<90x256xf32> to vector<90x256xbf16>
    %cst_30 = arith.constant dense<0.000000e+00> : vector<20x256xf32>
    %57 = tpu.matmul %0, %56, %cst_30 {dimension_numbers = #tpu.dot_dimension_numbers<[1], [0], [0], [1], [0, 0, 1, 1], [], []>} : vector<20x90xbf16>, vector<90x256xbf16>, vector<20x256xf32> -> vector<20x256xf32>
    %58 = arith.maximumf %51, %57 : vector<20x256xf32>
    %59 = arith.maximumf %39, %58 : vector<20x256xf32>
    %c0_31 = arith.constant 0 : index
    %c0_32 = arith.constant 0 : index
    %60 = vector.load %arg3[%c0_31, %c0_32] : memref<20x1xf32, #tpu.memory_space<vmem>>, vector<20x1xf32>
    %61 = vector.broadcast %60 : vector<20x1xf32> to vector<20x256xf32>
    %62 = arith.addf %59, %61 : vector<20x256xf32>
    %cst_33 = arith.constant 0.000000e+00 : f32
    %63 = vector.broadcast %cst_33 : f32 to vector<20x256xf32>
    %64 = arith.maximumf %62, %63 : vector<20x256xf32>
    %c0_34 = arith.constant 0 : index
    %c0_35 = arith.constant 0 : index
    %65 = vector.load %arg4[%c0_34, %c0_35] : memref<20x256xf32, #tpu.memory_space<vmem>>, vector<20x256xf32>
    tpu.vector_store %arg4[%c0_34, %c0_35], %64 {strides = array<i32>} : memref<20x256xf32, #tpu.memory_space<vmem>>, vector<20x256xf32>,
    return
  }
  func.func @transform_0(%arg0: i32) -> (i32, i32, i32, i32) {
    %c0_i32 = arith.constant 0 : i32
    %c0_i32_0 = arith.constant 0 : i32
    %c0_i32_1 = arith.constant 0 : i32
    %c0_i32_2 = arith.constant 0 : i32
    return %c0_i32, %c0_i32_0, %c0_i32_1, %arg0 : i32, i32, i32, i32
  }
  func.func @transform_1(%arg0: i32) -> (i32, i32) {
    %c0_i32 = arith.constant 0 : i32
    %c0_i32_0 = arith.constant 0 : i32
    %c0_i32_1 = arith.constant 0 : i32
    return %c0_i32, %c0_i32_0 : i32, i32
  }
  func.func @transform_2(%arg0: i32) -> (i32, i32) {
    %c0_i32 = arith.constant 0 : i32
    %c0_i32_0 = arith.constant 0 : i32
    %c0_i32_1 = arith.constant 0 : i32
    return %c0_i32, %c0_i32_0 : i32, i32
  }
  func.func @transform_3(%arg0: i32) -> (i32, i32) {
    %c0_i32 = arith.constant 0 : i32
    %c0_i32_0 = arith.constant 0 : i32
    return %c0_i32, %arg0 : i32, i32
  }
}

module attributes {stable_mosaic.version = 11 : i64} {
  func.func @mlp_kernel(%arg0: i32, %arg1: memref<2x980xf32, #tpu.memory_space<vmem>>, %arg2: memref<980x100xf32, #tpu.memory_space<vmem>>, %arg3: memref<1x100xf32, #tpu.memory_space<vmem>>, %arg4: memref<100x6xf32, #tpu.memory_space<vmem>>, %arg5: memref<1x6xf32, #tpu.memory_space<vmem>>, %arg6: memref<2x6xf32, #tpu.memory_space<vmem>>) attributes {dimension_semantics = [#tpu.dimension_semantics<parallel>], iteration_bounds = array<i64: 1>, scalar_prefetch = 0 : i64, scratch_operands = 0 : i64, tpu.core_type = #tpu.core_type<tc>, window_params = [{transform_indices = @transform_0, window_bounds = array<i64: 2, 980>}, {pipeline_mode = #tpu.pipeline_mode<synchronous>, transform_indices = @transform_1, window_bounds = array<i64: 980, 100>}, {pipeline_mode = #tpu.pipeline_mode<synchronous>, transform_indices = @transform_2, window_bounds = array<i64: 1, 100>}, {pipeline_mode = #tpu.pipeline_mode<synchronous>, transform_indices = @transform_3, window_bounds = array<i64: 100, 6>}, {pipeline_mode = #tpu.pipeline_mode<synchronous>, transform_indices = @transform_4, window_bounds = array<i64: 1, 6>}, {transform_indices = @transform_5, window_bounds = array<i64: 2, 6>}]} {
    %c0 = arith.constant 0 : index
    %c0_0 = arith.constant 0 : index
    %0 = vector.load %arg1[%c0, %c0_0] : memref<2x980xf32, #tpu.memory_space<vmem>>, vector<2x980xf32>
    %c0_1 = arith.constant 0 : index
    %c0_2 = arith.constant 0 : index
    %1 = vector.load %arg2[%c0_1, %c0_2] : memref<980x100xf32, #tpu.memory_space<vmem>>, vector<980x100xf32>
    %cst = arith.constant dense<0.000000e+00> : vector<2x100xf32>
    %2 = tpu.matmul %0, %1, %cst {dimension_numbers = #tpu.dot_dimension_numbers<[1], [0], [0], [1], [0, 0, 1, 1], [], []>} : vector<2x980xf32>, vector<980x100xf32>, vector<2x100xf32> -> vector<2x100xf32>
    %c0_3 = arith.constant 0 : index
    %c0_4 = arith.constant 0 : index
    %3 = vector.load %arg3[%c0_3, %c0_4] : memref<1x100xf32, #tpu.memory_space<vmem>>, vector<1x100xf32>
    %4 = vector.broadcast %3 : vector<1x100xf32> to vector<2x100xf32>
    %5 = arith.addf %2, %4 : vector<2x100xf32>
    %cst_5 = arith.constant 0.000000e+00 : f32
    %6 = vector.broadcast %cst_5 : f32 to vector<2x100xf32>
    %7 = arith.maximumf %5, %6 : vector<2x100xf32>
    %c0_6 = arith.constant 0 : index
    %c0_7 = arith.constant 0 : index
    %8 = vector.load %arg4[%c0_6, %c0_7] : memref<100x6xf32, #tpu.memory_space<vmem>>, vector<100x6xf32>
    %cst_8 = arith.constant dense<0.000000e+00> : vector<2x6xf32>
    %9 = tpu.matmul %7, %8, %cst_8 {dimension_numbers = #tpu.dot_dimension_numbers<[1], [0], [0], [1], [0, 0, 1, 1], [], []>} : vector<2x100xf32>, vector<100x6xf32>, vector<2x6xf32> -> vector<2x6xf32>
    %c0_9 = arith.constant 0 : index
    %c0_10 = arith.constant 0 : index
    %10 = vector.load %arg5[%c0_9, %c0_10] : memref<1x6xf32, #tpu.memory_space<vmem>>, vector<1x6xf32>
    %11 = vector.broadcast %10 : vector<1x6xf32> to vector<2x6xf32>
    %12 = arith.addf %9, %11 : vector<2x6xf32>
    %c0_11 = arith.constant 0 : index
    %c0_12 = arith.constant 0 : index
    %13 = vector.load %arg6[%c0_11, %c0_12] : memref<2x6xf32, #tpu.memory_space<vmem>>, vector<2x6xf32>
    tpu.vector_store %arg6[%c0_11, %c0_12], %12 {strides = array<i32>} : memref<2x6xf32, #tpu.memory_space<vmem>>, vector<2x6xf32>,
    return
  }
  func.func @transform_0(%arg0: i32) -> (i32, i32) {
    %c0_i32 = arith.constant 0 : i32
    %c0_i32_0 = arith.constant 0 : i32
    return %arg0, %c0_i32 : i32, i32
  }
  func.func @transform_1(%arg0: i32) -> (i32, i32) {
    %c0_i32 = arith.constant 0 : i32
    %c0_i32_0 = arith.constant 0 : i32
    %c0_i32_1 = arith.constant 0 : i32
    return %c0_i32, %c0_i32_0 : i32, i32
  }
  func.func @transform_2(%arg0: i32) -> (i32, i32) {
    %c0_i32 = arith.constant 0 : i32
    %c0_i32_0 = arith.constant 0 : i32
    %c0_i32_1 = arith.constant 0 : i32
    return %c0_i32, %c0_i32_0 : i32, i32
  }
  func.func @transform_3(%arg0: i32) -> (i32, i32) {
    %c0_i32 = arith.constant 0 : i32
    %c0_i32_0 = arith.constant 0 : i32
    %c0_i32_1 = arith.constant 0 : i32
    return %c0_i32, %c0_i32_0 : i32, i32
  }
  func.func @transform_4(%arg0: i32) -> (i32, i32) {
    %c0_i32 = arith.constant 0 : i32
    %c0_i32_0 = arith.constant 0 : i32
    %c0_i32_1 = arith.constant 0 : i32
    return %c0_i32, %c0_i32_0 : i32, i32
  }
  func.func @transform_5(%arg0: i32) -> (i32, i32) {
    %c0_i32 = arith.constant 0 : i32
    %c0_i32_0 = arith.constant 0 : i32
    return %arg0, %c0_i32 : i32, i32
  }
}

module attributes {stable_mosaic.version = 11 : i64} {
  func.func @stn_sample_kernel(%arg0: i32, %arg1: memref<2x6xf32, #tpu.memory_space<vmem>>, %arg2: memref<2x784xf32, #tpu.memory_space<vmem>>, %arg3: memref<2x1x28x28xf32, #tpu.memory_space<vmem>>, %arg4: memref<2x1x784xf32, #tpu.memory_space<vmem>>) attributes {dimension_semantics = [#tpu.dimension_semantics<parallel>], iteration_bounds = array<i64: 1>, scalar_prefetch = 0 : i64, scratch_operands = 0 : i64, tpu.core_type = #tpu.core_type<tc>, window_params = [{transform_indices = @transform_0, window_bounds = array<i64: 2, 6>}, {pipeline_mode = #tpu.pipeline_mode<synchronous>, transform_indices = @transform_1, window_bounds = array<i64: 2, 784>}, {transform_indices = @transform_2, window_bounds = array<i64: 2, 1, 28, 28>}, {transform_indices = @transform_3, window_bounds = array<i64: 2, 1, 784>}]} {
    %c0 = arith.constant 0 : index
    %c0_0 = arith.constant 0 : index
    %0 = vector.load %arg2[%c0, %c0_0] : memref<2x784xf32, #tpu.memory_space<vmem>>, vector<1x784xf32>
    %c1 = arith.constant 1 : index
    %c0_1 = arith.constant 0 : index
    %1 = vector.load %arg2[%c1, %c0_1] : memref<2x784xf32, #tpu.memory_space<vmem>>, vector<1x784xf32>
    %2 = tpu.iota {dimensions = array<i32: 0>} : vector<28x784xi32>
    %3 = tpu.iota {dimensions = array<i32: 0>} : vector<28x784xi32>
    %c0_2 = arith.constant 0 : index
    %c0_3 = arith.constant 0 : index
    %4 = vector.load %arg1[%c0_2, %c0_3] : memref<2x6xf32, #tpu.memory_space<vmem>>, vector<2x6xf32>
    %5 = vector.extract_strided_slice %4 {offsets = [0, 0], sizes = [1, 6], strides = [1, 1]} : vector<2x6xf32> to vector<1x6xf32>
    %6 = vector.extract_strided_slice %5 {offsets = [0, 0], sizes = [1, 1], strides = [1, 1]} : vector<1x6xf32> to vector<1x1xf32>
    %7 = vector.broadcast %6 : vector<1x1xf32> to vector<1x784xf32>
    %8 = arith.mulf %7, %0 : vector<1x784xf32>
    %9 = vector.extract_strided_slice %5 {offsets = [0, 1], sizes = [1, 1], strides = [1, 1]} : vector<1x6xf32> to vector<1x1xf32>
    %10 = vector.broadcast %9 : vector<1x1xf32> to vector<1x784xf32>
    %11 = arith.mulf %10, %1 : vector<1x784xf32>
    %12 = arith.addf %8, %11 : vector<1x784xf32>
    %13 = vector.extract_strided_slice %5 {offsets = [0, 2], sizes = [1, 1], strides = [1, 1]} : vector<1x6xf32> to vector<1x1xf32>
    %14 = vector.broadcast %13 : vector<1x1xf32> to vector<1x784xf32>
    %15 = arith.addf %12, %14 : vector<1x784xf32>
    %16 = vector.extract_strided_slice %5 {offsets = [0, 3], sizes = [1, 1], strides = [1, 1]} : vector<1x6xf32> to vector<1x1xf32>
    %17 = vector.broadcast %16 : vector<1x1xf32> to vector<1x784xf32>
    %18 = arith.mulf %17, %0 : vector<1x784xf32>
    %19 = vector.extract_strided_slice %5 {offsets = [0, 4], sizes = [1, 1], strides = [1, 1]} : vector<1x6xf32> to vector<1x1xf32>
    %20 = vector.broadcast %19 : vector<1x1xf32> to vector<1x784xf32>
    %21 = arith.mulf %20, %1 : vector<1x784xf32>
    %22 = arith.addf %18, %21 : vector<1x784xf32>
    %23 = vector.extract_strided_slice %5 {offsets = [0, 5], sizes = [1, 1], strides = [1, 1]} : vector<1x6xf32> to vector<1x1xf32>
    %24 = vector.broadcast %23 : vector<1x1xf32> to vector<1x784xf32>
    %25 = arith.addf %22, %24 : vector<1x784xf32>
    %cst = arith.constant 1.000000e+00 : f32
    %26 = vector.broadcast %cst : f32 to vector<1x784xf32>
    %27 = arith.addf %15, %26 : vector<1x784xf32>
    %cst_4 = arith.constant 2.800000e+01 : f32
    %28 = vector.broadcast %cst_4 : f32 to vector<1x784xf32>
    %29 = arith.mulf %27, %28 : vector<1x784xf32>
    %cst_5 = arith.constant 1.000000e+00 : f32
    %30 = vector.broadcast %cst_5 : f32 to vector<1x784xf32>
    %31 = arith.subf %29, %30 : vector<1x784xf32>
    %cst_6 = arith.constant 5.000000e-01 : f32
    %32 = vector.broadcast %cst_6 : f32 to vector<1x784xf32>
    %33 = arith.mulf %31, %32 : vector<1x784xf32>
    %cst_7 = arith.constant 1.000000e+00 : f32
    %34 = vector.broadcast %cst_7 : f32 to vector<1x784xf32>
    %35 = arith.addf %25, %34 : vector<1x784xf32>
    %cst_8 = arith.constant 2.800000e+01 : f32
    %36 = vector.broadcast %cst_8 : f32 to vector<1x784xf32>
    %37 = arith.mulf %35, %36 : vector<1x784xf32>
    %cst_9 = arith.constant 1.000000e+00 : f32
    %38 = vector.broadcast %cst_9 : f32 to vector<1x784xf32>
    %39 = arith.subf %37, %38 : vector<1x784xf32>
    %cst_10 = arith.constant 5.000000e-01 : f32
    %40 = vector.broadcast %cst_10 : f32 to vector<1x784xf32>
    %41 = arith.mulf %39, %40 : vector<1x784xf32>
    %42 = math.floor %33 : vector<1x784xf32>
    %43 = math.floor %41 : vector<1x784xf32>
    %44 = arith.subf %33, %42 : vector<1x784xf32>
    %45 = arith.subf %41, %43 : vector<1x784xf32>
    %46 = arith.fptosi %42 : vector<1x784xf32> to vector<1x784xi32>
    %47 = arith.fptosi %43 : vector<1x784xf32> to vector<1x784xi32>
    %c1_i32 = arith.constant 1 : i32
    %48 = vector.broadcast %c1_i32 : i32 to vector<1x784xi32>
    %49 = arith.addi %46, %48 : vector<1x784xi32>
    %c1_i32_11 = arith.constant 1 : i32
    %50 = vector.broadcast %c1_i32_11 : i32 to vector<1x784xi32>
    %51 = arith.addi %47, %50 : vector<1x784xi32>
    %c0_12 = arith.constant 0 : index
    %c0_13 = arith.constant 0 : index
    %c0_14 = arith.constant 0 : index
    %c0_15 = arith.constant 0 : index
    %52 = vector.load %arg3[%c0_12, %c0_13, %c0_14, %c0_15] : memref<2x1x28x28xf32, #tpu.memory_space<vmem>>, vector<1x1x28x28xf32>
    %53 = vector.shape_cast %52 : vector<1x1x28x28xf32> to vector<28x28xf32>
    %54 = vector.broadcast %46 : vector<1x784xi32> to vector<28x784xi32>
    %55 = arith.cmpi eq, %2, %54 : vector<28x784xi32>
    %56 = arith.extui %55 : vector<28x784xi1> to vector<28x784xi32>
    %57 = arith.sitofp %56 : vector<28x784xi32> to vector<28x784xf32>
    %58 = vector.broadcast %49 : vector<1x784xi32> to vector<28x784xi32>
    %59 = arith.cmpi eq, %2, %58 : vector<28x784xi32>
    %60 = arith.extui %59 : vector<28x784xi1> to vector<28x784xi32>
    %61 = arith.sitofp %60 : vector<28x784xi32> to vector<28x784xf32>
    %cst_16 = arith.constant dense<0.000000e+00> : vector<28x784xf32>
    %62 = tpu.matmul %53, %57, %cst_16 {dimension_numbers = #tpu.dot_dimension_numbers<[1], [0], [0], [1], [0, 0, 1, 1], [], []>} : vector<28x28xf32>, vector<28x784xf32>, vector<28x784xf32> -> vector<28x784xf32>
    %cst_17 = arith.constant dense<0.000000e+00> : vector<28x784xf32>
    %63 = tpu.matmul %53, %61, %cst_17 {dimension_numbers = #tpu.dot_dimension_numbers<[1], [0], [0], [1], [0, 0, 1, 1], [], []>} : vector<28x28xf32>, vector<28x784xf32>, vector<28x784xf32> -> vector<28x784xf32>
    %64 = arith.subf %63, %62 : vector<28x784xf32>
    %65 = vector.broadcast %44 : vector<1x784xf32> to vector<28x784xf32>
    %66 = arith.mulf %65, %64 : vector<28x784xf32>
    %67 = arith.addf %62, %66 : vector<28x784xf32>
    %68 = vector.broadcast %47 : vector<1x784xi32> to vector<28x784xi32>
    %69 = arith.cmpi eq, %3, %68 : vector<28x784xi32>
    %70 = arith.extui %69 : vector<28x784xi1> to vector<28x784xi32>
    %71 = arith.sitofp %70 : vector<28x784xi32> to vector<28x784xf32>
    %72 = vector.broadcast %51 : vector<1x784xi32> to vector<28x784xi32>
    %73 = arith.cmpi eq, %3, %72 : vector<28x784xi32>
    %74 = arith.extui %73 : vector<28x784xi1> to vector<28x784xi32>
    %75 = arith.sitofp %74 : vector<28x784xi32> to vector<28x784xf32>
    %76 = arith.subf %75, %71 : vector<28x784xf32>
    %77 = vector.broadcast %45 : vector<1x784xf32> to vector<28x784xf32>
    %78 = arith.mulf %77, %76 : vector<28x784xf32>
    %79 = arith.addf %71, %78 : vector<28x784xf32>
    %80 = arith.mulf %79, %67 : vector<28x784xf32>
    %cst_18 = arith.constant dense<0.000000e+00> : vector<784xf32>
    %81 = vector.multi_reduction <add>, %80, %cst_18 [0] : vector<28x784xf32> to vector<784xf32>
    %82 = vector.shape_cast %81 : vector<784xf32> to vector<1x784xf32>
    %c0_19 = arith.constant 0 : index
    %c0_20 = arith.constant 0 : index
    %c0_21 = arith.constant 0 : index
    %83 = vector.load %arg4[%c0_19, %c0_20, %c0_21] : memref<2x1x784xf32, #tpu.memory_space<vmem>>, vector<1x1x784xf32>
    %84 = vector.shape_cast %83 : vector<1x1x784xf32> to vector<1x784xf32>
    %85 = vector.shape_cast %82 : vector<1x784xf32> to vector<1x1x784xf32>
    tpu.vector_store %arg4[%c0_19, %c0_20, %c0_21], %85 {strides = array<i32>} : memref<2x1x784xf32, #tpu.memory_space<vmem>>, vector<1x1x784xf32>,
    %86 = vector.extract_strided_slice %4 {offsets = [1, 0], sizes = [1, 6], strides = [1, 1]} : vector<2x6xf32> to vector<1x6xf32>
    %87 = vector.extract_strided_slice %86 {offsets = [0, 0], sizes = [1, 1], strides = [1, 1]} : vector<1x6xf32> to vector<1x1xf32>
    %88 = vector.broadcast %87 : vector<1x1xf32> to vector<1x784xf32>
    %89 = arith.mulf %88, %0 : vector<1x784xf32>
    %90 = vector.extract_strided_slice %86 {offsets = [0, 1], sizes = [1, 1], strides = [1, 1]} : vector<1x6xf32> to vector<1x1xf32>
    %91 = vector.broadcast %90 : vector<1x1xf32> to vector<1x784xf32>
    %92 = arith.mulf %91, %1 : vector<1x784xf32>
    %93 = arith.addf %89, %92 : vector<1x784xf32>
    %94 = vector.extract_strided_slice %86 {offsets = [0, 2], sizes = [1, 1], strides = [1, 1]} : vector<1x6xf32> to vector<1x1xf32>
    %95 = vector.broadcast %94 : vector<1x1xf32> to vector<1x784xf32>
    %96 = arith.addf %93, %95 : vector<1x784xf32>
    %97 = vector.extract_strided_slice %86 {offsets = [0, 3], sizes = [1, 1], strides = [1, 1]} : vector<1x6xf32> to vector<1x1xf32>
    %98 = vector.broadcast %97 : vector<1x1xf32> to vector<1x784xf32>
    %99 = arith.mulf %98, %0 : vector<1x784xf32>
    %100 = vector.extract_strided_slice %86 {offsets = [0, 4], sizes = [1, 1], strides = [1, 1]} : vector<1x6xf32> to vector<1x1xf32>
    %101 = vector.broadcast %100 : vector<1x1xf32> to vector<1x784xf32>
    %102 = arith.mulf %101, %1 : vector<1x784xf32>
    %103 = arith.addf %99, %102 : vector<1x784xf32>
    %104 = vector.extract_strided_slice %86 {offsets = [0, 5], sizes = [1, 1], strides = [1, 1]} : vector<1x6xf32> to vector<1x1xf32>
    %105 = vector.broadcast %104 : vector<1x1xf32> to vector<1x784xf32>
    %106 = arith.addf %103, %105 : vector<1x784xf32>
    %cst_22 = arith.constant 1.000000e+00 : f32
    %107 = vector.broadcast %cst_22 : f32 to vector<1x784xf32>
    %108 = arith.addf %96, %107 : vector<1x784xf32>
    %cst_23 = arith.constant 2.800000e+01 : f32
    %109 = vector.broadcast %cst_23 : f32 to vector<1x784xf32>
    %110 = arith.mulf %108, %109 : vector<1x784xf32>
    %cst_24 = arith.constant 1.000000e+00 : f32
    %111 = vector.broadcast %cst_24 : f32 to vector<1x784xf32>
    %112 = arith.subf %110, %111 : vector<1x784xf32>
    %cst_25 = arith.constant 5.000000e-01 : f32
    %113 = vector.broadcast %cst_25 : f32 to vector<1x784xf32>
    %114 = arith.mulf %112, %113 : vector<1x784xf32>
    %cst_26 = arith.constant 1.000000e+00 : f32
    %115 = vector.broadcast %cst_26 : f32 to vector<1x784xf32>
    %116 = arith.addf %106, %115 : vector<1x784xf32>
    %cst_27 = arith.constant 2.800000e+01 : f32
    %117 = vector.broadcast %cst_27 : f32 to vector<1x784xf32>
    %118 = arith.mulf %116, %117 : vector<1x784xf32>
    %cst_28 = arith.constant 1.000000e+00 : f32
    %119 = vector.broadcast %cst_28 : f32 to vector<1x784xf32>
    %120 = arith.subf %118, %119 : vector<1x784xf32>
    %cst_29 = arith.constant 5.000000e-01 : f32
    %121 = vector.broadcast %cst_29 : f32 to vector<1x784xf32>
    %122 = arith.mulf %120, %121 : vector<1x784xf32>
    %123 = math.floor %114 : vector<1x784xf32>
    %124 = math.floor %122 : vector<1x784xf32>
    %125 = arith.subf %114, %123 : vector<1x784xf32>
    %126 = arith.subf %122, %124 : vector<1x784xf32>
    %127 = arith.fptosi %123 : vector<1x784xf32> to vector<1x784xi32>
    %128 = arith.fptosi %124 : vector<1x784xf32> to vector<1x784xi32>
    %c1_i32_30 = arith.constant 1 : i32
    %129 = vector.broadcast %c1_i32_30 : i32 to vector<1x784xi32>
    %130 = arith.addi %127, %129 : vector<1x784xi32>
    %c1_i32_31 = arith.constant 1 : i32
    %131 = vector.broadcast %c1_i32_31 : i32 to vector<1x784xi32>
    %132 = arith.addi %128, %131 : vector<1x784xi32>
    %c1_32 = arith.constant 1 : index
    %c0_33 = arith.constant 0 : index
    %c0_34 = arith.constant 0 : index
    %c0_35 = arith.constant 0 : index
    %133 = vector.load %arg3[%c1_32, %c0_33, %c0_34, %c0_35] : memref<2x1x28x28xf32, #tpu.memory_space<vmem>>, vector<1x1x28x28xf32>
    %134 = vector.shape_cast %133 : vector<1x1x28x28xf32> to vector<28x28xf32>
    %135 = vector.broadcast %127 : vector<1x784xi32> to vector<28x784xi32>
    %136 = arith.cmpi eq, %2, %135 : vector<28x784xi32>
    %137 = arith.extui %136 : vector<28x784xi1> to vector<28x784xi32>
    %138 = arith.sitofp %137 : vector<28x784xi32> to vector<28x784xf32>
    %139 = vector.broadcast %130 : vector<1x784xi32> to vector<28x784xi32>
    %140 = arith.cmpi eq, %2, %139 : vector<28x784xi32>
    %141 = arith.extui %140 : vector<28x784xi1> to vector<28x784xi32>
    %142 = arith.sitofp %141 : vector<28x784xi32> to vector<28x784xf32>
    %cst_36 = arith.constant dense<0.000000e+00> : vector<28x784xf32>
    %143 = tpu.matmul %134, %138, %cst_36 {dimension_numbers = #tpu.dot_dimension_numbers<[1], [0], [0], [1], [0, 0, 1, 1], [], []>} : vector<28x28xf32>, vector<28x784xf32>, vector<28x784xf32> -> vector<28x784xf32>
    %cst_37 = arith.constant dense<0.000000e+00> : vector<28x784xf32>
    %144 = tpu.matmul %134, %142, %cst_37 {dimension_numbers = #tpu.dot_dimension_numbers<[1], [0], [0], [1], [0, 0, 1, 1], [], []>} : vector<28x28xf32>, vector<28x784xf32>, vector<28x784xf32> -> vector<28x784xf32>
    %145 = arith.subf %144, %143 : vector<28x784xf32>
    %146 = vector.broadcast %125 : vector<1x784xf32> to vector<28x784xf32>
    %147 = arith.mulf %146, %145 : vector<28x784xf32>
    %148 = arith.addf %143, %147 : vector<28x784xf32>
    %149 = vector.broadcast %128 : vector<1x784xi32> to vector<28x784xi32>
    %150 = arith.cmpi eq, %3, %149 : vector<28x784xi32>
    %151 = arith.extui %150 : vector<28x784xi1> to vector<28x784xi32>
    %152 = arith.sitofp %151 : vector<28x784xi32> to vector<28x784xf32>
    %153 = vector.broadcast %132 : vector<1x784xi32> to vector<28x784xi32>
    %154 = arith.cmpi eq, %3, %153 : vector<28x784xi32>
    %155 = arith.extui %154 : vector<28x784xi1> to vector<28x784xi32>
    %156 = arith.sitofp %155 : vector<28x784xi32> to vector<28x784xf32>
    %157 = arith.subf %156, %152 : vector<28x784xf32>
    %158 = vector.broadcast %126 : vector<1x784xf32> to vector<28x784xf32>
    %159 = arith.mulf %158, %157 : vector<28x784xf32>
    %160 = arith.addf %152, %159 : vector<28x784xf32>
    %161 = arith.mulf %160, %148 : vector<28x784xf32>
    %cst_38 = arith.constant dense<0.000000e+00> : vector<784xf32>
    %162 = vector.multi_reduction <add>, %161, %cst_38 [0] : vector<28x784xf32> to vector<784xf32>
    %163 = vector.shape_cast %162 : vector<784xf32> to vector<1x784xf32>
    %c1_39 = arith.constant 1 : index
    %c0_40 = arith.constant 0 : index
    %c0_41 = arith.constant 0 : index
    %164 = vector.load %arg4[%c1_39, %c0_40, %c0_41] : memref<2x1x784xf32, #tpu.memory_space<vmem>>, vector<1x1x784xf32>
    %165 = vector.shape_cast %164 : vector<1x1x784xf32> to vector<1x784xf32>
    %166 = vector.shape_cast %163 : vector<1x784xf32> to vector<1x1x784xf32>
    tpu.vector_store %arg4[%c1_39, %c0_40, %c0_41], %166 {strides = array<i32>} : memref<2x1x784xf32, #tpu.memory_space<vmem>>, vector<1x1x784xf32>,
    return
  }
  func.func @transform_0(%arg0: i32) -> (i32, i32) {
    %c0_i32 = arith.constant 0 : i32
    %c0_i32_0 = arith.constant 0 : i32
    return %arg0, %c0_i32 : i32, i32
  }
  func.func @transform_1(%arg0: i32) -> (i32, i32) {
    %c0_i32 = arith.constant 0 : i32
    %c0_i32_0 = arith.constant 0 : i32
    %c0_i32_1 = arith.constant 0 : i32
    return %c0_i32, %c0_i32_0 : i32, i32
  }
  func.func @transform_2(%arg0: i32) -> (i32, i32, i32, i32) {
    %c0_i32 = arith.constant 0 : i32
    %c0_i32_0 = arith.constant 0 : i32
    %c0_i32_1 = arith.constant 0 : i32
    %c0_i32_2 = arith.constant 0 : i32
    return %arg0, %c0_i32, %c0_i32_0, %c0_i32_1 : i32, i32, i32, i32
  }
  func.func @transform_3(%arg0: i32) -> (i32, i32, i32) {
    %c0_i32 = arith.constant 0 : i32
    %c0_i32_0 = arith.constant 0 : i32
    %c0_i32_1 = arith.constant 0 : i32
    return %arg0, %c0_i32, %c0_i32_0 : i32, i32, i32
  }
}

module attributes {stable_mosaic.version = 11 : i64} {
  func.func @mlp_kernel(%arg0: i32, %arg1: memref<2x980xf32, #tpu.memory_space<vmem>>, %arg2: memref<980x100xf32, #tpu.memory_space<vmem>>, %arg3: memref<1x100xf32, #tpu.memory_space<vmem>>, %arg4: memref<100x10xf32, #tpu.memory_space<vmem>>, %arg5: memref<1x10xf32, #tpu.memory_space<vmem>>, %arg6: memref<2x10xf32, #tpu.memory_space<vmem>>) attributes {dimension_semantics = [#tpu.dimension_semantics<parallel>], iteration_bounds = array<i64: 1>, scalar_prefetch = 0 : i64, scratch_operands = 0 : i64, tpu.core_type = #tpu.core_type<tc>, window_params = [{transform_indices = @transform_0, window_bounds = array<i64: 2, 980>}, {pipeline_mode = #tpu.pipeline_mode<synchronous>, transform_indices = @transform_1, window_bounds = array<i64: 980, 100>}, {pipeline_mode = #tpu.pipeline_mode<synchronous>, transform_indices = @transform_2, window_bounds = array<i64: 1, 100>}, {pipeline_mode = #tpu.pipeline_mode<synchronous>, transform_indices = @transform_3, window_bounds = array<i64: 100, 10>}, {pipeline_mode = #tpu.pipeline_mode<synchronous>, transform_indices = @transform_4, window_bounds = array<i64: 1, 10>}, {transform_indices = @transform_5, window_bounds = array<i64: 2, 10>}]} {
    %c0 = arith.constant 0 : index
    %c0_0 = arith.constant 0 : index
    %0 = vector.load %arg1[%c0, %c0_0] : memref<2x980xf32, #tpu.memory_space<vmem>>, vector<2x980xf32>
    %c0_1 = arith.constant 0 : index
    %c0_2 = arith.constant 0 : index
    %1 = vector.load %arg2[%c0_1, %c0_2] : memref<980x100xf32, #tpu.memory_space<vmem>>, vector<980x100xf32>
    %cst = arith.constant dense<0.000000e+00> : vector<2x100xf32>
    %2 = tpu.matmul %0, %1, %cst {dimension_numbers = #tpu.dot_dimension_numbers<[1], [0], [0], [1], [0, 0, 1, 1], [], []>} : vector<2x980xf32>, vector<980x100xf32>, vector<2x100xf32> -> vector<2x100xf32>
    %c0_3 = arith.constant 0 : index
    %c0_4 = arith.constant 0 : index
    %3 = vector.load %arg3[%c0_3, %c0_4] : memref<1x100xf32, #tpu.memory_space<vmem>>, vector<1x100xf32>
    %4 = vector.broadcast %3 : vector<1x100xf32> to vector<2x100xf32>
    %5 = arith.addf %2, %4 : vector<2x100xf32>
    %cst_5 = arith.constant 0.000000e+00 : f32
    %6 = vector.broadcast %cst_5 : f32 to vector<2x100xf32>
    %7 = arith.maximumf %5, %6 : vector<2x100xf32>
    %c0_6 = arith.constant 0 : index
    %c0_7 = arith.constant 0 : index
    %8 = vector.load %arg4[%c0_6, %c0_7] : memref<100x10xf32, #tpu.memory_space<vmem>>, vector<100x10xf32>
    %cst_8 = arith.constant dense<0.000000e+00> : vector<2x10xf32>
    %9 = tpu.matmul %7, %8, %cst_8 {dimension_numbers = #tpu.dot_dimension_numbers<[1], [0], [0], [1], [0, 0, 1, 1], [], []>} : vector<2x100xf32>, vector<100x10xf32>, vector<2x10xf32> -> vector<2x10xf32>
    %c0_9 = arith.constant 0 : index
    %c0_10 = arith.constant 0 : index
    %10 = vector.load %arg5[%c0_9, %c0_10] : memref<1x10xf32, #tpu.memory_space<vmem>>, vector<1x10xf32>
    %11 = vector.broadcast %10 : vector<1x10xf32> to vector<2x10xf32>
    %12 = arith.addf %9, %11 : vector<2x10xf32>
    %c0_11 = arith.constant 0 : index
    %c0_12 = arith.constant 0 : index
    %13 = vector.load %arg6[%c0_11, %c0_12] : memref<2x10xf32, #tpu.memory_space<vmem>>, vector<2x10xf32>
    tpu.vector_store %arg6[%c0_11, %c0_12], %12 {strides = array<i32>} : memref<2x10xf32, #tpu.memory_space<vmem>>, vector<2x10xf32>,
    return
  }
  func.func @transform_0(%arg0: i32) -> (i32, i32) {
    %c0_i32 = arith.constant 0 : i32
    %c0_i32_0 = arith.constant 0 : i32
    return %arg0, %c0_i32 : i32, i32
  }
  func.func @transform_1(%arg0: i32) -> (i32, i32) {
    %c0_i32 = arith.constant 0 : i32
    %c0_i32_0 = arith.constant 0 : i32
    %c0_i32_1 = arith.constant 0 : i32
    return %c0_i32, %c0_i32_0 : i32, i32
  }
  func.func @transform_2(%arg0: i32) -> (i32, i32) {
    %c0_i32 = arith.constant 0 : i32
    %c0_i32_0 = arith.constant 0 : i32
    %c0_i32_1 = arith.constant 0 : i32
    return %c0_i32, %c0_i32_0 : i32, i32
  }
  func.func @transform_3(%arg0: i32) -> (i32, i32) {
    %c0_i32 = arith.constant 0 : i32
    %c0_i32_0 = arith.constant 0 : i32
    %c0_i32_1 = arith.constant 0 : i32
    return %c0_i32, %c0_i32_0 : i32, i32
  }
  func.func @transform_4(%arg0: i32) -> (i32, i32) {
    %c0_i32 = arith.constant 0 : i32
    %c0_i32_0 = arith.constant 0 : i32
    %c0_i32_1 = arith.constant 0 : i32
    return %c0_i32, %c0_i32_0 : i32, i32
  }
  func.func @transform_5(%arg0: i32) -> (i32, i32) {
    %c0_i32 = arith.constant 0 : i32
    %c0_i32_0 = arith.constant 0 : i32
    return %arg0, %c0_i32 : i32, i32
  }
}

</mosaic_0001>

<llo_original>
// kernel: net_with_stn_forward.7
$region0: #{net_with_stn_forward.7}
  #allocation0 [shape = 'u32[]', space=smem, size = 0x4, offset = 0x4, fixed_abs, tag = 'smem constant byte address 0x4 - core index']
  #allocation1 [shape = 'u32[72,128]{1,0:T(1,128)}', space=vmem, size = 0x9000, scoped, tag = 'internal scratch']
  %s0 = inlined_call_operand.vmem [shape: f32[2,2,1,512], index: 0, kind: input, shape index: {}]
  %s1 = inlined_call_operand.vmem [shape: bf16[10,9], index: 1, kind: input, shape index: {}]
  %s2 = inlined_call_operand.vmem [shape: f32[10,1], index: 2, kind: input, shape index: {}]
  %s3 = inlined_call_operand.vmem [shape: f32[10,512], index: 3, kind: output, shape index: {}]
  %s4 = sld [smem:[#allocation0]]
  $region22: #{net_with_stn_forward.7} parent=0
    _
  %s6 = ssub.s32 1, %s4
  %s7 = scalar_select 0, %s6, %s4
  // Predicated region
  $region2: #{net_with_stn_forward.7} parent=0 // pred_check
    _
  $region3: #{net_with_stn_forward.7} parent=0 // pred_check_branch
    %9 = sbr.rel (0) target = $region5
  $region4: #{net_with_stn_forward.7} parent=0 // pred_region
    _
  $region5: #{net_with_stn_forward.7} parent=0 // pred_fallthru
    _
  // Predicated region
  $region6: #{net_with_stn_forward.7} parent=0 // pred_check
    _
  $region7: #{net_with_stn_forward.7} parent=0 // pred_check_branch
    %11 = sbr.rel (0) target = $region9
  $region8: #{net_with_stn_forward.7} parent=0 // pred_region
    _
  $region9: #{net_with_stn_forward.7} parent=0 // pred_fallthru
    _
  // Predicated region
  $region10: #{net_with_stn_forward.7} parent=0 // pred_check
    _
  $region11: #{net_with_stn_forward.7} parent=0 // pred_check_branch
    %13 = sbr.rel (0) target = $region13
  $region12: #{net_with_stn_forward.7} parent=0 // pred_region
    _
  $region13: #{net_with_stn_forward.7} parent=0 // pred_fallthru
    _
  %v15 = vld [vmem:[%s1] sm:$0xf]
  %v16 = vld [vmem:[%s1 + $0x4] sm:$0x1]
  %v17 = vld [vmem:[%s0] sm:$0xf]
  %s18 = scalar_lea.vmem %s0, 4
  %v19 = vld [vmem:[%s18] sm:$0xf]
  %s20 = scalar_lea.vmem %s0, 8
  %v21 = vld [vmem:[%s20] sm:$0xf]
  %s22 = scalar_lea.vmem %s0, 12
  %v23 = vld [vmem:[%s22] sm:$0xf]
  %v25 = vperm.slane %v17, 0
  %v26 = vperm.slane %v17, 1
  %v27 = vperm.slane %v17, 2
  %v28 = vperm.slane %v17, 3
  %29 = vrot.lane.b32.xlu0 %v25, 127
  %v30 = vpop.permute.xlu0 %29
  %31 = vrot.lane.b32.xlu0 %v26, 127
  %v32 = vpop.permute.xlu0 %31
  %33 = vrot.lane.b32.xlu0 %v27, 127
  %v34 = vpop.permute.xlu0 %33
  %35 = vrot.lane.b32.xlu0 %v28, 127
  %v36 = vpop.permute.xlu0 %35
  %vm37 = vcmask 1039360
  %v38 = vsel %vm37, %v30, %v32
  %v39 = vsel %vm37, %v32, %v34
  %v40 = vsel %vm37, %v34, %v36
  %v42 = vsel %vm37, %v36, 0.0
  %v44 = vperm.slane %v21, 0
  %v45 = vperm.slane %v21, 1
  %v46 = vperm.slane %v21, 2
  %v47 = vperm.slane %v21, 3
  %48 = vrot.lane.b32.xlu0 %v44, 127
  %v49 = vpop.permute.xlu0 %48
  %50 = vrot.lane.b32.xlu0 %v45, 127
  %v51 = vpop.permute.xlu0 %50
  %52 = vrot.lane.b32.xlu0 %v46, 127
  %v53 = vpop.permute.xlu0 %52
  %54 = vrot.lane.b32.xlu0 %v47, 127
  %v55 = vpop.permute.xlu0 %54
  %v56 = vsel %vm37, %v49, %v51
  %v57 = vsel %vm37, %v51, %v53
  %v58 = vsel %vm37, %v53, %v55
  %v60 = vsel %vm37, %v55, 0.0
  %61 = vrot.lane.b32.xlu0 %v25, 113
  %v62 = vpop.permute.xlu0 %61
  %63 = vrot.lane.b32.xlu0 %v26, 113
  %v64 = vpop.permute.xlu0 %63
  %65 = vrot.lane.b32.xlu0 %v27, 113
  %v66 = vpop.permute.xlu0 %65
  %67 = vrot.lane.b32.xlu0 %v28, 113
  %v68 = vpop.permute.xlu0 %67
  %vm69 = vcmask 924672
  %v70 = vsel %vm69, %v62, %v64
  %v71 = vsel %vm69, %v64, %v66
  %v72 = vsel %vm69, %v66, %v68
  %v74 = vsel %vm69, %v68, 0.0
  %v76 = vperm.slane %v19, 0
  %v77 = vperm.slane %v19, 1
  %v78 = vperm.slane %v19, 2
  %v79 = vperm.slane %v19, 3
  %80 = vrot.lane.b32.xlu0 %v76, 113
  %v81 = vpop.permute.xlu0 %80
  %82 = vrot.lane.b32.xlu0 %v77, 113
  %v83 = vpop.permute.xlu0 %82
  %84 = vrot.lane.b32.xlu0 %v78, 113
  %v85 = vpop.permute.xlu0 %84
  %86 = vrot.lane.b32.xlu0 %v79, 113
  %v87 = vpop.permute.xlu0 %86
  %v88 = vsel %vm69, %v81, %v83
  %v89 = vsel %vm69, %v83, %v85
  %v90 = vsel %vm69, %v85, %v87
  %v92 = vsel %vm69, %v87, 0.0
  %93 = vrot.lane.b32.xlu0 %v25, 112
  %v94 = vpop.permute.xlu0 %93
  %95 = vrot.lane.b32.xlu0 %v26, 112
  %v96 = vpop.permute.xlu0 %95
  %97 = vrot.lane.b32.xlu0 %v27, 112
  %v98 = vpop.permute.xlu0 %97
  %99 = vrot.lane.b32.xlu0 %v28, 112
  %v100 = vpop.permute.xlu0 %99
  %vm101 = vcmask 916480
  %v102 = vsel %vm101, %v94, %v96
  %v103 = vsel %vm101, %v96, %v98
  %v104 = vsel %vm101, %v98, %v100
  %v109 = vsel %vm101, %v100, 0.0
  %v119 = vrot.slane %v38, 6
  %v120 = vrot.slane %v39, 6
  %v121 = vrot.slane %v40, 6
  %v122 = vrot.slane %v42, 6
  %v132 = vperm.slane %v23, 0
  %v133 = vperm.slane %v23, 1
  %v134 = vperm.slane %v23, 2
  %v135 = vperm.slane %v23, 3
  %v141 = vrot.slane %v56, 3
  %v142 = vrot.slane %v57, 3
  %v143 = vrot.slane %v58, 3
  %v144 = vrot.slane %v60, 3
  %v150 = vrot.slane %v70, 2
  %v151 = vrot.slane %v71, 2
  %v152 = vrot.slane %v72, 2
  %v153 = vrot.slane %v74, 2
  %v159 = vrot.slane %v88, 1
  %v160 = vrot.slane %v89, 1
  %v161 = vrot.slane %v90, 1
  %v162 = vrot.slane %v92, 1
  %vm167 = vcmask 1040384
  %v168 = vsel %vm167, %v25, %v76
  %v169 = vsel %vm167, %v26, %v77
  %v170 = vsel %vm167, %v27, %v78
  %v171 = vsel %vm167, %v28, %v79
  %vm172 = vcmask 1041408
  %v173 = vsel %vm172, %v168, %v119
  %v174 = vsel %vm172, %v169, %v120
  %v175 = vsel %vm172, %v170, %v121
  %v176 = vsel %vm172, %v171, %v122
  %vm177 = vcmask 1042432
  %v178 = vsel %vm177, %v173, %v44
  %v179 = vsel %vm177, %v174, %v45
  %v180 = vsel %vm177, %v175, %v46
  %v181 = vsel %vm177, %v176, %v47
  %vm182 = vcmask 1043456
  %v183 = vsel %vm182, %v178, %v132
  %v184 = vsel %vm182, %v179, %v133
  %v185 = vsel %vm182, %v180, %v134
  %v186 = vsel %vm182, %v181, %v135
  %vm187 = vcmask 1044480
  %v188 = vsel %vm187, %v183, %v141
  %v189 = vsel %vm187, %v184, %v142
  %v190 = vsel %vm187, %v185, %v143
  %v191 = vsel %vm187, %v186, %v144
  %vm192 = vcmask 1045504
  %v193 = vsel %vm192, %v188, %v150
  %v194 = vsel %vm192, %v189, %v151
  %v195 = vsel %vm192, %v190, %v152
  %v196 = vsel %vm192, %v191, %v153
  %vm197 = vcmask 1046528
  %v198 = vsel %vm197, %v193, %v159
  %v199 = vsel %vm197, %v194, %v160
  %v200 = vsel %vm197, %v195, %v161
  %v201 = vsel %vm197, %v196, %v162
  %v202 = vpack.c.bf16 %v102, %v198
  %v203 = vpack.c.bf16 %v103, %v199
  %v204 = vpack.c.bf16 %v104, %v200
  %v205 = vpack.c.bf16 %v109, %v201
  %v208 = vunpack.c.l.b16 %v15
  %v209 = vunpack.c.l.b16 %v16
  %v210 = vpack.c.b16 %v209, %v208
  %vm211 = vcmask 72704
  %v213 = vsel %vm211, %v210, 0
  %v215 = vsel %vm182, 4294967295, 65535
  %v216 = vsel %vm187, %v215, 0
  %v218 = vand.u32 %v202, %v216
  %v221 = vand.u32 %v203, %v216
  %v224 = vand.u32 %v204, %v216
  %v227 = vand.u32 %v205, %v216
  %229 = vmatpush.bf16.msra.mxu0 0
  %230 = vmatpush.bf16.msra.mxu0 0
  %231 = vmatpush.bf16.msra.mxu0 0
  %232 = vmatpush.bf16.msra.mxu0 0
  %233 = vmatpush.bf16.msra.mxu0 0
  %234 = vmatpush.bf16.msra.mxu0 0
  %235 = vmatpush.bf16.msra.mxu0 0
  %236 = vmatpush.bf16.msra.mxu0 %v218
  %237 = vmatmul.bf16.gmra.mxu0 %v213
  %v238 = vpop.f32.mrf.mxu0
  %v239 = vadd.f32 0.0, %v238
  %v240 = vpop.f32.mrf.mxu0
  %v241 = vadd.f32 0.0, %v240
  %242 = vdwg.mxu0
  %243 = vmatpush.bf16.msra.mxu0 0
  %244 = vmatpush.bf16.msra.mxu0 0
  %245 = vmatpush.bf16.msra.mxu0 0
  %246 = vmatpush.bf16.msra.mxu0 0
  %247 = vmatpush.bf16.msra.mxu0 0
  %248 = vmatpush.bf16.msra.mxu0 0
  %249 = vmatpush.bf16.msra.mxu0 0
  %250 = vmatpush.bf16.msra.mxu0 %v221
  %251 = vmatmul.bf16.gmra.mxu0 %v213
  %v252 = vpop.f32.mrf.mxu0
  %v253 = vadd.f32 0.0, %v252
  %v254 = vpop.f32.mrf.mxu0
  %v255 = vadd.f32 0.0, %v254
  %256 = vdwg.mxu0
  %257 = vmatpush.bf16.msra.mxu0 0
  %258 = vmatpush.bf16.msra.mxu0 0
  %259 = vmatpush.bf16.msra.mxu0 0
  %260 = vmatpush.bf16.msra.mxu0 0
  %261 = vmatpush.bf16.msra.mxu0 0
  %262 = vmatpush.bf16.msra.mxu0 0
  %263 = vmatpush.bf16.msra.mxu0 0
  %264 = vmatpush.bf16.msra.mxu0 %v224
  %265 = vmatmul.bf16.gmra.mxu0 %v213
  %v266 = vpop.f32.mrf.mxu0
  %v267 = vadd.f32 0.0, %v266
  %v268 = vpop.f32.mrf.mxu0
  %v269 = vadd.f32 0.0, %v268
  %270 = vdwg.mxu0
  %271 = vmatpush.bf16.msra.mxu0 0
  %272 = vmatpush.bf16.msra.mxu0 0
  %273 = vmatpush.bf16.msra.mxu0 0
  %274 = vmatpush.bf16.msra.mxu0 0
  %275 = vmatpush.bf16.msra.mxu0 0
  %276 = vmatpush.bf16.msra.mxu0 0
  %277 = vmatpush.bf16.msra.mxu0 0
  %278 = vmatpush.bf16.msra.mxu0 %v227
  %279 = vmatmul.bf16.gmra.mxu0 %v213
  %v280 = vpop.f32.mrf.mxu0
  %v281 = vadd.f32 0.0, %v280
  %v282 = vpop.f32.mrf.mxu0
  %v283 = vadd.f32 0.0, %v282
  %284 = vdwg.mxu0
  %285 = vrot.lane.b32.xlu0 %v76, 127
  %v286 = vpop.permute.xlu0 %285
  %287 = vrot.lane.b32.xlu0 %v77, 127
  %v288 = vpop.permute.xlu0 %287
  %289 = vrot.lane.b32.xlu0 %v78, 127
  %v290 = vpop.permute.xlu0 %289
  %291 = vrot.lane.b32.xlu0 %v79, 127
  %v292 = vpop.permute.xlu0 %291
  %v293 = vsel %vm37, %v286, %v288
  %v294 = vsel %vm37, %v288, %v290
  %v295 = vsel %vm37, %v290, %v292
  %v297 = vsel %vm37, %v292, 0.0
  %298 = vrot.lane.b32.xlu0 %v132, 127
  %v299 = vpop.permute.xlu0 %298
  %300 = vrot.lane.b32.xlu0 %v133, 127
  %v301 = vpop.permute.xlu0 %300
  %302 = vrot.lane.b32.xlu0 %v134, 127
  %v303 = vpop.permute.xlu0 %302
  %304 = vrot.lane.b32.xlu0 %v135, 127
  %v305 = vpop.permute.xlu0 %304
  %v306 = vsel %vm37, %v299, %v301
  %v307 = vsel %vm37, %v301, %v303
  %v308 = vsel %vm37, %v303, %v305
  %v310 = vsel %vm37, %v305, 0.0
  %311 = vrot.lane.b32.xlu0 %v76, 112
  %v312 = vpop.permute.xlu0 %311
  %313 = vrot.lane.b32.xlu0 %v77, 112
  %v314 = vpop.permute.xlu0 %313
  %315 = vrot.lane.b32.xlu0 %v78, 112
  %v316 = vpop.permute.xlu0 %315
  %317 = vrot.lane.b32.xlu0 %v79, 112
  %v318 = vpop.permute.xlu0 %317
  %v319 = vsel %vm101, %v312, %v314
  %v320 = vsel %vm101, %v314, %v316
  %v321 = vsel %vm101, %v316, %v318
  %v326 = vsel %vm101, %v318, 0.0
  %v327 = vrot.slane %v38, 7
  %v328 = vrot.slane %v39, 7
  %v329 = vrot.slane %v40, 7
  %v330 = vrot.slane %v42, 7
  %v336 = vrot.slane %v293, 6
  %v337 = vrot.slane %v294, 6
  %v338 = vrot.slane %v295, 6
  %v339 = vrot.slane %v297, 6
  %v344 = vrot.slane %v56, 4
  %v345 = vrot.slane %v57, 4
  %v346 = vrot.slane %v58, 4
  %v347 = vrot.slane %v60, 4
  %v353 = vrot.slane %v306, 3
  %v354 = vrot.slane %v307, 3
  %v355 = vrot.slane %v308, 3
  %v356 = vrot.slane %v310, 3
  %v361 = vrot.slane %v88, 2
  %v362 = vrot.slane %v89, 2
  %v363 = vrot.slane %v90, 2
  %v364 = vrot.slane %v92, 2
  %v370 = vrot.slane %v102, 1
  %v371 = vrot.slane %v103, 1
  %v372 = vrot.slane %v104, 1
  %v373 = vrot.slane %v109, 1
  %v378 = vsel %vm167, %v76, %v327
  %v379 = vsel %vm167, %v77, %v328
  %v380 = vsel %vm167, %v78, %v329
  %v381 = vsel %vm167, %v79, %v330
  %v382 = vsel %vm172, %v378, %v336
  %v383 = vsel %vm172, %v379, %v337
  %v384 = vsel %vm172, %v380, %v338
  %v385 = vsel %vm172, %v381, %v339
  %v386 = vsel %vm177, %v382, %v132
  %v387 = vsel %vm177, %v383, %v133
  %v388 = vsel %vm177, %v384, %v134
  %v389 = vsel %vm177, %v385, %v135
  %v390 = vsel %vm182, %v386, %v344
  %v391 = vsel %vm182, %v387, %v345
  %v392 = vsel %vm182, %v388, %v346
  %v393 = vsel %vm182, %v389, %v347
  %v394 = vsel %vm187, %v390, %v353
  %v395 = vsel %vm187, %v391, %v354
  %v396 = vsel %vm187, %v392, %v355
  %v397 = vsel %vm187, %v393, %v356
  %v398 = vsel %vm192, %v394, %v361
  %v399 = vsel %vm192, %v395, %v362
  %v400 = vsel %vm192, %v396, %v363
  %v401 = vsel %vm192, %v397, %v364
  %v402 = vsel %vm197, %v398, %v370
  %v403 = vsel %vm197, %v399, %v371
  %v404 = vsel %vm197, %v400, %v372
  %v405 = vsel %vm197, %v401, %v373
  %v406 = vpack.c.bf16 %v319, %v402
  %v407 = vpack.c.bf16 %v320, %v403
  %v408 = vpack.c.bf16 %v321, %v404
  %v409 = vpack.c.bf16 %v326, %v405
  %v411 = vand.u32 %v406, %v216
  %v414 = vand.u32 %v407, %v216
  %v417 = vand.u32 %v408, %v216
  %v420 = vand.u32 %v409, %v216
  %422 = vmatpush.bf16.msra.mxu0 0
  %423 = vmatpush.bf16.msra.mxu0 0
  %424 = vmatpush.bf16.msra.mxu0 0
  %425 = vmatpush.bf16.msra.mxu0 0
  %426 = vmatpush.bf16.msra.mxu0 0
  %427 = vmatpush.bf16.msra.mxu0 0
  %428 = vmatpush.bf16.msra.mxu0 0
  %429 = vmatpush.bf16.msra.mxu0 %v411
  %430 = vmatmul.bf16.gmra.mxu0 %v213
  %v431 = vpop.f32.mrf.mxu0
  %v432 = vadd.f32 0.0, %v431
  %v433 = vpop.f32.mrf.mxu0
  %v434 = vadd.f32 0.0, %v433
  %435 = vdwg.mxu0
  %436 = vmatpush.bf16.msra.mxu0 0
  %437 = vmatpush.bf16.msra.mxu0 0
  %438 = vmatpush.bf16.msra.mxu0 0
  %439 = vmatpush.bf16.msra.mxu0 0
  %440 = vmatpush.bf16.msra.mxu0 0
  %441 = vmatpush.bf16.msra.mxu0 0
  %442 = vmatpush.bf16.msra.mxu0 0
  %443 = vmatpush.bf16.msra.mxu0 %v414
  %444 = vmatmul.bf16.gmra.mxu0 %v213
  %v445 = vpop.f32.mrf.mxu0
  %v446 = vadd.f32 0.0, %v445
  %v447 = vpop.f32.mrf.mxu0
  %v448 = vadd.f32 0.0, %v447
  %449 = vdwg.mxu0
  %450 = vmatpush.bf16.msra.mxu0 0
  %451 = vmatpush.bf16.msra.mxu0 0
  %452 = vmatpush.bf16.msra.mxu0 0
  %453 = vmatpush.bf16.msra.mxu0 0
  %454 = vmatpush.bf16.msra.mxu0 0
  %455 = vmatpush.bf16.msra.mxu0 0
  %456 = vmatpush.bf16.msra.mxu0 0
  %457 = vmatpush.bf16.msra.mxu0 %v417
  %458 = vmatmul.bf16.gmra.mxu0 %v213
  %v459 = vpop.f32.mrf.mxu0
  %v460 = vadd.f32 0.0, %v459
  %v461 = vpop.f32.mrf.mxu0
  %v462 = vadd.f32 0.0, %v461
  %463 = vdwg.mxu0
  %464 = vmatpush.bf16.msra.mxu0 0
  %465 = vmatpush.bf16.msra.mxu0 0
  %466 = vmatpush.bf16.msra.mxu0 0
  %467 = vmatpush.bf16.msra.mxu0 0
  %468 = vmatpush.bf16.msra.mxu0 0
  %469 = vmatpush.bf16.msra.mxu0 0
  %470 = vmatpush.bf16.msra.mxu0 0
  %471 = vmatpush.bf16.msra.mxu0 %v420
  %472 = vmatmul.bf16.gmra.mxu0 %v213
  %v473 = vpop.f32.mrf.mxu0
  %v474 = vadd.f32 0.0, %v473
  %v475 = vpop.f32.mrf.mxu0
  %v476 = vadd.f32 0.0, %v475
  %477 = vdwg.mxu0
  %v478 = vmax.f32 %v239, %v432
  %v479 = vmax.f32 %v253, %v446
  %v480 = vmax.f32 %v267, %v460
  %v481 = vmax.f32 %v281, %v474
  %v482 = vmax.f32 %v241, %v434
  %v483 = vmax.f32 %v255, %v448
  %v484 = vmax.f32 %v269, %v462
  %v485 = vmax.f32 %v283, %v476
  %486 = vrot.lane.b32.xlu0 %v44, 113
  %v487 = vpop.permute.xlu0 %486
  %488 = vrot.lane.b32.xlu0 %v45, 113
  %v489 = vpop.permute.xlu0 %488
  %490 = vrot.lane.b32.xlu0 %v46, 113
  %v491 = vpop.permute.xlu0 %490
  %492 = vrot.lane.b32.xlu0 %v47, 113
  %v493 = vpop.permute.xlu0 %492
  %v494 = vsel %vm69, %v487, %v489
  %v495 = vsel %vm69, %v489, %v491
  %v496 = vsel %vm69, %v491, %v493
  %v498 = vsel %vm69, %v493, 0.0
  %499 = vrot.lane.b32.xlu0 %v132, 113
  %v500 = vpop.permute.xlu0 %499
  %501 = vrot.lane.b32.xlu0 %v133, 113
  %v502 = vpop.permute.xlu0 %501
  %503 = vrot.lane.b32.xlu0 %v134, 113
  %v504 = vpop.permute.xlu0 %503
  %505 = vrot.lane.b32.xlu0 %v135, 113
  %v506 = vpop.permute.xlu0 %505
  %v507 = vsel %vm69, %v500, %v502
  %v508 = vsel %vm69, %v502, %v504
  %v509 = vsel %vm69, %v504, %v506
  %v511 = vsel %vm69, %v506, 0.0
  %512 = vrot.lane.b32.xlu0 %v44, 112
  %v513 = vpop.permute.xlu0 %512
  %514 = vrot.lane.b32.xlu0 %v45, 112
  %v515 = vpop.permute.xlu0 %514
  %516 = vrot.lane.b32.xlu0 %v46, 112
  %v517 = vpop.permute.xlu0 %516
  %518 = vrot.lane.b32.xlu0 %v47, 112
  %v519 = vpop.permute.xlu0 %518
  %v520 = vsel %vm101, %v513, %v515
  %v521 = vsel %vm101, %v515, %v517
  %v522 = vsel %vm101, %v517, %v519
  %v527 = vsel %vm101, %v519, 0.0
  %v528 = vrot.slane %v56, 6
  %v529 = vrot.slane %v57, 6
  %v530 = vrot.slane %v58, 6
  %v531 = vrot.slane %v60, 6
  %v536 = vrot.slane %v70, 5
  %v537 = vrot.slane %v71, 5
  %v538 = vrot.slane %v72, 5
  %v539 = vrot.slane %v74, 5
  %v544 = vrot.slane %v88, 4
  %v545 = vrot.slane %v89, 4
  %v546 = vrot.slane %v90, 4
  %v547 = vrot.slane %v92, 4
  %v552 = vrot.slane %v102, 3
  %v553 = vrot.slane %v103, 3
  %v554 = vrot.slane %v104, 3
  %v555 = vrot.slane %v109, 3
  %v561 = vrot.slane %v494, 2
  %v562 = vrot.slane %v495, 2
  %v563 = vrot.slane %v496, 2
  %v564 = vrot.slane %v498, 2
  %v570 = vrot.slane %v507, 1
  %v571 = vrot.slane %v508, 1
  %v572 = vrot.slane %v509, 1
  %v573 = vrot.slane %v511, 1
  %v578 = vsel %vm167, %v44, %v132
  %v579 = vsel %vm167, %v45, %v133
  %v580 = vsel %vm167, %v46, %v134
  %v581 = vsel %vm167, %v47, %v135
  %v582 = vsel %vm172, %v578, %v528
  %v583 = vsel %vm172, %v579, %v529
  %v584 = vsel %vm172, %v580, %v530
  %v585 = vsel %vm172, %v581, %v531
  %v586 = vsel %vm177, %v582, %v536
  %v587 = vsel %vm177, %v583, %v537
  %v588 = vsel %vm177, %v584, %v538
  %v589 = vsel %vm177, %v585, %v539
  %v590 = vsel %vm182, %v586, %v544
  %v591 = vsel %vm182, %v587, %v545
  %v592 = vsel %vm182, %v588, %v546
  %v593 = vsel %vm182, %v589, %v547
  %v594 = vsel %vm187, %v590, %v552
  %v595 = vsel %vm187, %v591, %v553
  %v596 = vsel %vm187, %v592, %v554
  %v597 = vsel %vm187, %v593, %v555
  %v598 = vsel %vm192, %v594, %v561
  %v599 = vsel %vm192, %v595, %v562
  %v600 = vsel %vm192, %v596, %v563
  %v601 = vsel %vm192, %v597, %v564
  %v602 = vsel %vm197, %v598, %v570
  %v603 = vsel %vm197, %v599, %v571
  %v604 = vsel %vm197, %v600, %v572
  %v605 = vsel %vm197, %v601, %v573
  %v606 = vpack.c.bf16 %v520, %v602
  %v607 = vpack.c.bf16 %v521, %v603
  %v608 = vpack.c.bf16 %v522, %v604
  %v609 = vpack.c.bf16 %v527, %v605
  %v611 = vand.u32 %v606, %v216
  %v614 = vand.u32 %v607, %v216
  %v617 = vand.u32 %v608, %v216
  %v620 = vand.u32 %v609, %v216
  %622 = vmatpush.bf16.msra.mxu0 0
  %623 = vmatpush.bf16.msra.mxu0 0
  %624 = vmatpush.bf16.msra.mxu0 0
  %625 = vmatpush.bf16.msra.mxu0 0
  %626 = vmatpush.bf16.msra.mxu0 0
  %627 = vmatpush.bf16.msra.mxu0 0
  %628 = vmatpush.bf16.msra.mxu0 0
  %629 = vmatpush.bf16.msra.mxu0 %v611
  %630 = vmatmul.bf16.gmra.mxu0 %v213
  %v631 = vpop.f32.mrf.mxu0
  %v632 = vadd.f32 0.0, %v631
  %v633 = vpop.f32.mrf.mxu0
  %v634 = vadd.f32 0.0, %v633
  %635 = vdwg.mxu0
  %636 = vmatpush.bf16.msra.mxu0 0
  %637 = vmatpush.bf16.msra.mxu0 0
  %638 = vmatpush.bf16.msra.mxu0 0
  %639 = vmatpush.bf16.msra.mxu0 0
  %640 = vmatpush.bf16.msra.mxu0 0
  %641 = vmatpush.bf16.msra.mxu0 0
  %642 = vmatpush.bf16.msra.mxu0 0
  %643 = vmatpush.bf16.msra.mxu0 %v614
  %644 = vmatmul.bf16.gmra.mxu0 %v213
  %v645 = vpop.f32.mrf.mxu0
  %v646 = vadd.f32 0.0, %v645
  %v647 = vpop.f32.mrf.mxu0
  %v648 = vadd.f32 0.0, %v647
  %649 = vdwg.mxu0
  %650 = vmatpush.bf16.msra.mxu0 0
  %651 = vmatpush.bf16.msra.mxu0 0
  %652 = vmatpush.bf16.msra.mxu0 0
  %653 = vmatpush.bf16.msra.mxu0 0
  %654 = vmatpush.bf16.msra.mxu0 0
  %655 = vmatpush.bf16.msra.mxu0 0
  %656 = vmatpush.bf16.msra.mxu0 0
  %657 = vmatpush.bf16.msra.mxu0 %v617
  %658 = vmatmul.bf16.gmra.mxu0 %v213
  %v659 = vpop.f32.mrf.mxu0
  %v660 = vadd.f32 0.0, %v659
  %v661 = vpop.f32.mrf.mxu0
  %v662 = vadd.f32 0.0, %v661
  %663 = vdwg.mxu0
  %664 = vmatpush.bf16.msra.mxu0 0
  %665 = vmatpush.bf16.msra.mxu0 0
  %666 = vmatpush.bf16.msra.mxu0 0
  %667 = vmatpush.bf16.msra.mxu0 0
  %668 = vmatpush.bf16.msra.mxu0 0
  %669 = vmatpush.bf16.msra.mxu0 0
  %670 = vmatpush.bf16.msra.mxu0 0
  %671 = vmatpush.bf16.msra.mxu0 %v620
  %672 = vmatmul.bf16.gmra.mxu0 %v213
  %v673 = vpop.f32.mrf.mxu0
  %v674 = vadd.f32 0.0, %v673
  %v675 = vpop.f32.mrf.mxu0
  %v676 = vadd.f32 0.0, %v675
  %677 = vdwg.mxu0
  %678 = vrot.lane.b32.xlu0 %v132, 112
  %v679 = vpop.permute.xlu0 %678
  %680 = vrot.lane.b32.xlu0 %v133, 112
  %v681 = vpop.permute.xlu0 %680
  %682 = vrot.lane.b32.xlu0 %v134, 112
  %v683 = vpop.permute.xlu0 %682
  %684 = vrot.lane.b32.xlu0 %v135, 112
  %v685 = vpop.permute.xlu0 %684
  %v686 = vsel %vm101, %v679, %v681
  %v687 = vsel %vm101, %v681, %v683
  %v688 = vsel %vm101, %v683, %v685
  %v693 = vsel %vm101, %v685, 0.0
  %v694 = vrot.slane %v56, 7
  %v695 = vrot.slane %v57, 7
  %v696 = vrot.slane %v58, 7
  %v697 = vrot.slane %v60, 7
  %v702 = vrot.slane %v306, 6
  %v703 = vrot.slane %v307, 6
  %v704 = vrot.slane %v308, 6
  %v705 = vrot.slane %v310, 6
  %v710 = vrot.slane %v88, 5
  %v711 = vrot.slane %v89, 5
  %v712 = vrot.slane %v90, 5
  %v713 = vrot.slane %v92, 5
  %v718 = vrot.slane %v102, 4
  %v719 = vrot.slane %v103, 4
  %v720 = vrot.slane %v104, 4
  %v721 = vrot.slane %v109, 4
  %v727 = vrot.slane %v319, 3
  %v728 = vrot.slane %v320, 3
  %v729 = vrot.slane %v321, 3
  %v730 = vrot.slane %v326, 3
  %v735 = vrot.slane %v507, 2
  %v736 = vrot.slane %v508, 2
  %v737 = vrot.slane %v509, 2
  %v738 = vrot.slane %v511, 2
  %v744 = vrot.slane %v520, 1
  %v745 = vrot.slane %v521, 1
  %v746 = vrot.slane %v522, 1
  %v747 = vrot.slane %v527, 1
  %v752 = vsel %vm167, %v132, %v694
  %v753 = vsel %vm167, %v133, %v695
  %v754 = vsel %vm167, %v134, %v696
  %v755 = vsel %vm167, %v135, %v697
  %v756 = vsel %vm172, %v752, %v702
  %v757 = vsel %vm172, %v753, %v703
  %v758 = vsel %vm172, %v754, %v704
  %v759 = vsel %vm172, %v755, %v705
  %v760 = vsel %vm177, %v756, %v710
  %v761 = vsel %vm177, %v757, %v711
  %v762 = vsel %vm177, %v758, %v712
  %v763 = vsel %vm177, %v759, %v713
  %v764 = vsel %vm182, %v760, %v718
  %v765 = vsel %vm182, %v761, %v719
  %v766 = vsel %vm182, %v762, %v720
  %v767 = vsel %vm182, %v763, %v721
  %v768 = vsel %vm187, %v764, %v727
  %v769 = vsel %vm187, %v765, %v728
  %v770 = vsel %vm187, %v766, %v729
  %v771 = vsel %vm187, %v767, %v730
  %v772 = vsel %vm192, %v768, %v735
  %v773 = vsel %vm192, %v769, %v736
  %v774 = vsel %vm192, %v770, %v737
  %v775 = vsel %vm192, %v771, %v738
  %v776 = vsel %vm197, %v772, %v744
  %v777 = vsel %vm197, %v773, %v745
  %v778 = vsel %vm197, %v774, %v746
  %v779 = vsel %vm197, %v775, %v747
  %v780 = vpack.c.bf16 %v686, %v776
  %v781 = vpack.c.bf16 %v687, %v777
  %v782 = vpack.c.bf16 %v688, %v778
  %v783 = vpack.c.bf16 %v693, %v779
  %v785 = vand.u32 %v780, %v216
  %v788 = vand.u32 %v781, %v216
  %v791 = vand.u32 %v782, %v216
  %v794 = vand.u32 %v783, %v216
  %796 = vmatpush.bf16.msra.mxu0 0
  %797 = vmatpush.bf16.msra.mxu0 0
  %798 = vmatpush.bf16.msra.mxu0 0
  %799 = vmatpush.bf16.msra.mxu0 0
  %800 = vmatpush.bf16.msra.mxu0 0
  %801 = vmatpush.bf16.msra.mxu0 0
  %802 = vmatpush.bf16.msra.mxu0 0
  %803 = vmatpush.bf16.msra.mxu0 %v785
  %804 = vmatmul.bf16.gmra.mxu0 %v213
  %v805 = vpop.f32.mrf.mxu0
  %v806 = vadd.f32 0.0, %v805
  %v807 = vpop.f32.mrf.mxu0
  %v808 = vadd.f32 0.0, %v807
  %809 = vdwg.mxu0
  %810 = vmatpush.bf16.msra.mxu0 0
  %811 = vmatpush.bf16.msra.mxu0 0
  %812 = vmatpush.bf16.msra.mxu0 0
  %813 = vmatpush.bf16.msra.mxu0 0
  %814 = vmatpush.bf16.msra.mxu0 0
  %815 = vmatpush.bf16.msra.mxu0 0
  %816 = vmatpush.bf16.msra.mxu0 0
  %817 = vmatpush.bf16.msra.mxu0 %v788
  %818 = vmatmul.bf16.gmra.mxu0 %v213
  %v819 = vpop.f32.mrf.mxu0
  %v820 = vadd.f32 0.0, %v819
  %v821 = vpop.f32.mrf.mxu0
  %v822 = vadd.f32 0.0, %v821
  %823 = vdwg.mxu0
  %824 = vmatpush.bf16.msra.mxu0 0
  %825 = vmatpush.bf16.msra.mxu0 0
  %826 = vmatpush.bf16.msra.mxu0 0
  %827 = vmatpush.bf16.msra.mxu0 0
  %828 = vmatpush.bf16.msra.mxu0 0
  %829 = vmatpush.bf16.msra.mxu0 0
  %830 = vmatpush.bf16.msra.mxu0 0
  %831 = vmatpush.bf16.msra.mxu0 %v791
  %832 = vmatmul.bf16.gmra.mxu0 %v213
  %v833 = vpop.f32.mrf.mxu0
  %v834 = vadd.f32 0.0, %v833
  %v835 = vpop.f32.mrf.mxu0
  %v836 = vadd.f32 0.0, %v835
  %837 = vdwg.mxu0
  %838 = vmatpush.bf16.msra.mxu0 0
  %839 = vmatpush.bf16.msra.mxu0 0
  %840 = vmatpush.bf16.msra.mxu0 0
  %841 = vmatpush.bf16.msra.mxu0 0
  %842 = vmatpush.bf16.msra.mxu0 0
  %843 = vmatpush.bf16.msra.mxu0 0
  %844 = vmatpush.bf16.msra.mxu0 0
  %845 = vmatpush.bf16.msra.mxu0 %v794
  %846 = vmatmul.bf16.gmra.mxu0 %v213
  %v847 = vpop.f32.mrf.mxu0
  %v848 = vadd.f32 0.0, %v847
  %v849 = vpop.f32.mrf.mxu0
  %v850 = vadd.f32 0.0, %v849
  %851 = vdwg.mxu0
  %v852 = vmax.f32 %v632, %v806
  %v853 = vmax.f32 %v646, %v820
  %v854 = vmax.f32 %v660, %v834
  %v855 = vmax.f32 %v674, %v848
  %v856 = vmax.f32 %v634, %v808
  %v857 = vmax.f32 %v648, %v822
  %v858 = vmax.f32 %v662, %v836
  %v859 = vmax.f32 %v676, %v850
  %v860 = vmax.f32 %v478, %v852
  %v861 = vmax.f32 %v479, %v853
  %v862 = vmax.f32 %v480, %v854
  %v863 = vmax.f32 %v481, %v855
  %v864 = vmax.f32 %v482, %v856
  %v865 = vmax.f32 %v483, %v857
  %v866 = vmax.f32 %v484, %v858
  %v867 = vmax.f32 %v485, %v859
  %v868 = vld [vmem:[%s2] sm:$0xff]
  %v869 = vld [vmem:[%s2 + $0x8] sm:$0x3]
  %871 = vset.pattern.permute.xlu0 0
  %872 = vperm.xlu0 %871, %v868
  %v873 = vpop.permute.xlu0 %872
  %876 = vset.pattern.permute.xlu0 0
  %877 = vperm.xlu0 %876, %v869
  %v878 = vpop.permute.xlu0 %877
  %v880 = vadd.f32 %v860, %v873
  %v881 = vadd.f32 %v861, %v873
  %v882 = vadd.f32 %v862, %v873
  %v883 = vadd.f32 %v863, %v873
  %v884 = vadd.f32 %v864, %v878
  %v885 = vadd.f32 %v865, %v878
  %v886 = vadd.f32 %v866, %v878
  %v887 = vadd.f32 %v867, %v878
  %v888 = vmax.f32 %v880, 0.0
  %v889 = vmax.f32 %v881, 0.0
  %v890 = vmax.f32 %v882, 0.0
  %v891 = vmax.f32 %v883, 0.0
  %v892 = vmax.f32 %v884, 0.0
  %v893 = vmax.f32 %v885, 0.0
  %v894 = vmax.f32 %v886, 0.0
  %v895 = vmax.f32 %v887, 0.0
  %896 = vst [vmem:[%s3] sm:$0xff] %v888
  %897 = vst [vmem:[%s3 + $0x8] sm:$0xff] %v889
  %898 = vst [vmem:[%s3 + $0x10] sm:$0xff] %v890
  %899 = vst [vmem:[%s3 + $0x18] sm:$0xff] %v891
  %900 = vst [vmem:[%s3 + $0x20] sm:$0x3] %v892
  %901 = vst [vmem:[%s3 + $0x28] sm:$0x3] %v893
  %902 = vst [vmem:[%s3 + $0x30] sm:$0x3] %v894
  %903 = vst [vmem:[%s3 + $0x38] sm:$0x3] %v895
  // Predicated region
  $region14: #{net_with_stn_forward.7} parent=0 // pred_check
    _
  $region15: #{net_with_stn_forward.7} parent=0 // pred_check_branch
    %905 = sbr.rel (0) target = $region17
  $region16: #{net_with_stn_forward.7} parent=0 // pred_region
    _
  $region17: #{net_with_stn_forward.7} parent=0 // pred_fallthru
    _
  // Predicated region
  $region18: #{net_with_stn_forward.7} parent=0 // pred_check
    _
  $region19: #{net_with_stn_forward.7} parent=0 // pred_check_branch
    %907 = sbr.rel (0) target = $region21
  $region20: #{net_with_stn_forward.7} parent=0 // pred_region
    _
  $region21: #{net_with_stn_forward.7} parent=0 // pred_fallthru
    _

// kernel: net_with_stn_forward.8
$region0: #{net_with_stn_forward.8}
  #allocation0 [shape = 'u32[]', space=smem, size = 0x4, offset = 0x4, fixed_abs, tag = 'smem constant byte address 0x4 - core index']
  #allocation1 [shape = 'u32[72,128]{1,0:T(1,128)}', space=vmem, size = 0x9000, scoped, tag = 'internal scratch']
  %s0 = inlined_call_operand.vmem [shape: f32[2,2,10,256], index: 0, kind: input, shape index: {}]
  %s1 = inlined_call_operand.vmem [shape: bf16[20,90], index: 1, kind: input, shape index: {}]
  %s2 = inlined_call_operand.vmem [shape: f32[20,1], index: 2, kind: input, shape index: {}]
  %s3 = inlined_call_operand.vmem [shape: f32[20,256], index: 3, kind: output, shape index: {}]
  %s4 = sld [smem:[#allocation0]]
  $region22: #{net_with_stn_forward.8} parent=0
    _
  %s6 = ssub.s32 1, %s4
  %s7 = scalar_select 0, %s6, %s4
  // Predicated region
  $region2: #{net_with_stn_forward.8} parent=0 // pred_check
    _
  $region3: #{net_with_stn_forward.8} parent=0 // pred_check_branch
    %9 = sbr.rel (0) target = $region5
  $region4: #{net_with_stn_forward.8} parent=0 // pred_region
    _
  $region5: #{net_with_stn_forward.8} parent=0 // pred_fallthru
    _
  // Predicated region
  $region6: #{net_with_stn_forward.8} parent=0 // pred_check
    _
  $region7: #{net_with_stn_forward.8} parent=0 // pred_check_branch
    %11 = sbr.rel (0) target = $region9
  $region8: #{net_with_stn_forward.8} parent=0 // pred_region
    _
  $region9: #{net_with_stn_forward.8} parent=0 // pred_fallthru
    _
  // Predicated region
  $region10: #{net_with_stn_forward.8} parent=0 // pred_check
    _
  $region11: #{net_with_stn_forward.8} parent=0 // pred_check_branch
    %13 = sbr.rel (0) target = $region13
  $region12: #{net_with_stn_forward.8} parent=0 // pred_region
    _
  $region13: #{net_with_stn_forward.8} parent=0 // pred_fallthru
    _
  %v15 = vld [vmem:[%s1] sm:$0xf]
  %v16 = vld [vmem:[%s1 + $0x4] sm:$0xf]
  %v17 = vld [vmem:[%s1 + $0x8] sm:$0x3]
  %v18 = vld [vmem:[%s0] sm:$0xff]
  %v19 = vld [vmem:[%s0 + $0x8] sm:$0xff]
  %v20 = vld [vmem:[%s0 + $0x10] sm:$0x3]
  %v21 = vld [vmem:[%s0 + $0x18] sm:$0x3]
  %s22 = scalar_lea.vmem %s0, 32
  %v23 = vld [vmem:[%s22] sm:$0xff]
  %v24 = vld [vmem:[%s22 + $0x8] sm:$0xff]
  %v25 = vld [vmem:[%s22 + $0x10] sm:$0x3]
  %v26 = vld [vmem:[%s22 + $0x18] sm:$0x3]
  %s27 = scalar_lea.vmem %s0, 64
  %v28 = vld [vmem:[%s27] sm:$0xff]
  %v29 = vld [vmem:[%s27 + $0x8] sm:$0xff]
  %v30 = vld [vmem:[%s27 + $0x10] sm:$0x3]
  %v31 = vld [vmem:[%s27 + $0x18] sm:$0x3]
  %s32 = scalar_lea.vmem %s0, 96
  %v33 = vld [vmem:[%s32] sm:$0xff]
  %v34 = vld [vmem:[%s32 + $0x8] sm:$0xff]
  %v35 = vld [vmem:[%s32 + $0x10] sm:$0x3]
  %v36 = vld [vmem:[%s32 + $0x18] sm:$0x3]
  %41 = vrot.lane.b32.xlu0 %v18, 127
  %v42 = vpop.permute.xlu0 %41
  %43 = vrot.lane.b32.xlu0 %v19, 127
  %v44 = vpop.permute.xlu0 %43
  %45 = vrot.lane.b32.xlu0 %v20, 127
  %v46 = vpop.permute.xlu0 %45
  %47 = vrot.lane.b32.xlu0 %v21, 127
  %v48 = vpop.permute.xlu0 %47
  %vm49 = vcmask 1039360
  %v50 = vsel %vm49, %v42, %v44
  %v51 = vsel %vm49, %v46, %v48
  %v54 = vsel %vm49, %v44, 0.0
  %v55 = vsel %vm49, %v48, 0.0
  %60 = vrot.lane.b32.xlu0 %v28, 127
  %v61 = vpop.permute.xlu0 %60
  %62 = vrot.lane.b32.xlu0 %v29, 127
  %v63 = vpop.permute.xlu0 %62
  %64 = vrot.lane.b32.xlu0 %v30, 127
  %v65 = vpop.permute.xlu0 %64
  %66 = vrot.lane.b32.xlu0 %v31, 127
  %v67 = vpop.permute.xlu0 %66
  %v68 = vsel %vm49, %v61, %v63
  %v69 = vsel %vm49, %v65, %v67
  %v74 = vsel %vm49, %v63, 0.0
  %v75 = vsel %vm49, %v67, 0.0
  %76 = vrot.lane.b32.xlu0 %v18, 120
  %v77 = vpop.permute.xlu0 %76
  %78 = vrot.lane.b32.xlu0 %v19, 120
  %v79 = vpop.permute.xlu0 %78
  %80 = vrot.lane.b32.xlu0 %v20, 120
  %v81 = vpop.permute.xlu0 %80
  %82 = vrot.lane.b32.xlu0 %v21, 120
  %v83 = vpop.permute.xlu0 %82
  %vm84 = vcmask 982016
  %v85 = vsel %vm84, %v77, %v79
  %v86 = vsel %vm84, %v81, %v83
  %v89 = vsel %vm84, %v79, 0.0
  %v90 = vsel %vm84, %v83, 0.0
  %95 = vrot.lane.b32.xlu0 %v23, 120
  %v96 = vpop.permute.xlu0 %95
  %97 = vrot.lane.b32.xlu0 %v24, 120
  %v98 = vpop.permute.xlu0 %97
  %99 = vrot.lane.b32.xlu0 %v25, 120
  %v100 = vpop.permute.xlu0 %99
  %101 = vrot.lane.b32.xlu0 %v26, 120
  %v102 = vpop.permute.xlu0 %101
  %v103 = vsel %vm84, %v96, %v98
  %v104 = vsel %vm84, %v100, %v102
  %v109 = vsel %vm84, %v98, 0.0
  %v110 = vsel %vm84, %v102, 0.0
  %111 = vrot.lane.b32.xlu0 %v18, 119
  %v112 = vpop.permute.xlu0 %111
  %113 = vrot.lane.b32.xlu0 %v19, 119
  %v114 = vpop.permute.xlu0 %113
  %115 = vrot.lane.b32.xlu0 %v20, 119
  %v116 = vpop.permute.xlu0 %115
  %117 = vrot.lane.b32.xlu0 %v21, 119
  %v118 = vpop.permute.xlu0 %117
  %vm119 = vcmask 973824
  %v120 = vsel %vm119, %v112, %v114
  %v121 = vsel %vm119, %v116, %v118
  %v126 = vsel %vm119, %v114, 0.0
  %v127 = vsel %vm119, %v118, 0.0
  %vm128 = vcmask 1041408
  %v129 = vrot.slane %v23, 6
  %v130 = vrot.slane %v24, 6
  %v131 = vrot.slane %v25, 6
  %v132 = vsel %vm128, %v129, %v131
  %v133 = vrot.slane %v26, 6
  %v134 = vsel %vm128, %v130, %v133
  %vm141 = vcmask 1043456
  %v142 = vrot.slane %v50, 4
  %v143 = vrot.slane %v54, 4
  %v144 = vrot.slane %v51, 4
  %v145 = vsel %vm141, %v142, %v144
  %v146 = vrot.slane %v55, 4
  %v147 = vsel %vm141, %v143, %v146
  %vm152 = vcmask 1045504
  %v153 = vrot.slane %v28, 2
  %v154 = vrot.slane %v29, 2
  %v155 = vrot.slane %v30, 2
  %v156 = vsel %vm152, %v153, %v155
  %v157 = vrot.slane %v31, 2
  %v158 = vsel %vm152, %v154, %v157
  %v165 = vrot.slane %v68, 6
  %v166 = vrot.slane %v74, 6
  %v167 = vrot.slane %v69, 6
  %v168 = vsel %vm128, %v165, %v167
  %v169 = vrot.slane %v75, 6
  %v170 = vsel %vm128, %v166, %v169
  %v177 = vrot.slane %v85, 4
  %v178 = vrot.slane %v89, 4
  %v179 = vrot.slane %v86, 4
  %v180 = vsel %vm141, %v177, %v179
  %v181 = vrot.slane %v90, 4
  %v182 = vsel %vm141, %v178, %v181
  %v189 = vrot.slane %v103, 2
  %v190 = vrot.slane %v109, 2
  %v191 = vrot.slane %v104, 2
  %v192 = vsel %vm152, %v189, %v191
  %v193 = vrot.slane %v110, 2
  %v194 = vsel %vm152, %v190, %v193
  %v199 = vsel %vm128, %v20, %v129
  %v200 = vsel %vm128, %v21, %v130
  %v201 = vsel %vm141, %v132, %v142
  %v202 = vsel %vm141, %v134, %v143
  %v203 = vsel %vm152, %v145, %v153
  %v204 = vsel %vm152, %v147, %v154
  %v205 = vsel %vm128, %v35, %v165
  %v206 = vsel %vm128, %v36, %v166
  %v207 = vsel %vm141, %v168, %v177
  %v208 = vsel %vm141, %v170, %v178
  %v209 = vsel %vm152, %v180, %v189
  %v210 = vsel %vm152, %v182, %v190
  %v211 = vpack.c.bf16 %v199, %v18
  %v212 = vpack.c.bf16 %v200, %v19
  %v213 = vpack.c.bf16 %v203, %v201
  %v214 = vpack.c.bf16 %v204, %v202
  %v215 = vpack.c.bf16 %v33, %v156
  %v216 = vpack.c.bf16 %v34, %v158
  %v217 = vpack.c.bf16 %v207, %v205
  %v218 = vpack.c.bf16 %v208, %v206
  %v219 = vpack.c.bf16 %v192, %v209
  %v220 = vpack.c.bf16 %v194, %v210
  %v221 = vpack.c.bf16 %v121, %v120
  %v222 = vpack.c.bf16 %v127, %v126
  %v226 = vunpack.c.l.b16 %v15
  %v227 = vunpack.c.l.b16 %v16
  %v228 = vunpack.c.l.b16 %v17
  %v229 = vpack.c.b16 %v227, %v226
  %v230 = vpack.c.b16 %v228, %v228
  %vm231 = vcmask 736256
  %v233 = vsel %vm231, %v229, 0
  %v236 = vsel %vm231, %v230, 0
  %vm238 = vcmask 1044480
  %v240 = vsel %vm238, %v221, 0
  %v243 = vsel %vm238, %v222, 0
  %245 = vmatpush.bf16.msra.mxu0 0
  %246 = vmatpush.bf16.msra.mxu0 0
  %247 = vmatpush.bf16.msra.mxu0 %v240
  %248 = vmatpush.bf16.msra.mxu0 %v219
  %249 = vmatpush.bf16.msra.mxu0 %v217
  %250 = vmatpush.bf16.msra.mxu0 %v215
  %251 = vmatpush.bf16.msra.mxu0 %v213
  %252 = vmatpush.bf16.msra.mxu0 %v211
  %253 = vmatmul.bf16.gmra.mxu0 %v233
  %v254 = vpop.f32.mrf.mxu0
  %v255 = vadd.f32 0.0, %v254
  %v256 = vpop.f32.mrf.mxu0
  %v257 = vadd.f32 0.0, %v256
  %258 = vmatmul.bf16.gmra.mxu0 %v236
  %v259 = vpop.f32.mrf.mxu0
  %v260 = vadd.f32 0.0, %v259
  %v261 = vpop.f32.mrf.mxu0
  %262 = vdwg.mxu0
  %263 = vmatpush.bf16.msra.mxu0 0
  %264 = vmatpush.bf16.msra.mxu0 0
  %265 = vmatpush.bf16.msra.mxu0 %v243
  %266 = vmatpush.bf16.msra.mxu0 %v220
  %267 = vmatpush.bf16.msra.mxu0 %v218
  %268 = vmatpush.bf16.msra.mxu0 %v216
  %269 = vmatpush.bf16.msra.mxu0 %v214
  %270 = vmatpush.bf16.msra.mxu0 %v212
  %271 = vmatmul.bf16.gmra.mxu0 %v233
  %v272 = vpop.f32.mrf.mxu0
  %v273 = vadd.f32 0.0, %v272
  %v274 = vpop.f32.mrf.mxu0
  %v275 = vadd.f32 0.0, %v274
  %276 = vmatmul.bf16.gmra.mxu0 %v236
  %v277 = vpop.f32.mrf.mxu0
  %v278 = vadd.f32 0.0, %v277
  %v279 = vpop.f32.mrf.mxu0
  %280 = vdwg.mxu0
  %281 = vrot.lane.b32.xlu0 %v23, 127
  %v282 = vpop.permute.xlu0 %281
  %283 = vrot.lane.b32.xlu0 %v24, 127
  %v284 = vpop.permute.xlu0 %283
  %285 = vrot.lane.b32.xlu0 %v25, 127
  %v286 = vpop.permute.xlu0 %285
  %287 = vrot.lane.b32.xlu0 %v26, 127
  %v288 = vpop.permute.xlu0 %287
  %v289 = vsel %vm49, %v282, %v284
  %v290 = vsel %vm49, %v286, %v288
  %v293 = vsel %vm49, %v284, 0.0
  %v294 = vsel %vm49, %v288, 0.0
  %299 = vrot.lane.b32.xlu0 %v33, 127
  %v300 = vpop.permute.xlu0 %299
  %301 = vrot.lane.b32.xlu0 %v34, 127
  %v302 = vpop.permute.xlu0 %301
  %303 = vrot.lane.b32.xlu0 %v35, 127
  %v304 = vpop.permute.xlu0 %303
  %305 = vrot.lane.b32.xlu0 %v36, 127
  %v306 = vpop.permute.xlu0 %305
  %v307 = vsel %vm49, %v300, %v302
  %v308 = vsel %vm49, %v304, %v306
  %v311 = vsel %vm49, %v302, 0.0
  %v312 = vsel %vm49, %v306, 0.0
  %313 = vrot.lane.b32.xlu0 %v23, 119
  %v314 = vpop.permute.xlu0 %313
  %315 = vrot.lane.b32.xlu0 %v24, 119
  %v316 = vpop.permute.xlu0 %315
  %317 = vrot.lane.b32.xlu0 %v25, 119
  %v318 = vpop.permute.xlu0 %317
  %319 = vrot.lane.b32.xlu0 %v26, 119
  %v320 = vpop.permute.xlu0 %319
  %v321 = vsel %vm119, %v314, %v316
  %v322 = vsel %vm119, %v318, %v320
  %v327 = vsel %vm119, %v316, 0.0
  %v328 = vsel %vm119, %v320, 0.0
  %v329 = vrot.slane %v50, 6
  %v330 = vrot.slane %v54, 6
  %v331 = vrot.slane %v51, 6
  %v332 = vsel %vm128, %v329, %v331
  %v333 = vrot.slane %v55, 6
  %v334 = vsel %vm128, %v330, %v333
  %v341 = vrot.slane %v289, 4
  %v342 = vrot.slane %v293, 4
  %v343 = vrot.slane %v290, 4
  %v344 = vsel %vm141, %v341, %v343
  %v345 = vrot.slane %v294, 4
  %v346 = vsel %vm141, %v342, %v345
  %v351 = vrot.slane %v33, 2
  %v352 = vrot.slane %v34, 2
  %v353 = vrot.slane %v35, 2
  %v354 = vsel %vm152, %v351, %v353
  %v355 = vrot.slane %v36, 2
  %v356 = vsel %vm152, %v352, %v355
  %v363 = vrot.slane %v307, 6
  %v364 = vrot.slane %v311, 6
  %v365 = vrot.slane %v308, 6
  %v366 = vsel %vm128, %v363, %v365
  %v367 = vrot.slane %v312, 6
  %v368 = vsel %vm128, %v364, %v367
  %v373 = vrot.slane %v103, 4
  %v374 = vrot.slane %v109, 4
  %v375 = vrot.slane %v104, 4
  %v376 = vsel %vm141, %v373, %v375
  %v377 = vrot.slane %v110, 4
  %v378 = vsel %vm141, %v374, %v377
  %v385 = vrot.slane %v120, 2
  %v386 = vrot.slane %v126, 2
  %v387 = vrot.slane %v121, 2
  %v388 = vsel %vm152, %v385, %v387
  %v389 = vrot.slane %v127, 2
  %v390 = vsel %vm152, %v386, %v389
  %v395 = vsel %vm128, %v25, %v329
  %v396 = vsel %vm128, %v26, %v330
  %v397 = vsel %vm141, %v332, %v341
  %v398 = vsel %vm141, %v334, %v342
  %v399 = vsel %vm152, %v344, %v351
  %v400 = vsel %vm152, %v346, %v352
  %v401 = vsel %vm128, %v69, %v363
  %v402 = vsel %vm128, %v75, %v364
  %v403 = vsel %vm141, %v366, %v373
  %v404 = vsel %vm141, %v368, %v374
  %v405 = vsel %vm152, %v376, %v385
  %v406 = vsel %vm152, %v378, %v386
  %v407 = vpack.c.bf16 %v395, %v23
  %v408 = vpack.c.bf16 %v396, %v24
  %v409 = vpack.c.bf16 %v399, %v397
  %v410 = vpack.c.bf16 %v400, %v398
  %v411 = vpack.c.bf16 %v68, %v354
  %v412 = vpack.c.bf16 %v74, %v356
  %v413 = vpack.c.bf16 %v403, %v401
  %v414 = vpack.c.bf16 %v404, %v402
  %v415 = vpack.c.bf16 %v388, %v405
  %v416 = vpack.c.bf16 %v390, %v406
  %v417 = vpack.c.bf16 %v322, %v321
  %v418 = vpack.c.bf16 %v328, %v327
  %v420 = vsel %vm238, %v417, 0
  %v423 = vsel %vm238, %v418, 0
  %425 = vmatpush.bf16.msra.mxu0 0
  %426 = vmatpush.bf16.msra.mxu0 0
  %427 = vmatpush.bf16.msra.mxu0 %v420
  %428 = vmatpush.bf16.msra.mxu0 %v415
  %429 = vmatpush.bf16.msra.mxu0 %v413
  %430 = vmatpush.bf16.msra.mxu0 %v411
  %431 = vmatpush.bf16.msra.mxu0 %v409
  %432 = vmatpush.bf16.msra.mxu0 %v407
  %433 = vmatmul.bf16.gmra.mxu0 %v233
  %v434 = vpop.f32.mrf.mxu0
  %v435 = vadd.f32 0.0, %v434
  %v436 = vpop.f32.mrf.mxu0
  %v437 = vadd.f32 0.0, %v436
  %438 = vmatmul.bf16.gmra.mxu0 %v236
  %v439 = vpop.f32.mrf.mxu0
  %v440 = vadd.f32 0.0, %v439
  %v441 = vpop.f32.mrf.mxu0
  %442 = vdwg.mxu0
  %443 = vmatpush.bf16.msra.mxu0 0
  %444 = vmatpush.bf16.msra.mxu0 0
  %445 = vmatpush.bf16.msra.mxu0 %v423
  %446 = vmatpush.bf16.msra.mxu0 %v416
  %447 = vmatpush.bf16.msra.mxu0 %v414
  %448 = vmatpush.bf16.msra.mxu0 %v412
  %449 = vmatpush.bf16.msra.mxu0 %v410
  %450 = vmatpush.bf16.msra.mxu0 %v408
  %451 = vmatmul.bf16.gmra.mxu0 %v233
  %v452 = vpop.f32.mrf.mxu0
  %v453 = vadd.f32 0.0, %v452
  %v454 = vpop.f32.mrf.mxu0
  %v455 = vadd.f32 0.0, %v454
  %456 = vmatmul.bf16.gmra.mxu0 %v236
  %v457 = vpop.f32.mrf.mxu0
  %v458 = vadd.f32 0.0, %v457
  %v459 = vpop.f32.mrf.mxu0
  %460 = vdwg.mxu0
  %v461 = vmax.f32 %v255, %v435
  %v462 = vmax.f32 %v273, %v453
  %v463 = vmax.f32 %v257, %v437
  %v464 = vmax.f32 %v275, %v455
  %v465 = vmax.f32 %v260, %v440
  %v466 = vmax.f32 %v278, %v458
  %467 = vrot.lane.b32.xlu0 %v28, 120
  %v468 = vpop.permute.xlu0 %467
  %469 = vrot.lane.b32.xlu0 %v29, 120
  %v470 = vpop.permute.xlu0 %469
  %471 = vrot.lane.b32.xlu0 %v30, 120
  %v472 = vpop.permute.xlu0 %471
  %473 = vrot.lane.b32.xlu0 %v31, 120
  %v474 = vpop.permute.xlu0 %473
  %v475 = vsel %vm84, %v468, %v470
  %v476 = vsel %vm84, %v472, %v474
  %v479 = vsel %vm84, %v470, 0.0
  %v480 = vsel %vm84, %v474, 0.0
  %481 = vrot.lane.b32.xlu0 %v33, 120
  %v482 = vpop.permute.xlu0 %481
  %483 = vrot.lane.b32.xlu0 %v34, 120
  %v484 = vpop.permute.xlu0 %483
  %485 = vrot.lane.b32.xlu0 %v35, 120
  %v486 = vpop.permute.xlu0 %485
  %487 = vrot.lane.b32.xlu0 %v36, 120
  %v488 = vpop.permute.xlu0 %487
  %v489 = vsel %vm84, %v482, %v484
  %v490 = vsel %vm84, %v486, %v488
  %v493 = vsel %vm84, %v484, 0.0
  %v494 = vsel %vm84, %v488, 0.0
  %495 = vrot.lane.b32.xlu0 %v28, 119
  %v496 = vpop.permute.xlu0 %495
  %497 = vrot.lane.b32.xlu0 %v29, 119
  %v498 = vpop.permute.xlu0 %497
  %499 = vrot.lane.b32.xlu0 %v30, 119
  %v500 = vpop.permute.xlu0 %499
  %501 = vrot.lane.b32.xlu0 %v31, 119
  %v502 = vpop.permute.xlu0 %501
  %v503 = vsel %vm119, %v496, %v498
  %v504 = vsel %vm119, %v500, %v502
  %v509 = vsel %vm119, %v498, 0.0
  %v510 = vsel %vm119, %v502, 0.0
  %v511 = vrot.slane %v33, 6
  %v512 = vrot.slane %v34, 6
  %v513 = vrot.slane %v35, 6
  %v514 = vsel %vm128, %v511, %v513
  %v515 = vrot.slane %v36, 6
  %v516 = vsel %vm128, %v512, %v515
  %v521 = vrot.slane %v68, 4
  %v522 = vrot.slane %v74, 4
  %v523 = vrot.slane %v69, 4
  %v524 = vsel %vm141, %v521, %v523
  %v525 = vrot.slane %v75, 4
  %v526 = vsel %vm141, %v522, %v525
  %v531 = vrot.slane %v85, 2
  %v532 = vrot.slane %v89, 2
  %v533 = vrot.slane %v86, 2
  %v534 = vsel %vm152, %v531, %v533
  %v535 = vrot.slane %v90, 2
  %v536 = vsel %vm152, %v532, %v535
  %v541 = vrot.slane %v120, 6
  %v542 = vrot.slane %v126, 6
  %v543 = vrot.slane %v121, 6
  %v544 = vsel %vm128, %v541, %v543
  %v545 = vrot.slane %v127, 6
  %v546 = vsel %vm128, %v542, %v545
  %v553 = vrot.slane %v475, 4
  %v554 = vrot.slane %v479, 4
  %v555 = vrot.slane %v476, 4
  %v556 = vsel %vm141, %v553, %v555
  %v557 = vrot.slane %v480, 4
  %v558 = vsel %vm141, %v554, %v557
  %v565 = vrot.slane %v489, 2
  %v566 = vrot.slane %v493, 2
  %v567 = vrot.slane %v490, 2
  %v568 = vsel %vm152, %v565, %v567
  %v569 = vrot.slane %v494, 2
  %v570 = vsel %vm152, %v566, %v569
  %v575 = vsel %vm128, %v30, %v511
  %v576 = vsel %vm128, %v31, %v512
  %v577 = vsel %vm141, %v514, %v521
  %v578 = vsel %vm141, %v516, %v522
  %v579 = vsel %vm152, %v524, %v531
  %v580 = vsel %vm152, %v526, %v532
  %v581 = vsel %vm128, %v104, %v541
  %v582 = vsel %vm128, %v110, %v542
  %v583 = vsel %vm141, %v544, %v553
  %v584 = vsel %vm141, %v546, %v554
  %v585 = vsel %vm152, %v556, %v565
  %v586 = vsel %vm152, %v558, %v566
  %v587 = vpack.c.bf16 %v575, %v28
  %v588 = vpack.c.bf16 %v576, %v29
  %v589 = vpack.c.bf16 %v579, %v577
  %v590 = vpack.c.bf16 %v580, %v578
  %v591 = vpack.c.bf16 %v103, %v534
  %v592 = vpack.c.bf16 %v109, %v536
  %v593 = vpack.c.bf16 %v583, %v581
  %v594 = vpack.c.bf16 %v584, %v582
  %v595 = vpack.c.bf16 %v568, %v585
  %v596 = vpack.c.bf16 %v570, %v586
  %v597 = vpack.c.bf16 %v504, %v503
  %v598 = vpack.c.bf16 %v510, %v509
  %v600 = vsel %vm238, %v597, 0
  %v603 = vsel %vm238, %v598, 0
  %605 = vmatpush.bf16.msra.mxu0 0
  %606 = vmatpush.bf16.msra.mxu0 0
  %607 = vmatpush.bf16.msra.mxu0 %v600
  %608 = vmatpush.bf16.msra.mxu0 %v595
  %609 = vmatpush.bf16.msra.mxu0 %v593
  %610 = vmatpush.bf16.msra.mxu0 %v591
  %611 = vmatpush.bf16.msra.mxu0 %v589
  %612 = vmatpush.bf16.msra.mxu0 %v587
  %613 = vmatmul.bf16.gmra.mxu0 %v233
  %v614 = vpop.f32.mrf.mxu0
  %v615 = vadd.f32 0.0, %v614
  %v616 = vpop.f32.mrf.mxu0
  %v617 = vadd.f32 0.0, %v616
  %618 = vmatmul.bf16.gmra.mxu0 %v236
  %v619 = vpop.f32.mrf.mxu0
  %v620 = vadd.f32 0.0, %v619
  %v621 = vpop.f32.mrf.mxu0
  %622 = vdwg.mxu0
  %623 = vmatpush.bf16.msra.mxu0 0
  %624 = vmatpush.bf16.msra.mxu0 0
  %625 = vmatpush.bf16.msra.mxu0 %v603
  %626 = vmatpush.bf16.msra.mxu0 %v596
  %627 = vmatpush.bf16.msra.mxu0 %v594
  %628 = vmatpush.bf16.msra.mxu0 %v592
  %629 = vmatpush.bf16.msra.mxu0 %v590
  %630 = vmatpush.bf16.msra.mxu0 %v588
  %631 = vmatmul.bf16.gmra.mxu0 %v233
  %v632 = vpop.f32.mrf.mxu0
  %v633 = vadd.f32 0.0, %v632
  %v634 = vpop.f32.mrf.mxu0
  %v635 = vadd.f32 0.0, %v634
  %636 = vmatmul.bf16.gmra.mxu0 %v236
  %v637 = vpop.f32.mrf.mxu0
  %v638 = vadd.f32 0.0, %v637
  %v639 = vpop.f32.mrf.mxu0
  %640 = vdwg.mxu0
  %641 = vrot.lane.b32.xlu0 %v33, 119
  %v642 = vpop.permute.xlu0 %641
  %643 = vrot.lane.b32.xlu0 %v34, 119
  %v644 = vpop.permute.xlu0 %643
  %645 = vrot.lane.b32.xlu0 %v35, 119
  %v646 = vpop.permute.xlu0 %645
  %647 = vrot.lane.b32.xlu0 %v36, 119
  %v648 = vpop.permute.xlu0 %647
  %v649 = vsel %vm119, %v642, %v644
  %v650 = vsel %vm119, %v646, %v648
  %v655 = vsel %vm119, %v644, 0.0
  %v656 = vsel %vm119, %v648, 0.0
  %v657 = vrot.slane %v307, 4
  %v658 = vrot.slane %v311, 4
  %v659 = vrot.slane %v308, 4
  %v660 = vsel %vm141, %v657, %v659
  %v661 = vrot.slane %v312, 4
  %v662 = vsel %vm141, %v658, %v661
  %v669 = vrot.slane %v321, 6
  %v670 = vrot.slane %v327, 6
  %v671 = vrot.slane %v322, 6
  %v672 = vsel %vm128, %v669, %v671
  %v673 = vrot.slane %v328, 6
  %v674 = vsel %vm128, %v670, %v673
  %v679 = vrot.slane %v489, 4
  %v680 = vrot.slane %v493, 4
  %v681 = vrot.slane %v490, 4
  %v682 = vsel %vm141, %v679, %v681
  %v683 = vrot.slane %v494, 4
  %v684 = vsel %vm141, %v680, %v683
  %v691 = vrot.slane %v503, 2
  %v692 = vrot.slane %v509, 2
  %v693 = vrot.slane %v504, 2
  %v694 = vsel %vm152, %v691, %v693
  %v695 = vrot.slane %v510, 2
  %v696 = vsel %vm152, %v692, %v695
  %v701 = vsel %vm141, %v168, %v657
  %v702 = vsel %vm141, %v170, %v658
  %v703 = vsel %vm152, %v660, %v189
  %v704 = vsel %vm152, %v662, %v190
  %v705 = vsel %vm128, %v121, %v669
  %v706 = vsel %vm128, %v127, %v670
  %v707 = vsel %vm141, %v672, %v679
  %v708 = vsel %vm141, %v674, %v680
  %v709 = vsel %vm152, %v682, %v691
  %v710 = vsel %vm152, %v684, %v692
  %v711 = vpack.c.bf16 %v205, %v33
  %v712 = vpack.c.bf16 %v206, %v34
  %v713 = vpack.c.bf16 %v703, %v701
  %v714 = vpack.c.bf16 %v704, %v702
  %v715 = vpack.c.bf16 %v120, %v192
  %v716 = vpack.c.bf16 %v126, %v194
  %v717 = vpack.c.bf16 %v707, %v705
  %v718 = vpack.c.bf16 %v708, %v706
  %v719 = vpack.c.bf16 %v694, %v709
  %v720 = vpack.c.bf16 %v696, %v710
  %v721 = vpack.c.bf16 %v650, %v649
  %v722 = vpack.c.bf16 %v656, %v655
  %v724 = vsel %vm238, %v721, 0
  %v727 = vsel %vm238, %v722, 0
  %729 = vmatpush.bf16.msra.mxu0 0
  %730 = vmatpush.bf16.msra.mxu0 0
  %731 = vmatpush.bf16.msra.mxu0 %v724
  %732 = vmatpush.bf16.msra.mxu0 %v719
  %733 = vmatpush.bf16.msra.mxu0 %v717
  %734 = vmatpush.bf16.msra.mxu0 %v715
  %735 = vmatpush.bf16.msra.mxu0 %v713
  %736 = vmatpush.bf16.msra.mxu0 %v711
  %737 = vmatmul.bf16.gmra.mxu0 %v233
  %v738 = vpop.f32.mrf.mxu0
  %v739 = vadd.f32 0.0, %v738
  %v740 = vpop.f32.mrf.mxu0
  %v741 = vadd.f32 0.0, %v740
  %742 = vmatmul.bf16.gmra.mxu0 %v236
  %v743 = vpop.f32.mrf.mxu0
  %v744 = vadd.f32 0.0, %v743
  %v745 = vpop.f32.mrf.mxu0
  %746 = vdwg.mxu0
  %747 = vmatpush.bf16.msra.mxu0 0
  %748 = vmatpush.bf16.msra.mxu0 0
  %749 = vmatpush.bf16.msra.mxu0 %v727
  %750 = vmatpush.bf16.msra.mxu0 %v720
  %751 = vmatpush.bf16.msra.mxu0 %v718
  %752 = vmatpush.bf16.msra.mxu0 %v716
  %753 = vmatpush.bf16.msra.mxu0 %v714
  %754 = vmatpush.bf16.msra.mxu0 %v712
  %755 = vmatmul.bf16.gmra.mxu0 %v233
  %v756 = vpop.f32.mrf.mxu0
  %v757 = vadd.f32 0.0, %v756
  %v758 = vpop.f32.mrf.mxu0
  %v759 = vadd.f32 0.0, %v758
  %760 = vmatmul.bf16.gmra.mxu0 %v236
  %v761 = vpop.f32.mrf.mxu0
  %v762 = vadd.f32 0.0, %v761
  %v763 = vpop.f32.mrf.mxu0
  %764 = vdwg.mxu0
  %v765 = vmax.f32 %v615, %v739
  %v766 = vmax.f32 %v633, %v757
  %v767 = vmax.f32 %v617, %v741
  %v768 = vmax.f32 %v635, %v759
  %v769 = vmax.f32 %v620, %v744
  %v770 = vmax.f32 %v638, %v762
  %v771 = vmax.f32 %v461, %v765
  %v772 = vmax.f32 %v462, %v766
  %v773 = vmax.f32 %v463, %v767
  %v774 = vmax.f32 %v464, %v768
  %v775 = vmax.f32 %v465, %v769
  %v776 = vmax.f32 %v466, %v770
  %v777 = vld [vmem:[%s2] sm:$0xff]
  %v778 = vld [vmem:[%s2 + $0x8] sm:$0xff]
  %v779 = vld [vmem:[%s2 + $0x10] sm:$0xf]
  %781 = vset.pattern.permute.xlu0 0
  %782 = vperm.xlu0 %781, %v777
  %v783 = vpop.permute.xlu0 %782
  %786 = vset.pattern.permute.xlu0 0
  %787 = vperm.xlu0 %786, %v778
  %v788 = vpop.permute.xlu0 %787
  %791 = vset.pattern.permute.xlu0 0
  %792 = vperm.xlu0 %791, %v779
  %v793 = vpop.permute.xlu0 %792
  %v795 = vadd.f32 %v771, %v783
  %v796 = vadd.f32 %v772, %v783
  %v797 = vadd.f32 %v773, %v788
  %v798 = vadd.f32 %v774, %v788
  %v799 = vadd.f32 %v775, %v793
  %v800 = vadd.f32 %v776, %v793
  %v801 = vmax.f32 %v795, 0.0
  %v802 = vmax.f32 %v796, 0.0
  %v803 = vmax.f32 %v797, 0.0
  %v804 = vmax.f32 %v798, 0.0
  %v805 = vmax.f32 %v799, 0.0
  %v806 = vmax.f32 %v800, 0.0
  %807 = vst [vmem:[%s3] sm:$0xff] %v801
  %808 = vst [vmem:[%s3 + $0x8] sm:$0xff] %v802
  %809 = vst [vmem:[%s3 + $0x10] sm:$0xff] %v803
  %810 = vst [vmem:[%s3 + $0x18] sm:$0xff] %v804
  %811 = vst [vmem:[%s3 + $0x20] sm:$0xf] %v805
  %812 = vst [vmem:[%s3 + $0x28] sm:$0xf] %v806
  // Predicated region
  $region14: #{net_with_stn_forward.8} parent=0 // pred_check
    _
  $region15: #{net_with_stn_forward.8} parent=0 // pred_check_branch
    %814 = sbr.rel (0) target = $region17
  $region16: #{net_with_stn_forward.8} parent=0 // pred_region
    _
  $region17: #{net_with_stn_forward.8} parent=0 // pred_fallthru
    _
  // Predicated region
  $region18: #{net_with_stn_forward.8} parent=0 // pred_check
    _
  $region19: #{net_with_stn_forward.8} parent=0 // pred_check_branch
    %816 = sbr.rel (0) target = $region21
  $region20: #{net_with_stn_forward.8} parent=0 // pred_region
    _
  $region21: #{net_with_stn_forward.8} parent=0 // pred_fallthru
    _

// kernel: tile.8
$region0: #{tile.8}
  #allocation0 [shape = 's32[1]{0}', space=sflag, size = 0x4, scoped, tag = 'scoped memory for tile.8']
  %s0 = inlined_call_operand.vmem [shape: f32[28], index: 0, kind: input, shape index: {}]
  %s1 = inlined_call_operand.vmem [shape: f32[28,28], index: 1, kind: output, shape index: {}]
  // Predicated region
  $region2: #{tile.8} parent=0 // pred_check
    _
  $region3: #{tile.8} parent=0 // pred_check_branch
    %3 = sbr.rel (0) target = $region5
  $region4: #{tile.8} parent=0 // pred_region
    _
  $region5: #{tile.8} parent=0 // pred_fallthru
    _
  %v4 = vld [vmem:[%s0] ss:$0 sm:$0xff]
  %5 = vst [vmem:[%s1] sm:$0xff] %v4
  %s6 = scalar_lea.vmem %s1, 8
  %7 = vst [vmem:[%s6] sm:$0xff] %v4
  %s8 = scalar_lea.vmem %s1, 16
  %9 = vst [vmem:[%s8] sm:$0xff] %v4
  %s10 = scalar_lea.vmem %s1, 24
  %11 = vst [vmem:[%s10] sm:$0xff] %v4

// kernel: net_with_stn_forward.9
$region0: #{net_with_stn_forward.9}
  #allocation0 [shape = 'u32[]', space=smem, size = 0x4, offset = 0x4, fixed_abs, tag = 'smem constant byte address 0x4 - core index']
  #allocation1 [shape = 'u32[72,128]{1,0:T(1,128)}', space=vmem, size = 0x9000, scoped, tag = 'internal scratch']
  %s0 = inlined_call_operand.vmem [shape: f32[2,980], index: 0, kind: input, shape index: {}]
  %s1 = inlined_call_operand.vmem [shape: f32[980,100], index: 1, kind: input, shape index: {}]
  %s2 = inlined_call_operand.vmem [shape: f32[1,100], index: 2, kind: input, shape index: {}]
  %s3 = inlined_call_operand.vmem [shape: f32[100,6], index: 3, kind: input, shape index: {}]
  %s4 = inlined_call_operand.vmem [shape: f32[1,6], index: 4, kind: input, shape index: {}]
  %s5 = inlined_call_operand.vmem [shape: f32[2,6], index: 5, kind: output, shape index: {}]
  %s6 = sld [smem:[#allocation0]]
  $region30: #{net_with_stn_forward.9} parent=0
    _
  %s8 = ssub.s32 1, %s6
  %s9 = scalar_select 0, %s8, %s6
  // Predicated region
  $region2: #{net_with_stn_forward.9} parent=0 // pred_check
    _
  $region3: #{net_with_stn_forward.9} parent=0 // pred_check_branch
    %11 = sbr.rel (0) target = $region5
  $region4: #{net_with_stn_forward.9} parent=0 // pred_region
    _
  $region5: #{net_with_stn_forward.9} parent=0 // pred_fallthru
    _
  // Predicated region
  $region6: #{net_with_stn_forward.9} parent=0 // pred_check
    _
  $region7: #{net_with_stn_forward.9} parent=0 // pred_check_branch
    %13 = sbr.rel (0) target = $region9
  $region8: #{net_with_stn_forward.9} parent=0 // pred_region
    _
  $region9: #{net_with_stn_forward.9} parent=0 // pred_fallthru
    _
  // Predicated region
  $region10: #{net_with_stn_forward.9} parent=0 // pred_check
    _
  $region11: #{net_with_stn_forward.9} parent=0 // pred_check_branch
    %15 = sbr.rel (0) target = $region13
  $region12: #{net_with_stn_forward.9} parent=0 // pred_region
    _
  $region13: #{net_with_stn_forward.9} parent=0 // pred_fallthru
    _
  // Predicated region
  $region14: #{net_with_stn_forward.9} parent=0 // pred_check
    _
  $region15: #{net_with_stn_forward.9} parent=0 // pred_check_branch
    %17 = sbr.rel (0) target = $region17
  $region16: #{net_with_stn_forward.9} parent=0 // pred_region
    _
  $region17: #{net_with_stn_forward.9} parent=0 // pred_fallthru
    _
  // Predicated region
  $region18: #{net_with_stn_forward.9} parent=0 // pred_check
    _
  $region19: #{net_with_stn_forward.9} parent=0 // pred_check_branch
    %19 = sbr.rel (0) target = $region21
  $region20: #{net_with_stn_forward.9} parent=0 // pred_region
    _
  $region21: #{net_with_stn_forward.9} parent=0 // pred_fallthru
    _
  %v20 = vld [vmem:[%s0] sm:$0xff]
  %v21 = vld [vmem:[%s0 + $0x8] sm:$0xff]
  %v22 = vld [vmem:[%s1] sm:$0xff]
  %v23 = vld [vmem:[%s1 + $0x8] sm:$0xff]
  %v24 = vld [vmem:[%s1 + $0x10] sm:$0xff]
  %v25 = vld [vmem:[%s1 + $0x18] sm:$0xff]
  %v26 = vld [vmem:[%s1 + $0x20] sm:$0xff]
  %v27 = vld [vmem:[%s1 + $0x28] sm:$0xff]
  %v28 = vld [vmem:[%s1 + $0x30] sm:$0xff]
  %v29 = vld [vmem:[%s1 + $0x38] sm:$0xff]
  %v30 = vld [vmem:[%s1 + $0x40] sm:$0xff]
  %v31 = vld [vmem:[%s1 + $0x48] sm:$0xff]
  %v32 = vld [vmem:[%s1 + $0x50] sm:$0xff]
  %v33 = vld [vmem:[%s1 + $0x58] sm:$0xff]
  %v34 = vld [vmem:[%s1 + $0x60] sm:$0xff]
  %v35 = vld [vmem:[%s1 + $0x68] sm:$0xff]
  %v36 = vld [vmem:[%s1 + $0x70] sm:$0xff]
  %v37 = vld [vmem:[%s1 + $0x78] sm:$0xff]
  %v38 = vld [vmem:[%s1 + $0x80] sm:$0xff]
  %v39 = vld [vmem:[%s1 + $0x88] sm:$0xff]
  %v40 = vld [vmem:[%s1 + $0x90] sm:$0xff]
  %v41 = vld [vmem:[%s1 + $0x98] sm:$0xff]
  %v42 = vld [vmem:[%s1 + $0xa0] sm:$0xff]
  %v43 = vld [vmem:[%s1 + $0xa8] sm:$0xff]
  %v44 = vld [vmem:[%s1 + $0xb0] sm:$0xff]
  %v45 = vld [vmem:[%s1 + $0xb8] sm:$0xff]
  %v46 = vld [vmem:[%s1 + $0xc0] sm:$0xff]
  %v47 = vld [vmem:[%s1 + $0xc8] sm:$0xff]
  %v48 = vld [vmem:[%s1 + $0xd0] sm:$0xff]
  %v49 = vld [vmem:[%s1 + $0xd8] sm:$0xff]
  %v50 = vld [vmem:[%s1 + $0xe0] sm:$0xff]
  %v51 = vld [vmem:[%s1 + $0xe8] sm:$0xff]
  %v52 = vld [vmem:[%s1 + $0xf0] sm:$0xff]
  %v53 = vld [vmem:[%s1 + $0xf8] sm:$0xff]
  %v54 = vld [vmem:[%s1 + $0x100] sm:$0xff]
  %v55 = vld [vmem:[%s1 + $0x108] sm:$0xff]
  %v56 = vld [vmem:[%s1 + $0x110] sm:$0xff]
  %v57 = vld [vmem:[%s1 + $0x118] sm:$0xff]
  %v58 = vld [vmem:[%s1 + $0x120] sm:$0xff]
  %v59 = vld [vmem:[%s1 + $0x128] sm:$0xff]
  %v60 = vld [vmem:[%s1 + $0x130] sm:$0xff]
  %v61 = vld [vmem:[%s1 + $0x138] sm:$0xff]
  %v62 = vld [vmem:[%s1 + $0x140] sm:$0xff]
  %v63 = vld [vmem:[%s1 + $0x148] sm:$0xff]
  %v64 = vld [vmem:[%s1 + $0x150] sm:$0xff]
  %v65 = vld [vmem:[%s1 + $0x158] sm:$0xff]
  %v66 = vld [vmem:[%s1 + $0x160] sm:$0xff]
  %v67 = vld [vmem:[%s1 + $0x168] sm:$0xff]
  %v68 = vld [vmem:[%s1 + $0x170] sm:$0xff]
  %v69 = vld [vmem:[%s1 + $0x178] sm:$0xff]
  %v70 = vld [vmem:[%s1 + $0x180] sm:$0xff]
  %v71 = vld [vmem:[%s1 + $0x188] sm:$0xff]
  %v72 = vld [vmem:[%s1 + $0x190] sm:$0xff]
  %v73 = vld [vmem:[%s1 + $0x198] sm:$0xff]
  %v74 = vld [vmem:[%s1 + $0x1a0] sm:$0xff]
  %v75 = vld [vmem:[%s1 + $0x1a8] sm:$0xff]
  %v76 = vld [vmem:[%s1 + $0x1b0] sm:$0xff]
  %v77 = vld [vmem:[%s1 + $0x1b8] sm:$0xff]
  %v78 = vld [vmem:[%s1 + $0x1c0] sm:$0xff]
  %v79 = vld [vmem:[%s1 + $0x1c8] sm:$0xff]
  %v80 = vld [vmem:[%s1 + $0x1d0] sm:$0xff]
  %v81 = vld [vmem:[%s1 + $0x1d8] sm:$0xff]
  %v82 = vld [vmem:[%s1 + $0x1e0] sm:$0xff]
  %v83 = vld [vmem:[%s1 + $0x1e8] sm:$0xff]
  %v84 = vld [vmem:[%s1 + $0x1f0] sm:$0xff]
  %v85 = vld [vmem:[%s1 + $0x1f8] sm:$0xff]
  %v86 = vld [vmem:[%s1 + $0x200] sm:$0xff]
  %v87 = vld [vmem:[%s1 + $0x208] sm:$0xff]
  %v88 = vld [vmem:[%s1 + $0x210] sm:$0xff]
  %v89 = vld [vmem:[%s1 + $0x218] sm:$0xff]
  %v90 = vld [vmem:[%s1 + $0x220] sm:$0xff]
  %v91 = vld [vmem:[%s1 + $0x228] sm:$0xff]
  %v92 = vld [vmem:[%s1 + $0x230] sm:$0xff]
  %v93 = vld [vmem:[%s1 + $0x238] sm:$0xff]
  %v94 = vld [vmem:[%s1 + $0x240] sm:$0xff]
  %v95 = vld [vmem:[%s1 + $0x248] sm:$0xff]
  %v96 = vld [vmem:[%s1 + $0x250] sm:$0xff]
  %v97 = vld [vmem:[%s1 + $0x258] sm:$0xff]
  %v98 = vld [vmem:[%s1 + $0x260] sm:$0xff]
  %v99 = vld [vmem:[%s1 + $0x268] sm:$0xff]
  %v100 = vld [vmem:[%s1 + $0x270] sm:$0xff]
  %v101 = vld [vmem:[%s1 + $0x278] sm:$0xff]
  %v102 = vld [vmem:[%s1 + $0x280] sm:$0xff]
  %v103 = vld [vmem:[%s1 + $0x288] sm:$0xff]
  %v104 = vld [vmem:[%s1 + $0x290] sm:$0xff]
  %v105 = vld [vmem:[%s1 + $0x298] sm:$0xff]
  %v106 = vld [vmem:[%s1 + $0x2a0] sm:$0xff]
  %v107 = vld [vmem:[%s1 + $0x2a8] sm:$0xff]
  %v108 = vld [vmem:[%s1 + $0x2b0] sm:$0xff]
  %v109 = vld [vmem:[%s1 + $0x2b8] sm:$0xff]
  %v110 = vld [vmem:[%s1 + $0x2c0] sm:$0xff]
  %v111 = vld [vmem:[%s1 + $0x2c8] sm:$0xff]
  %v112 = vld [vmem:[%s1 + $0x2d0] sm:$0xff]
  %v113 = vld [vmem:[%s1 + $0x2d8] sm:$0xff]
  %v114 = vld [vmem:[%s1 + $0x2e0] sm:$0xff]
  %v115 = vld [vmem:[%s1 + $0x2e8] sm:$0xff]
  %v116 = vld [vmem:[%s1 + $0x2f0] sm:$0xff]
  %v117 = vld [vmem:[%s1 + $0x2f8] sm:$0xff]
  %v118 = vld [vmem:[%s1 + $0x300] sm:$0xff]
  %v119 = vld [vmem:[%s1 + $0x308] sm:$0xff]
  %v120 = vld [vmem:[%s1 + $0x310] sm:$0xff]
  %v121 = vld [vmem:[%s1 + $0x318] sm:$0xff]
  %v122 = vld [vmem:[%s1 + $0x320] sm:$0xff]
  %v123 = vld [vmem:[%s1 + $0x328] sm:$0xff]
  %v124 = vld [vmem:[%s1 + $0x330] sm:$0xff]
  %v125 = vld [vmem:[%s1 + $0x338] sm:$0xff]
  %v126 = vld [vmem:[%s1 + $0x340] sm:$0xff]
  %v127 = vld [vmem:[%s1 + $0x348] sm:$0xff]
  %v128 = vld [vmem:[%s1 + $0x350] sm:$0xff]
  %v129 = vld [vmem:[%s1 + $0x358] sm:$0xff]
  %v130 = vld [vmem:[%s1 + $0x360] sm:$0xff]
  %v131 = vld [vmem:[%s1 + $0x368] sm:$0xff]
  %v132 = vld [vmem:[%s1 + $0x370] sm:$0xff]
  %v133 = vld [vmem:[%s1 + $0x378] sm:$0xff]
  %v134 = vld [vmem:[%s1 + $0x380] sm:$0xff]
  %v135 = vld [vmem:[%s1 + $0x388] sm:$0xff]
  %v136 = vld [vmem:[%s1 + $0x390] sm:$0xff]
  %v137 = vld [vmem:[%s1 + $0x398] sm:$0xff]
  %v138 = vld [vmem:[%s1 + $0x3a0] sm:$0xff]
  %v139 = vld [vmem:[%s1 + $0x3a8] sm:$0xff]
  %v140 = vld [vmem:[%s1 + $0x3b0] sm:$0xff]
  %v141 = vld [vmem:[%s1 + $0x3b8] sm:$0xff]
  %v142 = vld [vmem:[%s1 + $0x3c0] sm:$0xff]
  %v143 = vld [vmem:[%s1 + $0x3c8] sm:$0xff]
  %v144 = vld [vmem:[%s1 + $0x3d0] sm:$0xf]
  %v145 = vld [vmem:[%s2] sm:$0x1]
  %v147 = vperm.slane %v145, 0
  %151 = vst [vmem:[#allocation1] ss:$4 sm:$0xff] %v20
  %s152 = scalar_lea.vmem [#allocation1], 32
  %153 = vst [vmem:[%s152] ss:$4 sm:$0xff] %v21
  %v154 = vld.sshfl [vmem:[#allocation1] sm:$0xff pattern:$0x73625140]
  %v155 = vld.sshfl [vmem:[#allocation1 + $0x8] sm:$0xff pattern:$0x73625140]
  %v156 = vld.sshfl [vmem:[#allocation1 + $0x10] sm:$0xff pattern:$0x73625140]
  %v157 = vld.sshfl [vmem:[#allocation1 + $0x18] sm:$0xff pattern:$0x73625140]
  %v158 = vld.sshfl [vmem:[#allocation1 + $0x20] sm:$0xff pattern:$0x73625140]
  %v159 = vld.sshfl [vmem:[#allocation1 + $0x28] sm:$0xff pattern:$0x73625140]
  %v160 = vld.sshfl [vmem:[#allocation1 + $0x30] sm:$0xff pattern:$0x73625140]
  %v161 = vld.sshfl [vmem:[#allocation1 + $0x38] sm:$0xff pattern:$0x73625140]
  %vm169 = vcmask 687104
  %v170 = vsel %vm169, %v161, 0
  %vm172 = vcmask 1043456
  %v174 = vsel %vm172, %v144, 0
  %176 = vmatpush.msra.mxu0 %v37
  %177 = vmatpush.msra.mxu0 %v36
  %178 = vmatpush.msra.mxu0 %v35
  %179 = vmatpush.msra.mxu0 %v34
  %180 = vmatpush.msra.mxu0 %v33
  %181 = vmatpush.msra.mxu0 %v32
  %182 = vmatpush.msra.mxu0 %v31
  %183 = vmatpush.msra.mxu0 %v30
  %184 = vmatpush.msra.mxu0 %v29
  %185 = vmatpush.msra.mxu0 %v28
  %186 = vmatpush.msra.mxu0 %v27
  %187 = vmatpush.msra.mxu0 %v26
  %188 = vmatpush.msra.mxu0 %v25
  %189 = vmatpush.msra.mxu0 %v24
  %190 = vmatpush.msra.mxu0 %v23
  %191 = vmatpush.msra.mxu0 %v22
  %192 = vmatmul.f32.gmra.mxu0 %v154
  %v193 = vpop.f32.mrf.mxu0
  %v194 = vadd.f32 %v147, %v193
  %195 = vdwg.mxu0
  %196 = vmatpush.msra.mxu0 %v53
  %197 = vmatpush.msra.mxu0 %v52
  %198 = vmatpush.msra.mxu0 %v51
  %199 = vmatpush.msra.mxu0 %v50
  %200 = vmatpush.msra.mxu0 %v49
  %201 = vmatpush.msra.mxu0 %v48
  %202 = vmatpush.msra.mxu0 %v47
  %203 = vmatpush.msra.mxu0 %v46
  %204 = vmatpush.msra.mxu0 %v45
  %205 = vmatpush.msra.mxu0 %v44
  %206 = vmatpush.msra.mxu0 %v43
  %207 = vmatpush.msra.mxu0 %v42
  %208 = vmatpush.msra.mxu0 %v41
  %209 = vmatpush.msra.mxu0 %v40
  %210 = vmatpush.msra.mxu0 %v39
  %211 = vmatpush.msra.mxu0 %v38
  %212 = vmatmul.f32.gmra.mxu0 %v155
  %v213 = vpop.f32.mrf.mxu0
  %v214 = vadd.f32 %v194, %v213
  %215 = vdwg.mxu0
  %216 = vmatpush.msra.mxu0 %v69
  %217 = vmatpush.msra.mxu0 %v68
  %218 = vmatpush.msra.mxu0 %v67
  %219 = vmatpush.msra.mxu0 %v66
  %220 = vmatpush.msra.mxu0 %v65
  %221 = vmatpush.msra.mxu0 %v64
  %222 = vmatpush.msra.mxu0 %v63
  %223 = vmatpush.msra.mxu0 %v62
  %224 = vmatpush.msra.mxu0 %v61
  %225 = vmatpush.msra.mxu0 %v60
  %226 = vmatpush.msra.mxu0 %v59
  %227 = vmatpush.msra.mxu0 %v58
  %228 = vmatpush.msra.mxu0 %v57
  %229 = vmatpush.msra.mxu0 %v56
  %230 = vmatpush.msra.mxu0 %v55
  %231 = vmatpush.msra.mxu0 %v54
  %232 = vmatmul.f32.gmra.mxu0 %v156
  %v233 = vpop.f32.mrf.mxu0
  %v234 = vadd.f32 %v214, %v233
  %235 = vdwg.mxu0
  %236 = vmatpush.msra.mxu0 %v85
  %237 = vmatpush.msra.mxu0 %v84
  %238 = vmatpush.msra.mxu0 %v83
  %239 = vmatpush.msra.mxu0 %v82
  %240 = vmatpush.msra.mxu0 %v81
  %241 = vmatpush.msra.mxu0 %v80
  %242 = vmatpush.msra.mxu0 %v79
  %243 = vmatpush.msra.mxu0 %v78
  %244 = vmatpush.msra.mxu0 %v77
  %245 = vmatpush.msra.mxu0 %v76
  %246 = vmatpush.msra.mxu0 %v75
  %247 = vmatpush.msra.mxu0 %v74
  %248 = vmatpush.msra.mxu0 %v73
  %249 = vmatpush.msra.mxu0 %v72
  %250 = vmatpush.msra.mxu0 %v71
  %251 = vmatpush.msra.mxu0 %v70
  %252 = vmatmul.f32.gmra.mxu0 %v157
  %v253 = vpop.f32.mrf.mxu0
  %v254 = vadd.f32 %v234, %v253
  %255 = vdwg.mxu0
  %256 = vmatpush.msra.mxu0 %v101
  %257 = vmatpush.msra.mxu0 %v100
  %258 = vmatpush.msra.mxu0 %v99
  %259 = vmatpush.msra.mxu0 %v98
  %260 = vmatpush.msra.mxu0 %v97
  %261 = vmatpush.msra.mxu0 %v96
  %262 = vmatpush.msra.mxu0 %v95
  %263 = vmatpush.msra.mxu0 %v94
  %264 = vmatpush.msra.mxu0 %v93
  %265 = vmatpush.msra.mxu0 %v92
  %266 = vmatpush.msra.mxu0 %v91
  %267 = vmatpush.msra.mxu0 %v90
  %268 = vmatpush.msra.mxu0 %v89
  %269 = vmatpush.msra.mxu0 %v88
  %270 = vmatpush.msra.mxu0 %v87
  %271 = vmatpush.msra.mxu0 %v86
  %272 = vmatmul.f32.gmra.mxu0 %v158
  %v273 = vpop.f32.mrf.mxu0
  %v274 = vadd.f32 %v254, %v273
  %275 = vdwg.mxu0
  %276 = vmatpush.msra.mxu0 %v117
  %277 = vmatpush.msra.mxu0 %v116
  %278 = vmatpush.msra.mxu0 %v115
  %279 = vmatpush.msra.mxu0 %v114
  %280 = vmatpush.msra.mxu0 %v113
  %281 = vmatpush.msra.mxu0 %v112
  %282 = vmatpush.msra.mxu0 %v111
  %283 = vmatpush.msra.mxu0 %v110
  %284 = vmatpush.msra.mxu0 %v109
  %285 = vmatpush.msra.mxu0 %v108
  %286 = vmatpush.msra.mxu0 %v107
  %287 = vmatpush.msra.mxu0 %v106
  %288 = vmatpush.msra.mxu0 %v105
  %289 = vmatpush.msra.mxu0 %v104
  %290 = vmatpush.msra.mxu0 %v103
  %291 = vmatpush.msra.mxu0 %v102
  %292 = vmatmul.f32.gmra.mxu0 %v159
  %v293 = vpop.f32.mrf.mxu0
  %v294 = vadd.f32 %v274, %v293
  %295 = vdwg.mxu0
  %296 = vmatpush.msra.mxu0 %v133
  %297 = vmatpush.msra.mxu0 %v132
  %298 = vmatpush.msra.mxu0 %v131
  %299 = vmatpush.msra.mxu0 %v130
  %300 = vmatpush.msra.mxu0 %v129
  %301 = vmatpush.msra.mxu0 %v128
  %302 = vmatpush.msra.mxu0 %v127
  %303 = vmatpush.msra.mxu0 %v126
  %304 = vmatpush.msra.mxu0 %v125
  %305 = vmatpush.msra.mxu0 %v124
  %306 = vmatpush.msra.mxu0 %v123
  %307 = vmatpush.msra.mxu0 %v122
  %308 = vmatpush.msra.mxu0 %v121
  %309 = vmatpush.msra.mxu0 %v120
  %310 = vmatpush.msra.mxu0 %v119
  %311 = vmatpush.msra.mxu0 %v118
  %312 = vmatmul.f32.gmra.mxu0 %v160
  %v313 = vpop.f32.mrf.mxu0
  %v314 = vadd.f32 %v294, %v313
  %315 = vdwg.mxu0
  %316 = vmatpush.msra.mxu0 0.0
  %317 = vmatpush.msra.mxu0 0.0
  %318 = vmatpush.msra.mxu0 0.0
  %319 = vmatpush.msra.mxu0 0.0
  %320 = vmatpush.msra.mxu0 0.0
  %321 = vmatpush.msra.mxu0 %v174
  %322 = vmatpush.msra.mxu0 %v143
  %323 = vmatpush.msra.mxu0 %v142
  %324 = vmatpush.msra.mxu0 %v141
  %325 = vmatpush.msra.mxu0 %v140
  %326 = vmatpush.msra.mxu0 %v139
  %327 = vmatpush.msra.mxu0 %v138
  %328 = vmatpush.msra.mxu0 %v137
  %329 = vmatpush.msra.mxu0 %v136
  %330 = vmatpush.msra.mxu0 %v135
  %331 = vmatpush.msra.mxu0 %v134
  %332 = vmatmul.f32.gmra.mxu0 %v170
  %v333 = vpop.f32.mrf.mxu0
  %v334 = vadd.f32 %v314, %v333
  %335 = vdwg.mxu0
  %v336 = vmax.f32 %v334, 0.0
  %v337 = vld [vmem:[%s3] sm:$0xff]
  %v338 = vld [vmem:[%s3 + $0x8] sm:$0xff]
  %v339 = vld [vmem:[%s3 + $0x10] sm:$0xff]
  %v340 = vld [vmem:[%s3 + $0x18] sm:$0xff]
  %v341 = vld [vmem:[%s3 + $0x20] sm:$0xff]
  %v342 = vld [vmem:[%s3 + $0x28] sm:$0xff]
  %v343 = vld [vmem:[%s3 + $0x30] sm:$0xff]
  %v344 = vld [vmem:[%s3 + $0x38] sm:$0xff]
  %v345 = vld [vmem:[%s3 + $0x40] sm:$0xff]
  %v346 = vld [vmem:[%s3 + $0x48] sm:$0xff]
  %v347 = vld [vmem:[%s3 + $0x50] sm:$0xff]
  %v348 = vld [vmem:[%s3 + $0x58] sm:$0xff]
  %v349 = vld [vmem:[%s3 + $0x60] sm:$0xf]
  %v350 = vld [vmem:[%s4] sm:$0x1]
  %v352 = vperm.slane %v350, 0
  %vm354 = vcmask 818176
  %v356 = vsel %vm354, %v336, 0
  %v359 = vsel %vm172, %v349, 0
  %361 = vmatpush.msra.mxu0 0.0
  %362 = vmatpush.msra.mxu0 0.0
  %363 = vmatpush.msra.mxu0 0.0
  %364 = vmatpush.msra.mxu0 %v359
  %365 = vmatpush.msra.mxu0 %v348
  %366 = vmatpush.msra.mxu0 %v347
  %367 = vmatpush.msra.mxu0 %v346
  %368 = vmatpush.msra.mxu0 %v345
  %369 = vmatpush.msra.mxu0 %v344
  %370 = vmatpush.msra.mxu0 %v343
  %371 = vmatpush.msra.mxu0 %v342
  %372 = vmatpush.msra.mxu0 %v341
  %373 = vmatpush.msra.mxu0 %v340
  %374 = vmatpush.msra.mxu0 %v339
  %375 = vmatpush.msra.mxu0 %v338
  %376 = vmatpush.msra.mxu0 %v337
  %377 = vmatmul.f32.gmra.mxu0 %v356
  %v378 = vpop.f32.mrf.mxu0
  %v379 = vadd.f32 %v352, %v378
  %380 = vdwg.mxu0
  %vm381 = vcmask 41984
  %382 = vst.msk [vmem:[%s5] sm:$0x3] %vm381, %v379
  // Predicated region
  $region22: #{net_with_stn_forward.9} parent=0 // pred_check
    _
  $region23: #{net_with_stn_forward.9} parent=0 // pred_check_branch
    %384 = sbr.rel (0) target = $region25
  $region24: #{net_with_stn_forward.9} parent=0 // pred_region
    _
  $region25: #{net_with_stn_forward.9} parent=0 // pred_fallthru
    _
  // Predicated region
  $region26: #{net_with_stn_forward.9} parent=0 // pred_check
    _
  $region27: #{net_with_stn_forward.9} parent=0 // pred_check_branch
    %386 = sbr.rel (0) target = $region29
  $region28: #{net_with_stn_forward.9} parent=0 // pred_region
    _
  $region29: #{net_with_stn_forward.9} parent=0 // pred_fallthru
    _

// kernel: net_with_stn_forward.13
$region0: #{net_with_stn_forward.13}
  #allocation0 [shape = 'u32[]', space=smem, size = 0x4, offset = 0x4, fixed_abs, tag = 'smem constant byte address 0x4 - core index']
  #allocation1 [shape = 'u32[72,128]{1,0:T(1,128)}', space=vmem, size = 0x9000, scoped, tag = 'internal scratch']
  %s0 = inlined_call_operand.vmem [shape: f32[2,980], index: 0, kind: input, shape index: {}]
  %s1 = inlined_call_operand.vmem [shape: f32[980,100], index: 1, kind: input, shape index: {}]
  %s2 = inlined_call_operand.vmem [shape: f32[1,100], index: 2, kind: input, shape index: {}]
  %s3 = inlined_call_operand.vmem [shape: f32[100,10], index: 3, kind: input, shape index: {}]
  %s4 = inlined_call_operand.vmem [shape: f32[1,10], index: 4, kind: input, shape index: {}]
  %s5 = inlined_call_operand.hbm [shape: f32[2,10], index: 5, kind: output, shape index: {}]
  %s6 = sld [smem:[#allocation0]]
  $region30: #{net_with_stn_forward.13} parent=0
    _
  %s8 = ssub.s32 1, %s6
  %s9 = scalar_select 0, %s8, %s6
  $region1: #{net_with_stn_forward.13} parent=0
    #allocation2 [shape = 'u8[1024]{0}', space=vmem, size = 0x400, scoped, tag = 'output window, operand 0, single buffered']
    #allocation3 [shape = 's32[1]{0}', space=sflag, size = 0x4, scoped, tag = 'scoped memory for net_with_stn_forward.13']
    %10 = vsyncpa [#allocation3], 0
    // Predicated region
    $region2: #{net_with_stn_forward.13} parent=1 // pred_check
      _
    $region3: #{net_with_stn_forward.13} parent=1 // pred_check_branch
      %12 = sbr.rel (0) target = $region5
    $region4: #{net_with_stn_forward.13} parent=1 // pred_region
      _
    $region5: #{net_with_stn_forward.13} parent=1 // pred_fallthru
      _
    // Predicated region
    $region6: #{net_with_stn_forward.13} parent=1 // pred_check
      _
    $region7: #{net_with_stn_forward.13} parent=1 // pred_check_branch
      %14 = sbr.rel (0) target = $region9
    $region8: #{net_with_stn_forward.13} parent=1 // pred_region
      _
    $region9: #{net_with_stn_forward.13} parent=1 // pred_fallthru
      _
    // Predicated region
    $region10: #{net_with_stn_forward.13} parent=1 // pred_check
      _
    $region11: #{net_with_stn_forward.13} parent=1 // pred_check_branch
      %16 = sbr.rel (0) target = $region13
    $region12: #{net_with_stn_forward.13} parent=1 // pred_region
      _
    $region13: #{net_with_stn_forward.13} parent=1 // pred_fallthru
      _
    // Predicated region
    $region14: #{net_with_stn_forward.13} parent=1 // pred_check
      _
    $region15: #{net_with_stn_forward.13} parent=1 // pred_check_branch
      %18 = sbr.rel (0) target = $region17
    $region16: #{net_with_stn_forward.13} parent=1 // pred_region
      _
    $region17: #{net_with_stn_forward.13} parent=1 // pred_fallthru
      _
    // Predicated region
    $region18: #{net_with_stn_forward.13} parent=1 // pred_check
      _
    $region19: #{net_with_stn_forward.13} parent=1 // pred_check_branch
      %20 = sbr.rel (0) target = $region21
    $region20: #{net_with_stn_forward.13} parent=1 // pred_region
      _
    $region21: #{net_with_stn_forward.13} parent=1 // pred_fallthru
      _
    %v21 = vld [vmem:[%s0] sm:$0xff]
    %v22 = vld [vmem:[%s0 + $0x8] sm:$0xff]
    %v23 = vld [vmem:[%s1] sm:$0xff]
    %v24 = vld [vmem:[%s1 + $0x8] sm:$0xff]
    %v25 = vld [vmem:[%s1 + $0x10] sm:$0xff]
    %v26 = vld [vmem:[%s1 + $0x18] sm:$0xff]
    %v27 = vld [vmem:[%s1 + $0x20] sm:$0xff]
    %v28 = vld [vmem:[%s1 + $0x28] sm:$0xff]
    %v29 = vld [vmem:[%s1 + $0x30] sm:$0xff]
    %v30 = vld [vmem:[%s1 + $0x38] sm:$0xff]
    %v31 = vld [vmem:[%s1 + $0x40] sm:$0xff]
    %v32 = vld [vmem:[%s1 + $0x48] sm:$0xff]
    %v33 = vld [vmem:[%s1 + $0x50] sm:$0xff]
    %v34 = vld [vmem:[%s1 + $0x58] sm:$0xff]
    %v35 = vld [vmem:[%s1 + $0x60] sm:$0xff]
    %v36 = vld [vmem:[%s1 + $0x68] sm:$0xff]
    %v37 = vld [vmem:[%s1 + $0x70] sm:$0xff]
    %v38 = vld [vmem:[%s1 + $0x78] sm:$0xff]
    %v39 = vld [vmem:[%s1 + $0x80] sm:$0xff]
    %v40 = vld [vmem:[%s1 + $0x88] sm:$0xff]
    %v41 = vld [vmem:[%s1 + $0x90] sm:$0xff]
    %v42 = vld [vmem:[%s1 + $0x98] sm:$0xff]
    %v43 = vld [vmem:[%s1 + $0xa0] sm:$0xff]
    %v44 = vld [vmem:[%s1 + $0xa8] sm:$0xff]
    %v45 = vld [vmem:[%s1 + $0xb0] sm:$0xff]
    %v46 = vld [vmem:[%s1 + $0xb8] sm:$0xff]
    %v47 = vld [vmem:[%s1 + $0xc0] sm:$0xff]
    %v48 = vld [vmem:[%s1 + $0xc8] sm:$0xff]
    %v49 = vld [vmem:[%s1 + $0xd0] sm:$0xff]
    %v50 = vld [vmem:[%s1 + $0xd8] sm:$0xff]
    %v51 = vld [vmem:[%s1 + $0xe0] sm:$0xff]
    %v52 = vld [vmem:[%s1 + $0xe8] sm:$0xff]
    %v53 = vld [vmem:[%s1 + $0xf0] sm:$0xff]
    %v54 = vld [vmem:[%s1 + $0xf8] sm:$0xff]
    %v55 = vld [vmem:[%s1 + $0x100] sm:$0xff]
    %v56 = vld [vmem:[%s1 + $0x108] sm:$0xff]
    %v57 = vld [vmem:[%s1 + $0x110] sm:$0xff]
    %v58 = vld [vmem:[%s1 + $0x118] sm:$0xff]
    %v59 = vld [vmem:[%s1 + $0x120] sm:$0xff]
    %v60 = vld [vmem:[%s1 + $0x128] sm:$0xff]
    %v61 = vld [vmem:[%s1 + $0x130] sm:$0xff]
    %v62 = vld [vmem:[%s1 + $0x138] sm:$0xff]
    %v63 = vld [vmem:[%s1 + $0x140] sm:$0xff]
    %v64 = vld [vmem:[%s1 + $0x148] sm:$0xff]
    %v65 = vld [vmem:[%s1 + $0x150] sm:$0xff]
    %v66 = vld [vmem:[%s1 + $0x158] sm:$0xff]
    %v67 = vld [vmem:[%s1 + $0x160] sm:$0xff]
    %v68 = vld [vmem:[%s1 + $0x168] sm:$0xff]
    %v69 = vld [vmem:[%s1 + $0x170] sm:$0xff]
    %v70 = vld [vmem:[%s1 + $0x178] sm:$0xff]
    %v71 = vld [vmem:[%s1 + $0x180] sm:$0xff]
    %v72 = vld [vmem:[%s1 + $0x188] sm:$0xff]
    %v73 = vld [vmem:[%s1 + $0x190] sm:$0xff]
    %v74 = vld [vmem:[%s1 + $0x198] sm:$0xff]
    %v75 = vld [vmem:[%s1 + $0x1a0] sm:$0xff]
    %v76 = vld [vmem:[%s1 + $0x1a8] sm:$0xff]
    %v77 = vld [vmem:[%s1 + $0x1b0] sm:$0xff]
    %v78 = vld [vmem:[%s1 + $0x1b8] sm:$0xff]
    %v79 = vld [vmem:[%s1 + $0x1c0] sm:$0xff]
    %v80 = vld [vmem:[%s1 + $0x1c8] sm:$0xff]
    %v81 = vld [vmem:[%s1 + $0x1d0] sm:$0xff]
    %v82 = vld [vmem:[%s1 + $0x1d8] sm:$0xff]
    %v83 = vld [vmem:[%s1 + $0x1e0] sm:$0xff]
    %v84 = vld [vmem:[%s1 + $0x1e8] sm:$0xff]
    %v85 = vld [vmem:[%s1 + $0x1f0] sm:$0xff]
    %v86 = vld [vmem:[%s1 + $0x1f8] sm:$0xff]
    %v87 = vld [vmem:[%s1 + $0x200] sm:$0xff]
    %v88 = vld [vmem:[%s1 + $0x208] sm:$0xff]
    %v89 = vld [vmem:[%s1 + $0x210] sm:$0xff]
    %v90 = vld [vmem:[%s1 + $0x218] sm:$0xff]
    %v91 = vld [vmem:[%s1 + $0x220] sm:$0xff]
    %v92 = vld [vmem:[%s1 + $0x228] sm:$0xff]
    %v93 = vld [vmem:[%s1 + $0x230] sm:$0xff]
    %v94 = vld [vmem:[%s1 + $0x238] sm:$0xff]
    %v95 = vld [vmem:[%s1 + $0x240] sm:$0xff]
    %v96 = vld [vmem:[%s1 + $0x248] sm:$0xff]
    %v97 = vld [vmem:[%s1 + $0x250] sm:$0xff]
    %v98 = vld [vmem:[%s1 + $0x258] sm:$0xff]
    %v99 = vld [vmem:[%s1 + $0x260] sm:$0xff]
    %v100 = vld [vmem:[%s1 + $0x268] sm:$0xff]
    %v101 = vld [vmem:[%s1 + $0x270] sm:$0xff]
    %v102 = vld [vmem:[%s1 + $0x278] sm:$0xff]
    %v103 = vld [vmem:[%s1 + $0x280] sm:$0xff]
    %v104 = vld [vmem:[%s1 + $0x288] sm:$0xff]
    %v105 = vld [vmem:[%s1 + $0x290] sm:$0xff]
    %v106 = vld [vmem:[%s1 + $0x298] sm:$0xff]
    %v107 = vld [vmem:[%s1 + $0x2a0] sm:$0xff]
    %v108 = vld [vmem:[%s1 + $0x2a8] sm:$0xff]
    %v109 = vld [vmem:[%s1 + $0x2b0] sm:$0xff]
    %v110 = vld [vmem:[%s1 + $0x2b8] sm:$0xff]
    %v111 = vld [vmem:[%s1 + $0x2c0] sm:$0xff]
    %v112 = vld [vmem:[%s1 + $0x2c8] sm:$0xff]
    %v113 = vld [vmem:[%s1 + $0x2d0] sm:$0xff]
    %v114 = vld [vmem:[%s1 + $0x2d8] sm:$0xff]
    %v115 = vld [vmem:[%s1 + $0x2e0] sm:$0xff]
    %v116 = vld [vmem:[%s1 + $0x2e8] sm:$0xff]
    %v117 = vld [vmem:[%s1 + $0x2f0] sm:$0xff]
    %v118 = vld [vmem:[%s1 + $0x2f8] sm:$0xff]
    %v119 = vld [vmem:[%s1 + $0x300] sm:$0xff]
    %v120 = vld [vmem:[%s1 + $0x308] sm:$0xff]
    %v121 = vld [vmem:[%s1 + $0x310] sm:$0xff]
    %v122 = vld [vmem:[%s1 + $0x318] sm:$0xff]
    %v123 = vld [vmem:[%s1 + $0x320] sm:$0xff]
    %v124 = vld [vmem:[%s1 + $0x328] sm:$0xff]
    %v125 = vld [vmem:[%s1 + $0x330] sm:$0xff]
    %v126 = vld [vmem:[%s1 + $0x338] sm:$0xff]
    %v127 = vld [vmem:[%s1 + $0x340] sm:$0xff]
    %v128 = vld [vmem:[%s1 + $0x348] sm:$0xff]
    %v129 = vld [vmem:[%s1 + $0x350] sm:$0xff]
    %v130 = vld [vmem:[%s1 + $0x358] sm:$0xff]
    %v131 = vld [vmem:[%s1 + $0x360] sm:$0xff]
    %v132 = vld [vmem:[%s1 + $0x368] sm:$0xff]
    %v133 = vld [vmem:[%s1 + $0x370] sm:$0xff]
    %v134 = vld [vmem:[%s1 + $0x378] sm:$0xff]
    %v135 = vld [vmem:[%s1 + $0x380] sm:$0xff]
    %v136 = vld [vmem:[%s1 + $0x388] sm:$0xff]
    %v137 = vld [vmem:[%s1 + $0x390] sm:$0xff]
    %v138 = vld [vmem:[%s1 + $0x398] sm:$0xff]
    %v139 = vld [vmem:[%s1 + $0x3a0] sm:$0xff]
    %v140 = vld [vmem:[%s1 + $0x3a8] sm:$0xff]
    %v141 = vld [vmem:[%s1 + $0x3b0] sm:$0xff]
    %v142 = vld [vmem:[%s1 + $0x3b8] sm:$0xff]
    %v143 = vld [vmem:[%s1 + $0x3c0] sm:$0xff]
    %v144 = vld [vmem:[%s1 + $0x3c8] sm:$0xff]
    %v145 = vld [vmem:[%s1 + $0x3d0] sm:$0xf]
    %v146 = vld [vmem:[%s2] sm:$0x1]
    %v148 = vperm.slane %v146, 0
    %152 = vst [vmem:[#allocation1] ss:$4 sm:$0xff] %v21
    %s153 = scalar_lea.vmem [#allocation1], 32
    %154 = vst [vmem:[%s153] ss:$4 sm:$0xff] %v22
    %v155 = vld.sshfl [vmem:[#allocation1] sm:$0xff pattern:$0x73625140]
    %v156 = vld.sshfl [vmem:[#allocation1 + $0x8] sm:$0xff pattern:$0x73625140]
    %v157 = vld.sshfl [vmem:[#allocation1 + $0x10] sm:$0xff pattern:$0x73625140]
    %v158 = vld.sshfl [vmem:[#allocation1 + $0x18] sm:$0xff pattern:$0x73625140]
    %v159 = vld.sshfl [vmem:[#allocation1 + $0x20] sm:$0xff pattern:$0x73625140]
    %v160 = vld.sshfl [vmem:[#allocation1 + $0x28] sm:$0xff pattern:$0x73625140]
    %v161 = vld.sshfl [vmem:[#allocation1 + $0x30] sm:$0xff pattern:$0x73625140]
    %v162 = vld.sshfl [vmem:[#allocation1 + $0x38] sm:$0xff pattern:$0x73625140]
    %vm170 = vcmask 687104
    %v171 = vsel %vm170, %v162, 0
    %vm173 = vcmask 1043456
    %v175 = vsel %vm173, %v145, 0
    %177 = vmatpush.msra.mxu0 %v38
    %178 = vmatpush.msra.mxu0 %v37
    %179 = vmatpush.msra.mxu0 %v36
    %180 = vmatpush.msra.mxu0 %v35
    %181 = vmatpush.msra.mxu0 %v34
    %182 = vmatpush.msra.mxu0 %v33
    %183 = vmatpush.msra.mxu0 %v32
    %184 = vmatpush.msra.mxu0 %v31
    %185 = vmatpush.msra.mxu0 %v30
    %186 = vmatpush.msra.mxu0 %v29
    %187 = vmatpush.msra.mxu0 %v28
    %188 = vmatpush.msra.mxu0 %v27
    %189 = vmatpush.msra.mxu0 %v26
    %190 = vmatpush.msra.mxu0 %v25
    %191 = vmatpush.msra.mxu0 %v24
    %192 = vmatpush.msra.mxu0 %v23
    %193 = vmatmul.f32.gmra.mxu0 %v155
    %v194 = vpop.f32.mrf.mxu0
    %v195 = vadd.f32 %v148, %v194
    %196 = vdwg.mxu0
    %197 = vmatpush.msra.mxu0 %v54
    %198 = vmatpush.msra.mxu0 %v53
    %199 = vmatpush.msra.mxu0 %v52
    %200 = vmatpush.msra.mxu0 %v51
    %201 = vmatpush.msra.mxu0 %v50
    %202 = vmatpush.msra.mxu0 %v49
    %203 = vmatpush.msra.mxu0 %v48
    %204 = vmatpush.msra.mxu0 %v47
    %205 = vmatpush.msra.mxu0 %v46
    %206 = vmatpush.msra.mxu0 %v45
    %207 = vmatpush.msra.mxu0 %v44
    %208 = vmatpush.msra.mxu0 %v43
    %209 = vmatpush.msra.mxu0 %v42
    %210 = vmatpush.msra.mxu0 %v41
    %211 = vmatpush.msra.mxu0 %v40
    %212 = vmatpush.msra.mxu0 %v39
    %213 = vmatmul.f32.gmra.mxu0 %v156
    %v214 = vpop.f32.mrf.mxu0
    %v215 = vadd.f32 %v195, %v214
    %216 = vdwg.mxu0
    %217 = vmatpush.msra.mxu0 %v70
    %218 = vmatpush.msra.mxu0 %v69
    %219 = vmatpush.msra.mxu0 %v68
    %220 = vmatpush.msra.mxu0 %v67
    %221 = vmatpush.msra.mxu0 %v66
    %222 = vmatpush.msra.mxu0 %v65
    %223 = vmatpush.msra.mxu0 %v64
    %224 = vmatpush.msra.mxu0 %v63
    %225 = vmatpush.msra.mxu0 %v62
    %226 = vmatpush.msra.mxu0 %v61
    %227 = vmatpush.msra.mxu0 %v60
    %228 = vmatpush.msra.mxu0 %v59
    %229 = vmatpush.msra.mxu0 %v58
    %230 = vmatpush.msra.mxu0 %v57
    %231 = vmatpush.msra.mxu0 %v56
    %232 = vmatpush.msra.mxu0 %v55
    %233 = vmatmul.f32.gmra.mxu0 %v157
    %v234 = vpop.f32.mrf.mxu0
    %v235 = vadd.f32 %v215, %v234
    %236 = vdwg.mxu0
    %237 = vmatpush.msra.mxu0 %v86
    %238 = vmatpush.msra.mxu0 %v85
    %239 = vmatpush.msra.mxu0 %v84
    %240 = vmatpush.msra.mxu0 %v83
    %241 = vmatpush.msra.mxu0 %v82
    %242 = vmatpush.msra.mxu0 %v81
    %243 = vmatpush.msra.mxu0 %v80
    %244 = vmatpush.msra.mxu0 %v79
    %245 = vmatpush.msra.mxu0 %v78
    %246 = vmatpush.msra.mxu0 %v77
    %247 = vmatpush.msra.mxu0 %v76
    %248 = vmatpush.msra.mxu0 %v75
    %249 = vmatpush.msra.mxu0 %v74
    %250 = vmatpush.msra.mxu0 %v73
    %251 = vmatpush.msra.mxu0 %v72
    %252 = vmatpush.msra.mxu0 %v71
    %253 = vmatmul.f32.gmra.mxu0 %v158
    %v254 = vpop.f32.mrf.mxu0
    %v255 = vadd.f32 %v235, %v254
    %256 = vdwg.mxu0
    %257 = vmatpush.msra.mxu0 %v102
    %258 = vmatpush.msra.mxu0 %v101
    %259 = vmatpush.msra.mxu0 %v100
    %260 = vmatpush.msra.mxu0 %v99
    %261 = vmatpush.msra.mxu0 %v98
    %262 = vmatpush.msra.mxu0 %v97
    %263 = vmatpush.msra.mxu0 %v96
    %264 = vmatpush.msra.mxu0 %v95
    %265 = vmatpush.msra.mxu0 %v94
    %266 = vmatpush.msra.mxu0 %v93
    %267 = vmatpush.msra.mxu0 %v92
    %268 = vmatpush.msra.mxu0 %v91
    %269 = vmatpush.msra.mxu0 %v90
    %270 = vmatpush.msra.mxu0 %v89
    %271 = vmatpush.msra.mxu0 %v88
    %272 = vmatpush.msra.mxu0 %v87
    %273 = vmatmul.f32.gmra.mxu0 %v159
    %v274 = vpop.f32.mrf.mxu0
    %v275 = vadd.f32 %v255, %v274
    %276 = vdwg.mxu0
    %277 = vmatpush.msra.mxu0 %v118
    %278 = vmatpush.msra.mxu0 %v117
    %279 = vmatpush.msra.mxu0 %v116
    %280 = vmatpush.msra.mxu0 %v115
    %281 = vmatpush.msra.mxu0 %v114
    %282 = vmatpush.msra.mxu0 %v113
    %283 = vmatpush.msra.mxu0 %v112
    %284 = vmatpush.msra.mxu0 %v111
    %285 = vmatpush.msra.mxu0 %v110
    %286 = vmatpush.msra.mxu0 %v109
    %287 = vmatpush.msra.mxu0 %v108
    %288 = vmatpush.msra.mxu0 %v107
    %289 = vmatpush.msra.mxu0 %v106
    %290 = vmatpush.msra.mxu0 %v105
    %291 = vmatpush.msra.mxu0 %v104
    %292 = vmatpush.msra.mxu0 %v103
    %293 = vmatmul.f32.gmra.mxu0 %v160
    %v294 = vpop.f32.mrf.mxu0
    %v295 = vadd.f32 %v275, %v294
    %296 = vdwg.mxu0
    %297 = vmatpush.msra.mxu0 %v134
    %298 = vmatpush.msra.mxu0 %v133
    %299 = vmatpush.msra.mxu0 %v132
    %300 = vmatpush.msra.mxu0 %v131
    %301 = vmatpush.msra.mxu0 %v130
    %302 = vmatpush.msra.mxu0 %v129
    %303 = vmatpush.msra.mxu0 %v128
    %304 = vmatpush.msra.mxu0 %v127
    %305 = vmatpush.msra.mxu0 %v126
    %306 = vmatpush.msra.mxu0 %v125
    %307 = vmatpush.msra.mxu0 %v124
    %308 = vmatpush.msra.mxu0 %v123
    %309 = vmatpush.msra.mxu0 %v122
    %310 = vmatpush.msra.mxu0 %v121
    %311 = vmatpush.msra.mxu0 %v120
    %312 = vmatpush.msra.mxu0 %v119
    %313 = vmatmul.f32.gmra.mxu0 %v161
    %v314 = vpop.f32.mrf.mxu0
    %v315 = vadd.f32 %v295, %v314
    %316 = vdwg.mxu0
    %317 = vmatpush.msra.mxu0 0.0
    %318 = vmatpush.msra.mxu0 0.0
    %319 = vmatpush.msra.mxu0 0.0
    %320 = vmatpush.msra.mxu0 0.0
    %321 = vmatpush.msra.mxu0 0.0
    %322 = vmatpush.msra.mxu0 %v175
    %323 = vmatpush.msra.mxu0 %v144
    %324 = vmatpush.msra.mxu0 %v143
    %325 = vmatpush.msra.mxu0 %v142
    %326 = vmatpush.msra.mxu0 %v141
    %327 = vmatpush.msra.mxu0 %v140
    %328 = vmatpush.msra.mxu0 %v139
    %329 = vmatpush.msra.mxu0 %v138
    %330 = vmatpush.msra.mxu0 %v137
    %331 = vmatpush.msra.mxu0 %v136
    %332 = vmatpush.msra.mxu0 %v135
    %333 = vmatmul.f32.gmra.mxu0 %v171
    %v334 = vpop.f32.mrf.mxu0
    %v335 = vadd.f32 %v315, %v334
    %336 = vdwg.mxu0
    %v337 = vmax.f32 %v335, 0.0
    %v338 = vld [vmem:[%s3] sm:$0xff]
    %v339 = vld [vmem:[%s3 + $0x8] sm:$0xff]
    %v340 = vld [vmem:[%s3 + $0x10] sm:$0xff]
    %v341 = vld [vmem:[%s3 + $0x18] sm:$0xff]
    %v342 = vld [vmem:[%s3 + $0x20] sm:$0xff]
    %v343 = vld [vmem:[%s3 + $0x28] sm:$0xff]
    %v344 = vld [vmem:[%s3 + $0x30] sm:$0xff]
    %v345 = vld [vmem:[%s3 + $0x38] sm:$0xff]
    %v346 = vld [vmem:[%s3 + $0x40] sm:$0xff]
    %v347 = vld [vmem:[%s3 + $0x48] sm:$0xff]
    %v348 = vld [vmem:[%s3 + $0x50] sm:$0xff]
    %v349 = vld [vmem:[%s3 + $0x58] sm:$0xff]
    %v350 = vld [vmem:[%s3 + $0x60] sm:$0xf]
    %v351 = vld [vmem:[%s4] sm:$0x1]
    %v353 = vperm.slane %v351, 0
    %vm355 = vcmask 818176
    %v357 = vsel %vm355, %v337, 0
    %v360 = vsel %vm173, %v350, 0
    %362 = vmatpush.msra.mxu0 0.0
    %363 = vmatpush.msra.mxu0 0.0
    %364 = vmatpush.msra.mxu0 0.0
    %365 = vmatpush.msra.mxu0 %v360
    %366 = vmatpush.msra.mxu0 %v349
    %367 = vmatpush.msra.mxu0 %v348
    %368 = vmatpush.msra.mxu0 %v347
    %369 = vmatpush.msra.mxu0 %v346
    %370 = vmatpush.msra.mxu0 %v345
    %371 = vmatpush.msra.mxu0 %v344
    %372 = vmatpush.msra.mxu0 %v343
    %373 = vmatpush.msra.mxu0 %v342
    %374 = vmatpush.msra.mxu0 %v341
    %375 = vmatpush.msra.mxu0 %v340
    %376 = vmatpush.msra.mxu0 %v339
    %377 = vmatpush.msra.mxu0 %v338
    %378 = vmatmul.f32.gmra.mxu0 %v357
    %v379 = vpop.f32.mrf.mxu0
    %v380 = vadd.f32 %v353, %v379
    %381 = vdwg.mxu0
    %vm382 = vcmask 74752
    %383 = vst.msk [vmem:[#allocation2] sm:$0x3] %vm382, %v380
    // Predicated region
    $region22: #{net_with_stn_forward.13} parent=1 // pred_check
      _
    $region23: #{net_with_stn_forward.13} parent=1 // pred_check_branch
      %385 = sbr.rel (0) target = $region25
    $region24: #{net_with_stn_forward.13} parent=1 // pred_region
      %387 = vsyncadd [#allocation3], 0
      %s389 = sshll.u32 [#allocation2], 4
      %s390 = int_to_ptr.vmem [resolvable:$true] %s389
      %s391 = sshll.u32 %s5, 4
      %s392 = int_to_ptr.hbm [resolvable:$true] %s391
      %394 = dma.vmem_to_hbm [thread:$0]  %s390, 32, %s392, [#allocation3]
    $region25: #{net_with_stn_forward.13} parent=1 // pred_fallthru
      _
    // Predicated region
    $region26: #{net_with_stn_forward.13} parent=1 // pred_check
      _
    $region27: #{net_with_stn_forward.13} parent=1 // pred_check_branch
      %396 = sbr.rel (0) target = $region29
    $region28: #{net_with_stn_forward.13} parent=1 // pred_region
      %398 = dma.done [#allocation3], 32
    $region29: #{net_with_stn_forward.13} parent=1 // pred_fallthru
      _
    %399 = vsyncpa [#allocation3], 1

// kernel: net_with_stn_forward.10
$region0: #{net_with_stn_forward.10}
  #allocation0 [shape = 'u32[]', space=smem, size = 0x4, offset = 0x4, fixed_abs, tag = 'smem constant byte address 0x4 - core index']
  #allocation1 [shape = 'u32[72,128]{1,0:T(1,128)}', space=vmem, size = 0x9000, scoped, tag = 'internal scratch']
  %s0 = inlined_call_operand.vmem [shape: f32[2,6], index: 0, kind: input, shape index: {}]
  %s1 = inlined_call_operand.vmem [shape: f32[2,784], index: 1, kind: input, shape index: {}]
  %s2 = inlined_call_operand.vmem [shape: f32[2,1,28,28], index: 2, kind: input, shape index: {}]
  %s3 = inlined_call_operand.vmem [shape: f32[2,1,784], index: 3, kind: output, shape index: {}]
  %s4 = sld [smem:[#allocation0]]
  $region22: #{net_with_stn_forward.10} parent=0
    _
  %s6 = ssub.s32 1, %s4
  %s7 = scalar_select 0, %s6, %s4
  // Predicated region
  $region2: #{net_with_stn_forward.10} parent=0 // pred_check
    _
  $region3: #{net_with_stn_forward.10} parent=0 // pred_check_branch
    %9 = sbr.rel (0) target = $region5
  $region4: #{net_with_stn_forward.10} parent=0 // pred_region
    _
  $region5: #{net_with_stn_forward.10} parent=0 // pred_fallthru
    _
  // Predicated region
  $region6: #{net_with_stn_forward.10} parent=0 // pred_check
    _
  $region7: #{net_with_stn_forward.10} parent=0 // pred_check_branch
    %11 = sbr.rel (0) target = $region9
  $region8: #{net_with_stn_forward.10} parent=0 // pred_region
    _
  $region9: #{net_with_stn_forward.10} parent=0 // pred_fallthru
    _
  // Predicated region
  $region10: #{net_with_stn_forward.10} parent=0 // pred_check
    _
  $region11: #{net_with_stn_forward.10} parent=0 // pred_check_branch
    %13 = sbr.rel (0) target = $region13
  $region12: #{net_with_stn_forward.10} parent=0 // pred_region
    _
  $region13: #{net_with_stn_forward.10} parent=0 // pred_fallthru
    _
  %v14 = vld [vmem:[%s1] ss:$2 sm:$0x7f]
  %s15 = scalar_lea.vmem %s1, 1
  %v16 = vld [vmem:[%s15] ss:$2 sm:$0x7f]
  %v17 = vlaneseq
  %v18 = vshrl.u32 %v17, 7
  %v19 = vadd.s32 %v18, 8
  %v20 = vadd.s32 %v18, 16
  %v21 = vadd.s32 %v18, 24
  %v22 = vld [vmem:[%s0] sm:$0x3]
  %24 = vset.pattern.permute.xlu0 0
  %25 = vperm.xlu0 %24, %v22
  %v26 = vpop.permute.xlu0 %25
  %v29 = vperm.slane %v14, 0
  %v30 = vperm.slane %v14, 1
  %v31 = vperm.slane %v14, 2
  %v32 = vperm.slane %v14, 3
  %v33 = vperm.slane %v14, 4
  %v34 = vperm.slane %v14, 5
  %v35 = vperm.slane %v14, 6
  %v43 = vmul.f32 %v26, %v29
  %v44 = vmul.f32 %v26, %v30
  %v45 = vmul.f32 %v26, %v31
  %v46 = vmul.f32 %v26, %v32
  %v47 = vmul.f32 %v26, %v33
  %v48 = vmul.f32 %v26, %v34
  %v49 = vmul.f32 %v26, %v35
  %50 = vset.pattern.permute.xlu0 1
  %51 = vperm.xlu0 %50, %v22
  %v52 = vpop.permute.xlu0 %51
  %v55 = vperm.slane %v16, 0
  %v56 = vperm.slane %v16, 1
  %v57 = vperm.slane %v16, 2
  %v58 = vperm.slane %v16, 3
  %v59 = vperm.slane %v16, 4
  %v60 = vperm.slane %v16, 5
  %v61 = vperm.slane %v16, 6
  %v69 = vmul.f32 %v52, %v55
  %v70 = vmul.f32 %v52, %v56
  %v71 = vmul.f32 %v52, %v57
  %v72 = vmul.f32 %v52, %v58
  %v73 = vmul.f32 %v52, %v59
  %v74 = vmul.f32 %v52, %v60
  %v75 = vmul.f32 %v52, %v61
  %v76 = vadd.f32 %v43, %v69
  %v77 = vadd.f32 %v44, %v70
  %v78 = vadd.f32 %v45, %v71
  %v79 = vadd.f32 %v46, %v72
  %v80 = vadd.f32 %v47, %v73
  %v81 = vadd.f32 %v48, %v74
  %v82 = vadd.f32 %v49, %v75
  %83 = vset.pattern.permute.xlu0 2
  %84 = vperm.xlu0 %83, %v22
  %v85 = vpop.permute.xlu0 %84
  %v87 = vadd.f32 %v76, %v85
  %v88 = vadd.f32 %v77, %v85
  %v89 = vadd.f32 %v78, %v85
  %v90 = vadd.f32 %v79, %v85
  %v91 = vadd.f32 %v80, %v85
  %v92 = vadd.f32 %v81, %v85
  %v93 = vadd.f32 %v82, %v85
  %94 = vset.pattern.permute.xlu0 3
  %95 = vperm.xlu0 %94, %v22
  %v96 = vpop.permute.xlu0 %95
  %v98 = vmul.f32 %v96, %v29
  %v99 = vmul.f32 %v96, %v30
  %v100 = vmul.f32 %v96, %v31
  %v101 = vmul.f32 %v96, %v32
  %v102 = vmul.f32 %v96, %v33
  %v103 = vmul.f32 %v96, %v34
  %v104 = vmul.f32 %v96, %v35
  %105 = vset.pattern.permute.xlu0 4
  %106 = vperm.xlu0 %105, %v22
  %v107 = vpop.permute.xlu0 %106
  %v109 = vmul.f32 %v107, %v55
  %v110 = vmul.f32 %v107, %v56
  %v111 = vmul.f32 %v107, %v57
  %v112 = vmul.f32 %v107, %v58
  %v113 = vmul.f32 %v107, %v59
  %v114 = vmul.f32 %v107, %v60
  %v115 = vmul.f32 %v107, %v61
  %v116 = vadd.f32 %v98, %v109
  %v117 = vadd.f32 %v99, %v110
  %v118 = vadd.f32 %v100, %v111
  %v119 = vadd.f32 %v101, %v112
  %v120 = vadd.f32 %v102, %v113
  %v121 = vadd.f32 %v103, %v114
  %v122 = vadd.f32 %v104, %v115
  %123 = vset.pattern.permute.xlu0 5
  %124 = vperm.xlu0 %123, %v22
  %v125 = vpop.permute.xlu0 %124
  %v127 = vadd.f32 %v116, %v125
  %v128 = vadd.f32 %v117, %v125
  %v129 = vadd.f32 %v118, %v125
  %v130 = vadd.f32 %v119, %v125
  %v131 = vadd.f32 %v120, %v125
  %v132 = vadd.f32 %v121, %v125
  %v133 = vadd.f32 %v122, %v125
  %v134 = vadd.f32 %v87, 1.0
  %v135 = vadd.f32 %v88, 1.0
  %v136 = vadd.f32 %v89, 1.0
  %v137 = vadd.f32 %v90, 1.0
  %v138 = vadd.f32 %v91, 1.0
  %v139 = vadd.f32 %v92, 1.0
  %v140 = vadd.f32 %v93, 1.0
  %v141 = vmul.f32 %v134, 28.0
  %v142 = vmul.f32 %v135, 28.0
  %v143 = vmul.f32 %v136, 28.0
  %v144 = vmul.f32 %v137, 28.0
  %v145 = vmul.f32 %v138, 28.0
  %v146 = vmul.f32 %v139, 28.0
  %v147 = vmul.f32 %v140, 28.0
  %v148 = vsub.f32 %v141, 1.0
  %v149 = vsub.f32 %v142, 1.0
  %v150 = vsub.f32 %v143, 1.0
  %v151 = vsub.f32 %v144, 1.0
  %v152 = vsub.f32 %v145, 1.0
  %v153 = vsub.f32 %v146, 1.0
  %v154 = vsub.f32 %v147, 1.0
  %v155 = vmul.f32 %v148, 0.5
  %v156 = vmul.f32 %v149, 0.5
  %v157 = vmul.f32 %v150, 0.5
  %v158 = vmul.f32 %v151, 0.5
  %v159 = vmul.f32 %v152, 0.5
  %v160 = vmul.f32 %v153, 0.5
  %v161 = vmul.f32 %v154, 0.5
  %v162 = vadd.f32 %v127, 1.0
  %v163 = vadd.f32 %v128, 1.0
  %v164 = vadd.f32 %v129, 1.0
  %v165 = vadd.f32 %v130, 1.0
  %v166 = vadd.f32 %v131, 1.0
  %v167 = vadd.f32 %v132, 1.0
  %v168 = vadd.f32 %v133, 1.0
  %v169 = vmul.f32 %v162, 28.0
  %v170 = vmul.f32 %v163, 28.0
  %v171 = vmul.f32 %v164, 28.0
  %v172 = vmul.f32 %v165, 28.0
  %v173 = vmul.f32 %v166, 28.0
  %v174 = vmul.f32 %v167, 28.0
  %v175 = vmul.f32 %v168, 28.0
  %v176 = vsub.f32 %v169, 1.0
  %v177 = vsub.f32 %v170, 1.0
  %v178 = vsub.f32 %v171, 1.0
  %v179 = vsub.f32 %v172, 1.0
  %v180 = vsub.f32 %v173, 1.0
  %v181 = vsub.f32 %v174, 1.0
  %v182 = vsub.f32 %v175, 1.0
  %v183 = vmul.f32 %v176, 0.5
  %v184 = vmul.f32 %v177, 0.5
  %v185 = vmul.f32 %v178, 0.5
  %v186 = vmul.f32 %v179, 0.5
  %v187 = vmul.f32 %v180, 0.5
  %v188 = vmul.f32 %v181, 0.5
  %v189 = vmul.f32 %v182, 0.5
  %v190 = vfloor.f32 %v155
  %v191 = vfloor.f32 %v156
  %v192 = vfloor.f32 %v157
  %v193 = vfloor.f32 %v158
  %v194 = vfloor.f32 %v159
  %v195 = vfloor.f32 %v160
  %v196 = vfloor.f32 %v161
  %v197 = vfloor.f32 %v183
  %v198 = vfloor.f32 %v184
  %v199 = vfloor.f32 %v185
  %v200 = vfloor.f32 %v186
  %v201 = vfloor.f32 %v187
  %v202 = vfloor.f32 %v188
  %v203 = vfloor.f32 %v189
  %v204 = vsub.f32 %v155, %v190
  %v205 = vsub.f32 %v156, %v191
  %v206 = vsub.f32 %v157, %v192
  %v207 = vsub.f32 %v158, %v193
  %v208 = vsub.f32 %v159, %v194
  %v209 = vsub.f32 %v160, %v195
  %v210 = vsub.f32 %v161, %v196
  %v211 = vsub.f32 %v183, %v197
  %v212 = vsub.f32 %v184, %v198
  %v213 = vsub.f32 %v185, %v199
  %v214 = vsub.f32 %v186, %v200
  %v215 = vsub.f32 %v187, %v201
  %v216 = vsub.f32 %v188, %v202
  %v217 = vsub.f32 %v189, %v203
  %v218 = vcvt.f32.s32.to.zero.pseudo %v190
  %v219 = vcvt.f32.s32.to.zero.pseudo %v191
  %v220 = vcvt.f32.s32.to.zero.pseudo %v192
  %v221 = vcvt.f32.s32.to.zero.pseudo %v193
  %v222 = vcvt.f32.s32.to.zero.pseudo %v194
  %v223 = vcvt.f32.s32.to.zero.pseudo %v195
  %v224 = vcvt.f32.s32.to.zero.pseudo %v196
  %v225 = vcvt.f32.s32.to.zero.pseudo %v197
  %v226 = vcvt.f32.s32.to.zero.pseudo %v198
  %v227 = vcvt.f32.s32.to.zero.pseudo %v199
  %v228 = vcvt.f32.s32.to.zero.pseudo %v200
  %v229 = vcvt.f32.s32.to.zero.pseudo %v201
  %v230 = vcvt.f32.s32.to.zero.pseudo %v202
  %v231 = vcvt.f32.s32.to.zero.pseudo %v203
  %v232 = vadd.s32 %v218, 1
  %v233 = vadd.s32 %v219, 1
  %v234 = vadd.s32 %v220, 1
  %v235 = vadd.s32 %v221, 1
  %v236 = vadd.s32 %v222, 1
  %v237 = vadd.s32 %v223, 1
  %v238 = vadd.s32 %v224, 1
  %v239 = vadd.s32 %v225, 1
  %v240 = vadd.s32 %v226, 1
  %v241 = vadd.s32 %v227, 1
  %v242 = vadd.s32 %v228, 1
  %v243 = vadd.s32 %v229, 1
  %v244 = vadd.s32 %v230, 1
  %v245 = vadd.s32 %v231, 1
  %v246 = vld [vmem:[%s2] sm:$0xff]
  %v247 = vld [vmem:[%s2 + $0x8] sm:$0xff]
  %v248 = vld [vmem:[%s2 + $0x10] sm:$0xff]
  %v249 = vld [vmem:[%s2 + $0x18] sm:$0xf]
  %v250 = vperm.slane %v218, 0
  %v251 = vperm.slane %v219, 0
  %v252 = vperm.slane %v220, 0
  %v253 = vperm.slane %v221, 0
  %v254 = vperm.slane %v222, 0
  %v255 = vperm.slane %v223, 0
  %v256 = vperm.slane %v224, 0
  %vm257 = vcmp.eq.s32.totalorder %v18, %v250
  %vm258 = vcmp.eq.s32.totalorder %v18, %v251
  %vm259 = vcmp.eq.s32.totalorder %v18, %v252
  %vm260 = vcmp.eq.s32.totalorder %v18, %v253
  %vm261 = vcmp.eq.s32.totalorder %v18, %v254
  %vm262 = vcmp.eq.s32.totalorder %v18, %v255
  %vm263 = vcmp.eq.s32.totalorder %v18, %v256
  %vm264 = vcmp.eq.s32.totalorder %v19, %v250
  %vm265 = vcmp.eq.s32.totalorder %v19, %v251
  %vm266 = vcmp.eq.s32.totalorder %v19, %v252
  %vm267 = vcmp.eq.s32.totalorder %v19, %v253
  %vm268 = vcmp.eq.s32.totalorder %v19, %v254
  %vm269 = vcmp.eq.s32.totalorder %v19, %v255
  %vm270 = vcmp.eq.s32.totalorder %v19, %v256
  %vm271 = vcmp.eq.s32.totalorder %v20, %v250
  %vm272 = vcmp.eq.s32.totalorder %v20, %v251
  %vm273 = vcmp.eq.s32.totalorder %v20, %v252
  %vm274 = vcmp.eq.s32.totalorder %v20, %v253
  %vm275 = vcmp.eq.s32.totalorder %v20, %v254
  %vm276 = vcmp.eq.s32.totalorder %v20, %v255
  %vm277 = vcmp.eq.s32.totalorder %v20, %v256
  %vm278 = vcmp.eq.s32.totalorder %v21, %v250
  %vm279 = vcmp.eq.s32.totalorder %v21, %v251
  %vm280 = vcmp.eq.s32.totalorder %v21, %v252
  %vm281 = vcmp.eq.s32.totalorder %v21, %v253
  %vm282 = vcmp.eq.s32.totalorder %v21, %v254
  %vm283 = vcmp.eq.s32.totalorder %v21, %v255
  %vm284 = vcmp.eq.s32.totalorder %v21, %v256
  %v285 = vsel %vm257, 1, 0
  %v286 = vsel %vm258, 1, 0
  %v287 = vsel %vm259, 1, 0
  %v288 = vsel %vm260, 1, 0
  %v289 = vsel %vm261, 1, 0
  %v290 = vsel %vm262, 1, 0
  %v291 = vsel %vm263, 1, 0
  %v292 = vsel %vm264, 1, 0
  %v293 = vsel %vm265, 1, 0
  %v294 = vsel %vm266, 1, 0
  %v295 = vsel %vm267, 1, 0
  %v296 = vsel %vm268, 1, 0
  %v297 = vsel %vm269, 1, 0
  %v298 = vsel %vm270, 1, 0
  %v299 = vsel %vm271, 1, 0
  %v300 = vsel %vm272, 1, 0
  %v301 = vsel %vm273, 1, 0
  %v302 = vsel %vm274, 1, 0
  %v303 = vsel %vm275, 1, 0
  %v304 = vsel %vm276, 1, 0
  %v305 = vsel %vm277, 1, 0
  %v306 = vsel %vm278, 1, 0
  %v307 = vsel %vm279, 1, 0
  %v308 = vsel %vm280, 1, 0
  %v309 = vsel %vm281, 1, 0
  %v310 = vsel %vm282, 1, 0
  %v311 = vsel %vm283, 1, 0
  %v312 = vsel %vm284, 1, 0
  %v313 = vcvt.s32.f32 %v285
  %v314 = vcvt.s32.f32 %v286
  %v315 = vcvt.s32.f32 %v287
  %v316 = vcvt.s32.f32 %v288
  %v317 = vcvt.s32.f32 %v289
  %v318 = vcvt.s32.f32 %v290
  %v319 = vcvt.s32.f32 %v291
  %v320 = vcvt.s32.f32 %v292
  %v321 = vcvt.s32.f32 %v293
  %v322 = vcvt.s32.f32 %v294
  %v323 = vcvt.s32.f32 %v295
  %v324 = vcvt.s32.f32 %v296
  %v325 = vcvt.s32.f32 %v297
  %v326 = vcvt.s32.f32 %v298
  %v327 = vcvt.s32.f32 %v299
  %v328 = vcvt.s32.f32 %v300
  %v329 = vcvt.s32.f32 %v301
  %v330 = vcvt.s32.f32 %v302
  %v331 = vcvt.s32.f32 %v303
  %v332 = vcvt.s32.f32 %v304
  %v333 = vcvt.s32.f32 %v305
  %v334 = vcvt.s32.f32 %v306
  %v335 = vcvt.s32.f32 %v307
  %v336 = vcvt.s32.f32 %v308
  %v337 = vcvt.s32.f32 %v309
  %v338 = vcvt.s32.f32 %v310
  %v339 = vcvt.s32.f32 %v311
  %v340 = vcvt.s32.f32 %v312
  %v341 = vperm.slane %v232, 0
  %v342 = vperm.slane %v233, 0
  %v343 = vperm.slane %v234, 0
  %v344 = vperm.slane %v235, 0
  %v345 = vperm.slane %v236, 0
  %v346 = vperm.slane %v237, 0
  %v347 = vperm.slane %v238, 0
  %vm348 = vcmp.eq.s32.totalorder %v18, %v341
  %vm349 = vcmp.eq.s32.totalorder %v18, %v342
  %vm350 = vcmp.eq.s32.totalorder %v18, %v343
  %vm351 = vcmp.eq.s32.totalorder %v18, %v344
  %vm352 = vcmp.eq.s32.totalorder %v18, %v345
  %vm353 = vcmp.eq.s32.totalorder %v18, %v346
  %vm354 = vcmp.eq.s32.totalorder %v18, %v347
  %vm355 = vcmp.eq.s32.totalorder %v19, %v341
  %vm356 = vcmp.eq.s32.totalorder %v19, %v342
  %vm357 = vcmp.eq.s32.totalorder %v19, %v343
  %vm358 = vcmp.eq.s32.totalorder %v19, %v344
  %vm359 = vcmp.eq.s32.totalorder %v19, %v345
  %vm360 = vcmp.eq.s32.totalorder %v19, %v346
  %vm361 = vcmp.eq.s32.totalorder %v19, %v347
  %vm362 = vcmp.eq.s32.totalorder %v20, %v341
  %vm363 = vcmp.eq.s32.totalorder %v20, %v342
  %vm364 = vcmp.eq.s32.totalorder %v20, %v343
  %vm365 = vcmp.eq.s32.totalorder %v20, %v344
  %vm366 = vcmp.eq.s32.totalorder %v20, %v345
  %vm367 = vcmp.eq.s32.totalorder %v20, %v346
  %vm368 = vcmp.eq.s32.totalorder %v20, %v347
  %vm369 = vcmp.eq.s32.totalorder %v21, %v341
  %vm370 = vcmp.eq.s32.totalorder %v21, %v342
  %vm371 = vcmp.eq.s32.totalorder %v21, %v343
  %vm372 = vcmp.eq.s32.totalorder %v21, %v344
  %vm373 = vcmp.eq.s32.totalorder %v21, %v345
  %vm374 = vcmp.eq.s32.totalorder %v21, %v346
  %vm375 = vcmp.eq.s32.totalorder %v21, %v347
  %v376 = vsel %vm348, 1, 0
  %v377 = vsel %vm349, 1, 0
  %v378 = vsel %vm350, 1, 0
  %v379 = vsel %vm351, 1, 0
  %v380 = vsel %vm352, 1, 0
  %v381 = vsel %vm353, 1, 0
  %v382 = vsel %vm354, 1, 0
  %v383 = vsel %vm355, 1, 0
  %v384 = vsel %vm356, 1, 0
  %v385 = vsel %vm357, 1, 0
  %v386 = vsel %vm358, 1, 0
  %v387 = vsel %vm359, 1, 0
  %v388 = vsel %vm360, 1, 0
  %v389 = vsel %vm361, 1, 0
  %v390 = vsel %vm362, 1, 0
  %v391 = vsel %vm363, 1, 0
  %v392 = vsel %vm364, 1, 0
  %v393 = vsel %vm365, 1, 0
  %v394 = vsel %vm366, 1, 0
  %v395 = vsel %vm367, 1, 0
  %v396 = vsel %vm368, 1, 0
  %v397 = vsel %vm369, 1, 0
  %v398 = vsel %vm370, 1, 0
  %v399 = vsel %vm371, 1, 0
  %v400 = vsel %vm372, 1, 0
  %v401 = vsel %vm373, 1, 0
  %v402 = vsel %vm374, 1, 0
  %v403 = vsel %vm375, 1, 0
  %v404 = vcvt.s32.f32 %v376
  %v405 = vcvt.s32.f32 %v377
  %v406 = vcvt.s32.f32 %v378
  %v407 = vcvt.s32.f32 %v379
  %v408 = vcvt.s32.f32 %v380
  %v409 = vcvt.s32.f32 %v381
  %v410 = vcvt.s32.f32 %v382
  %v411 = vcvt.s32.f32 %v383
  %v412 = vcvt.s32.f32 %v384
  %v413 = vcvt.s32.f32 %v385
  %v414 = vcvt.s32.f32 %v386
  %v415 = vcvt.s32.f32 %v387
  %v416 = vcvt.s32.f32 %v388
  %v417 = vcvt.s32.f32 %v389
  %v418 = vcvt.s32.f32 %v390
  %v419 = vcvt.s32.f32 %v391
  %v420 = vcvt.s32.f32 %v392
  %v421 = vcvt.s32.f32 %v393
  %v422 = vcvt.s32.f32 %v394
  %v423 = vcvt.s32.f32 %v395
  %v424 = vcvt.s32.f32 %v396
  %v425 = vcvt.s32.f32 %v397
  %v426 = vcvt.s32.f32 %v398
  %v427 = vcvt.s32.f32 %v399
  %v428 = vcvt.s32.f32 %v400
  %v429 = vcvt.s32.f32 %v401
  %v430 = vcvt.s32.f32 %v402
  %v431 = vcvt.s32.f32 %v403
  %vm432 = vcmask 228352
  %v434 = vsel %vm432, %v246, 0
  %v437 = vsel %vm432, %v247, 0
  %v440 = vsel %vm432, %v248, 0
  %v443 = vsel %vm432, %v249, 0
  %vm445 = vcmask 1043456
  %v447 = vsel %vm445, %v334, 0
  %v450 = vsel %vm445, %v335, 0
  %v453 = vsel %vm445, %v336, 0
  %v456 = vsel %vm445, %v337, 0
  %v459 = vsel %vm445, %v338, 0
  %v462 = vsel %vm445, %v339, 0
  %v465 = vsel %vm445, %v340, 0
  %467 = vmatpush.msra.mxu0 0.0
  %468 = vmatpush.msra.mxu0 0.0
  %469 = vmatpush.msra.mxu0 0.0
  %470 = vmatpush.msra.mxu0 0.0
  %471 = vmatpush.msra.mxu0 0.0
  %472 = vmatpush.msra.mxu0 0.0
  %473 = vmatpush.msra.mxu0 0.0
  %474 = vmatpush.msra.mxu0 0.0
  %475 = vmatpush.msra.mxu0 0.0
  %476 = vmatpush.msra.mxu0 0.0
  %477 = vmatpush.msra.mxu0 0.0
  %478 = vmatpush.msra.mxu0 0.0
  %479 = vmatpush.msra.mxu0 %v447
  %480 = vmatpush.msra.mxu0 %v327
  %481 = vmatpush.msra.mxu0 %v320
  %482 = vmatpush.msra.mxu0 %v313
  %483 = vmatmul.f32.gmra.mxu0 %v434
  %v484 = vpop.f32.mrf.mxu0
  %v485 = vadd.f32 0.0, %v484
  %486 = vmatmul.f32.gmra.mxu0 %v437
  %v487 = vpop.f32.mrf.mxu0
  %v488 = vadd.f32 0.0, %v487
  %489 = vmatmul.f32.gmra.mxu0 %v440
  %v490 = vpop.f32.mrf.mxu0
  %v491 = vadd.f32 0.0, %v490
  %492 = vmatmul.f32.gmra.mxu0 %v443
  %v493 = vpop.f32.mrf.mxu0
  %v494 = vadd.f32 0.0, %v493
  %495 = vdwg.mxu0
  %496 = vmatpush.msra.mxu0 0.0
  %497 = vmatpush.msra.mxu0 0.0
  %498 = vmatpush.msra.mxu0 0.0
  %499 = vmatpush.msra.mxu0 0.0
  %500 = vmatpush.msra.mxu0 0.0
  %501 = vmatpush.msra.mxu0 0.0
  %502 = vmatpush.msra.mxu0 0.0
  %503 = vmatpush.msra.mxu0 0.0
  %504 = vmatpush.msra.mxu0 0.0
  %505 = vmatpush.msra.mxu0 0.0
  %506 = vmatpush.msra.mxu0 0.0
  %507 = vmatpush.msra.mxu0 0.0
  %508 = vmatpush.msra.mxu0 %v450
  %509 = vmatpush.msra.mxu0 %v328
  %510 = vmatpush.msra.mxu0 %v321
  %511 = vmatpush.msra.mxu0 %v314
  %512 = vmatmul.f32.gmra.mxu0 %v434
  %v513 = vpop.f32.mrf.mxu0
  %v514 = vadd.f32 0.0, %v513
  %515 = vmatmul.f32.gmra.mxu0 %v437
  %v516 = vpop.f32.mrf.mxu0
  %v517 = vadd.f32 0.0, %v516
  %518 = vmatmul.f32.gmra.mxu0 %v440
  %v519 = vpop.f32.mrf.mxu0
  %v520 = vadd.f32 0.0, %v519
  %521 = vmatmul.f32.gmra.mxu0 %v443
  %v522 = vpop.f32.mrf.mxu0
  %v523 = vadd.f32 0.0, %v522
  %524 = vdwg.mxu0
  %525 = vmatpush.msra.mxu0 0.0
  %526 = vmatpush.msra.mxu0 0.0
  %527 = vmatpush.msra.mxu0 0.0
  %528 = vmatpush.msra.mxu0 0.0
  %529 = vmatpush.msra.mxu0 0.0
  %530 = vmatpush.msra.mxu0 0.0
  %531 = vmatpush.msra.mxu0 0.0
  %532 = vmatpush.msra.mxu0 0.0
  %533 = vmatpush.msra.mxu0 0.0
  %534 = vmatpush.msra.mxu0 0.0
  %535 = vmatpush.msra.mxu0 0.0
  %536 = vmatpush.msra.mxu0 0.0
  %537 = vmatpush.msra.mxu0 %v453
  %538 = vmatpush.msra.mxu0 %v329
  %539 = vmatpush.msra.mxu0 %v322
  %540 = vmatpush.msra.mxu0 %v315
  %541 = vmatmul.f32.gmra.mxu0 %v434
  %v542 = vpop.f32.mrf.mxu0
  %v543 = vadd.f32 0.0, %v542
  %544 = vmatmul.f32.gmra.mxu0 %v437
  %v545 = vpop.f32.mrf.mxu0
  %v546 = vadd.f32 0.0, %v545
  %547 = vmatmul.f32.gmra.mxu0 %v440
  %v548 = vpop.f32.mrf.mxu0
  %v549 = vadd.f32 0.0, %v548
  %550 = vmatmul.f32.gmra.mxu0 %v443
  %v551 = vpop.f32.mrf.mxu0
  %v552 = vadd.f32 0.0, %v551
  %553 = vdwg.mxu0
  %554 = vmatpush.msra.mxu0 0.0
  %555 = vmatpush.msra.mxu0 0.0
  %556 = vmatpush.msra.mxu0 0.0
  %557 = vmatpush.msra.mxu0 0.0
  %558 = vmatpush.msra.mxu0 0.0
  %559 = vmatpush.msra.mxu0 0.0
  %560 = vmatpush.msra.mxu0 0.0
  %561 = vmatpush.msra.mxu0 0.0
  %562 = vmatpush.msra.mxu0 0.0
  %563 = vmatpush.msra.mxu0 0.0
  %564 = vmatpush.msra.mxu0 0.0
  %565 = vmatpush.msra.mxu0 0.0
  %566 = vmatpush.msra.mxu0 %v456
  %567 = vmatpush.msra.mxu0 %v330
  %568 = vmatpush.msra.mxu0 %v323
  %569 = vmatpush.msra.mxu0 %v316
  %570 = vmatmul.f32.gmra.mxu0 %v434
  %v571 = vpop.f32.mrf.mxu0
  %v572 = vadd.f32 0.0, %v571
  %573 = vmatmul.f32.gmra.mxu0 %v437
  %v574 = vpop.f32.mrf.mxu0
  %v575 = vadd.f32 0.0, %v574
  %576 = vmatmul.f32.gmra.mxu0 %v440
  %v577 = vpop.f32.mrf.mxu0
  %v578 = vadd.f32 0.0, %v577
  %579 = vmatmul.f32.gmra.mxu0 %v443
  %v580 = vpop.f32.mrf.mxu0
  %v581 = vadd.f32 0.0, %v580
  %582 = vdwg.mxu0
  %583 = vmatpush.msra.mxu0 0.0
  %584 = vmatpush.msra.mxu0 0.0
  %585 = vmatpush.msra.mxu0 0.0
  %586 = vmatpush.msra.mxu0 0.0
  %587 = vmatpush.msra.mxu0 0.0
  %588 = vmatpush.msra.mxu0 0.0
  %589 = vmatpush.msra.mxu0 0.0
  %590 = vmatpush.msra.mxu0 0.0
  %591 = vmatpush.msra.mxu0 0.0
  %592 = vmatpush.msra.mxu0 0.0
  %593 = vmatpush.msra.mxu0 0.0
  %594 = vmatpush.msra.mxu0 0.0
  %595 = vmatpush.msra.mxu0 %v459
  %596 = vmatpush.msra.mxu0 %v331
  %597 = vmatpush.msra.mxu0 %v324
  %598 = vmatpush.msra.mxu0 %v317
  %599 = vmatmul.f32.gmra.mxu0 %v434
  %v600 = vpop.f32.mrf.mxu0
  %v601 = vadd.f32 0.0, %v600
  %602 = vmatmul.f32.gmra.mxu0 %v437
  %v603 = vpop.f32.mrf.mxu0
  %v604 = vadd.f32 0.0, %v603
  %605 = vmatmul.f32.gmra.mxu0 %v440
  %v606 = vpop.f32.mrf.mxu0
  %v607 = vadd.f32 0.0, %v606
  %608 = vmatmul.f32.gmra.mxu0 %v443
  %v609 = vpop.f32.mrf.mxu0
  %v610 = vadd.f32 0.0, %v609
  %611 = vdwg.mxu0
  %612 = vmatpush.msra.mxu0 0.0
  %613 = vmatpush.msra.mxu0 0.0
  %614 = vmatpush.msra.mxu0 0.0
  %615 = vmatpush.msra.mxu0 0.0
  %616 = vmatpush.msra.mxu0 0.0
  %617 = vmatpush.msra.mxu0 0.0
  %618 = vmatpush.msra.mxu0 0.0
  %619 = vmatpush.msra.mxu0 0.0
  %620 = vmatpush.msra.mxu0 0.0
  %621 = vmatpush.msra.mxu0 0.0
  %622 = vmatpush.msra.mxu0 0.0
  %623 = vmatpush.msra.mxu0 0.0
  %624 = vmatpush.msra.mxu0 %v462
  %625 = vmatpush.msra.mxu0 %v332
  %626 = vmatpush.msra.mxu0 %v325
  %627 = vmatpush.msra.mxu0 %v318
  %628 = vmatmul.f32.gmra.mxu0 %v434
  %v629 = vpop.f32.mrf.mxu0
  %v630 = vadd.f32 0.0, %v629
  %631 = vmatmul.f32.gmra.mxu0 %v437
  %v632 = vpop.f32.mrf.mxu0
  %v633 = vadd.f32 0.0, %v632
  %634 = vmatmul.f32.gmra.mxu0 %v440
  %v635 = vpop.f32.mrf.mxu0
  %v636 = vadd.f32 0.0, %v635
  %637 = vmatmul.f32.gmra.mxu0 %v443
  %v638 = vpop.f32.mrf.mxu0
  %v639 = vadd.f32 0.0, %v638
  %640 = vdwg.mxu0
  %641 = vmatpush.msra.mxu0 0.0
  %642 = vmatpush.msra.mxu0 0.0
  %643 = vmatpush.msra.mxu0 0.0
  %644 = vmatpush.msra.mxu0 0.0
  %645 = vmatpush.msra.mxu0 0.0
  %646 = vmatpush.msra.mxu0 0.0
  %647 = vmatpush.msra.mxu0 0.0
  %648 = vmatpush.msra.mxu0 0.0
  %649 = vmatpush.msra.mxu0 0.0
  %650 = vmatpush.msra.mxu0 0.0
  %651 = vmatpush.msra.mxu0 0.0
  %652 = vmatpush.msra.mxu0 0.0
  %653 = vmatpush.msra.mxu0 %v465
  %654 = vmatpush.msra.mxu0 %v333
  %655 = vmatpush.msra.mxu0 %v326
  %656 = vmatpush.msra.mxu0 %v319
  %657 = vmatmul.f32.gmra.mxu0 %v434
  %v658 = vpop.f32.mrf.mxu0
  %v659 = vadd.f32 0.0, %v658
  %660 = vmatmul.f32.gmra.mxu0 %v437
  %v661 = vpop.f32.mrf.mxu0
  %v662 = vadd.f32 0.0, %v661
  %663 = vmatmul.f32.gmra.mxu0 %v440
  %v664 = vpop.f32.mrf.mxu0
  %v665 = vadd.f32 0.0, %v664
  %666 = vmatmul.f32.gmra.mxu0 %v443
  %v667 = vpop.f32.mrf.mxu0
  %v668 = vadd.f32 0.0, %v667
  %669 = vdwg.mxu0
  %v671 = vsel %vm445, %v425, 0
  %v674 = vsel %vm445, %v426, 0
  %v677 = vsel %vm445, %v427, 0
  %v680 = vsel %vm445, %v428, 0
  %v683 = vsel %vm445, %v429, 0
  %v686 = vsel %vm445, %v430, 0
  %v689 = vsel %vm445, %v431, 0
  %691 = vmatpush.msra.mxu0 0.0
  %692 = vmatpush.msra.mxu0 0.0
  %693 = vmatpush.msra.mxu0 0.0
  %694 = vmatpush.msra.mxu0 0.0
  %695 = vmatpush.msra.mxu0 0.0
  %696 = vmatpush.msra.mxu0 0.0
  %697 = vmatpush.msra.mxu0 0.0
  %698 = vmatpush.msra.mxu0 0.0
  %699 = vmatpush.msra.mxu0 0.0
  %700 = vmatpush.msra.mxu0 0.0
  %701 = vmatpush.msra.mxu0 0.0
  %702 = vmatpush.msra.mxu0 0.0
  %703 = vmatpush.msra.mxu0 %v671
  %704 = vmatpush.msra.mxu0 %v418
  %705 = vmatpush.msra.mxu0 %v411
  %706 = vmatpush.msra.mxu0 %v404
  %707 = vmatmul.f32.gmra.mxu0 %v434
  %v708 = vpop.f32.mrf.mxu0
  %v709 = vadd.f32 0.0, %v708
  %710 = vmatmul.f32.gmra.mxu0 %v437
  %v711 = vpop.f32.mrf.mxu0
  %v712 = vadd.f32 0.0, %v711
  %713 = vmatmul.f32.gmra.mxu0 %v440
  %v714 = vpop.f32.mrf.mxu0
  %v715 = vadd.f32 0.0, %v714
  %716 = vmatmul.f32.gmra.mxu0 %v443
  %v717 = vpop.f32.mrf.mxu0
  %v718 = vadd.f32 0.0, %v717
  %719 = vdwg.mxu0
  %720 = vmatpush.msra.mxu0 0.0
  %721 = vmatpush.msra.mxu0 0.0
  %722 = vmatpush.msra.mxu0 0.0
  %723 = vmatpush.msra.mxu0 0.0
  %724 = vmatpush.msra.mxu0 0.0
  %725 = vmatpush.msra.mxu0 0.0
  %726 = vmatpush.msra.mxu0 0.0
  %727 = vmatpush.msra.mxu0 0.0
  %728 = vmatpush.msra.mxu0 0.0
  %729 = vmatpush.msra.mxu0 0.0
  %730 = vmatpush.msra.mxu0 0.0
  %731 = vmatpush.msra.mxu0 0.0
  %732 = vmatpush.msra.mxu0 %v674
  %733 = vmatpush.msra.mxu0 %v419
  %734 = vmatpush.msra.mxu0 %v412
  %735 = vmatpush.msra.mxu0 %v405
  %736 = vmatmul.f32.gmra.mxu0 %v434
  %v737 = vpop.f32.mrf.mxu0
  %v738 = vadd.f32 0.0, %v737
  %739 = vmatmul.f32.gmra.mxu0 %v437
  %v740 = vpop.f32.mrf.mxu0
  %v741 = vadd.f32 0.0, %v740
  %742 = vmatmul.f32.gmra.mxu0 %v440
  %v743 = vpop.f32.mrf.mxu0
  %v744 = vadd.f32 0.0, %v743
  %745 = vmatmul.f32.gmra.mxu0 %v443
  %v746 = vpop.f32.mrf.mxu0
  %v747 = vadd.f32 0.0, %v746
  %748 = vdwg.mxu0
  %749 = vmatpush.msra.mxu0 0.0
  %750 = vmatpush.msra.mxu0 0.0
  %751 = vmatpush.msra.mxu0 0.0
  %752 = vmatpush.msra.mxu0 0.0
  %753 = vmatpush.msra.mxu0 0.0
  %754 = vmatpush.msra.mxu0 0.0
  %755 = vmatpush.msra.mxu0 0.0
  %756 = vmatpush.msra.mxu0 0.0
  %757 = vmatpush.msra.mxu0 0.0
  %758 = vmatpush.msra.mxu0 0.0
  %759 = vmatpush.msra.mxu0 0.0
  %760 = vmatpush.msra.mxu0 0.0
  %761 = vmatpush.msra.mxu0 %v677
  %762 = vmatpush.msra.mxu0 %v420
  %763 = vmatpush.msra.mxu0 %v413
  %764 = vmatpush.msra.mxu0 %v406
  %765 = vmatmul.f32.gmra.mxu0 %v434
  %v766 = vpop.f32.mrf.mxu0
  %v767 = vadd.f32 0.0, %v766
  %768 = vmatmul.f32.gmra.mxu0 %v437
  %v769 = vpop.f32.mrf.mxu0
  %v770 = vadd.f32 0.0, %v769
  %771 = vmatmul.f32.gmra.mxu0 %v440
  %v772 = vpop.f32.mrf.mxu0
  %v773 = vadd.f32 0.0, %v772
  %774 = vmatmul.f32.gmra.mxu0 %v443
  %v775 = vpop.f32.mrf.mxu0
  %v776 = vadd.f32 0.0, %v775
  %777 = vdwg.mxu0
  %778 = vmatpush.msra.mxu0 0.0
  %779 = vmatpush.msra.mxu0 0.0
  %780 = vmatpush.msra.mxu0 0.0
  %781 = vmatpush.msra.mxu0 0.0
  %782 = vmatpush.msra.mxu0 0.0
  %783 = vmatpush.msra.mxu0 0.0
  %784 = vmatpush.msra.mxu0 0.0
  %785 = vmatpush.msra.mxu0 0.0
  %786 = vmatpush.msra.mxu0 0.0
  %787 = vmatpush.msra.mxu0 0.0
  %788 = vmatpush.msra.mxu0 0.0
  %789 = vmatpush.msra.mxu0 0.0
  %790 = vmatpush.msra.mxu0 %v680
  %791 = vmatpush.msra.mxu0 %v421
  %792 = vmatpush.msra.mxu0 %v414
  %793 = vmatpush.msra.mxu0 %v407
  %794 = vmatmul.f32.gmra.mxu0 %v434
  %v795 = vpop.f32.mrf.mxu0
  %v796 = vadd.f32 0.0, %v795
  %797 = vmatmul.f32.gmra.mxu0 %v437
  %v798 = vpop.f32.mrf.mxu0
  %v799 = vadd.f32 0.0, %v798
  %800 = vmatmul.f32.gmra.mxu0 %v440
  %v801 = vpop.f32.mrf.mxu0
  %v802 = vadd.f32 0.0, %v801
  %803 = vmatmul.f32.gmra.mxu0 %v443
  %v804 = vpop.f32.mrf.mxu0
  %v805 = vadd.f32 0.0, %v804
  %806 = vdwg.mxu0
  %807 = vmatpush.msra.mxu0 0.0
  %808 = vmatpush.msra.mxu0 0.0
  %809 = vmatpush.msra.mxu0 0.0
  %810 = vmatpush.msra.mxu0 0.0
  %811 = vmatpush.msra.mxu0 0.0
  %812 = vmatpush.msra.mxu0 0.0
  %813 = vmatpush.msra.mxu0 0.0
  %814 = vmatpush.msra.mxu0 0.0
  %815 = vmatpush.msra.mxu0 0.0
  %816 = vmatpush.msra.mxu0 0.0
  %817 = vmatpush.msra.mxu0 0.0
  %818 = vmatpush.msra.mxu0 0.0
  %819 = vmatpush.msra.mxu0 %v683
  %820 = vmatpush.msra.mxu0 %v422
  %821 = vmatpush.msra.mxu0 %v415
  %822 = vmatpush.msra.mxu0 %v408
  %823 = vmatmul.f32.gmra.mxu0 %v434
  %v824 = vpop.f32.mrf.mxu0
  %v825 = vadd.f32 0.0, %v824
  %826 = vmatmul.f32.gmra.mxu0 %v437
  %v827 = vpop.f32.mrf.mxu0
  %v828 = vadd.f32 0.0, %v827
  %829 = vmatmul.f32.gmra.mxu0 %v440
  %v830 = vpop.f32.mrf.mxu0
  %v831 = vadd.f32 0.0, %v830
  %832 = vmatmul.f32.gmra.mxu0 %v443
  %v833 = vpop.f32.mrf.mxu0
  %v834 = vadd.f32 0.0, %v833
  %835 = vdwg.mxu0
  %836 = vmatpush.msra.mxu0 0.0
  %837 = vmatpush.msra.mxu0 0.0
  %838 = vmatpush.msra.mxu0 0.0
  %839 = vmatpush.msra.mxu0 0.0
  %840 = vmatpush.msra.mxu0 0.0
  %841 = vmatpush.msra.mxu0 0.0
  %842 = vmatpush.msra.mxu0 0.0
  %843 = vmatpush.msra.mxu0 0.0
  %844 = vmatpush.msra.mxu0 0.0
  %845 = vmatpush.msra.mxu0 0.0
  %846 = vmatpush.msra.mxu0 0.0
  %847 = vmatpush.msra.mxu0 0.0
  %848 = vmatpush.msra.mxu0 %v686
  %849 = vmatpush.msra.mxu0 %v423
  %850 = vmatpush.msra.mxu0 %v416
  %851 = vmatpush.msra.mxu0 %v409
  %852 = vmatmul.f32.gmra.mxu0 %v434
  %v853 = vpop.f32.mrf.mxu0
  %v854 = vadd.f32 0.0, %v853
  %855 = vmatmul.f32.gmra.mxu0 %v437
  %v856 = vpop.f32.mrf.mxu0
  %v857 = vadd.f32 0.0, %v856
  %858 = vmatmul.f32.gmra.mxu0 %v440
  %v859 = vpop.f32.mrf.mxu0
  %v860 = vadd.f32 0.0, %v859
  %861 = vmatmul.f32.gmra.mxu0 %v443
  %v862 = vpop.f32.mrf.mxu0
  %v863 = vadd.f32 0.0, %v862
  %864 = vdwg.mxu0
  %865 = vmatpush.msra.mxu0 0.0
  %866 = vmatpush.msra.mxu0 0.0
  %867 = vmatpush.msra.mxu0 0.0
  %868 = vmatpush.msra.mxu0 0.0
  %869 = vmatpush.msra.mxu0 0.0
  %870 = vmatpush.msra.mxu0 0.0
  %871 = vmatpush.msra.mxu0 0.0
  %872 = vmatpush.msra.mxu0 0.0
  %873 = vmatpush.msra.mxu0 0.0
  %874 = vmatpush.msra.mxu0 0.0
  %875 = vmatpush.msra.mxu0 0.0
  %876 = vmatpush.msra.mxu0 0.0
  %877 = vmatpush.msra.mxu0 %v689
  %878 = vmatpush.msra.mxu0 %v424
  %879 = vmatpush.msra.mxu0 %v417
  %880 = vmatpush.msra.mxu0 %v410
  %881 = vmatmul.f32.gmra.mxu0 %v434
  %v882 = vpop.f32.mrf.mxu0
  %v883 = vadd.f32 0.0, %v882
  %884 = vmatmul.f32.gmra.mxu0 %v437
  %v885 = vpop.f32.mrf.mxu0
  %v886 = vadd.f32 0.0, %v885
  %887 = vmatmul.f32.gmra.mxu0 %v440
  %v888 = vpop.f32.mrf.mxu0
  %v889 = vadd.f32 0.0, %v888
  %890 = vmatmul.f32.gmra.mxu0 %v443
  %v891 = vpop.f32.mrf.mxu0
  %v892 = vadd.f32 0.0, %v891
  %893 = vdwg.mxu0
  %v894 = vsub.f32 %v709, %v485
  %v895 = vsub.f32 %v738, %v514
  %v896 = vsub.f32 %v767, %v543
  %v897 = vsub.f32 %v796, %v572
  %v898 = vsub.f32 %v825, %v601
  %v899 = vsub.f32 %v854, %v630
  %v900 = vsub.f32 %v883, %v659
  %v901 = vsub.f32 %v712, %v488
  %v902 = vsub.f32 %v741, %v517
  %v903 = vsub.f32 %v770, %v546
  %v904 = vsub.f32 %v799, %v575
  %v905 = vsub.f32 %v828, %v604
  %v906 = vsub.f32 %v857, %v633
  %v907 = vsub.f32 %v886, %v662
  %v908 = vsub.f32 %v715, %v491
  %v909 = vsub.f32 %v744, %v520
  %v910 = vsub.f32 %v773, %v549
  %v911 = vsub.f32 %v802, %v578
  %v912 = vsub.f32 %v831, %v607
  %v913 = vsub.f32 %v860, %v636
  %v914 = vsub.f32 %v889, %v665
  %v915 = vsub.f32 %v718, %v494
  %v916 = vsub.f32 %v747, %v523
  %v917 = vsub.f32 %v776, %v552
  %v918 = vsub.f32 %v805, %v581
  %v919 = vsub.f32 %v834, %v610
  %v920 = vsub.f32 %v863, %v639
  %v921 = vsub.f32 %v892, %v668
  %v922 = vperm.slane %v204, 0
  %v923 = vperm.slane %v205, 0
  %v924 = vperm.slane %v206, 0
  %v925 = vperm.slane %v207, 0
  %v926 = vperm.slane %v208, 0
  %v927 = vperm.slane %v209, 0
  %v928 = vperm.slane %v210, 0
  %v929 = vmul.f32 %v922, %v894
  %v930 = vmul.f32 %v923, %v895
  %v931 = vmul.f32 %v924, %v896
  %v932 = vmul.f32 %v925, %v897
  %v933 = vmul.f32 %v926, %v898
  %v934 = vmul.f32 %v927, %v899
  %v935 = vmul.f32 %v928, %v900
  %v936 = vmul.f32 %v922, %v901
  %v937 = vmul.f32 %v923, %v902
  %v938 = vmul.f32 %v924, %v903
  %v939 = vmul.f32 %v925, %v904
  %v940 = vmul.f32 %v926, %v905
  %v941 = vmul.f32 %v927, %v906
  %v942 = vmul.f32 %v928, %v907
  %v943 = vmul.f32 %v922, %v908
  %v944 = vmul.f32 %v923, %v909
  %v945 = vmul.f32 %v924, %v910
  %v946 = vmul.f32 %v925, %v911
  %v947 = vmul.f32 %v926, %v912
  %v948 = vmul.f32 %v927, %v913
  %v949 = vmul.f32 %v928, %v914
  %v950 = vmul.f32 %v922, %v915
  %v951 = vmul.f32 %v923, %v916
  %v952 = vmul.f32 %v924, %v917
  %v953 = vmul.f32 %v925, %v918
  %v954 = vmul.f32 %v926, %v919
  %v955 = vmul.f32 %v927, %v920
  %v956 = vmul.f32 %v928, %v921
  %v957 = vadd.f32 %v485, %v929
  %v958 = vadd.f32 %v514, %v930
  %v959 = vadd.f32 %v543, %v931
  %v960 = vadd.f32 %v572, %v932
  %v961 = vadd.f32 %v601, %v933
  %v962 = vadd.f32 %v630, %v934
  %v963 = vadd.f32 %v659, %v935
  %v964 = vadd.f32 %v488, %v936
  %v965 = vadd.f32 %v517, %v937
  %v966 = vadd.f32 %v546, %v938
  %v967 = vadd.f32 %v575, %v939
  %v968 = vadd.f32 %v604, %v940
  %v969 = vadd.f32 %v633, %v941
  %v970 = vadd.f32 %v662, %v942
  %v971 = vadd.f32 %v491, %v943
  %v972 = vadd.f32 %v520, %v944
  %v973 = vadd.f32 %v549, %v945
  %v974 = vadd.f32 %v578, %v946
  %v975 = vadd.f32 %v607, %v947
  %v976 = vadd.f32 %v636, %v948
  %v977 = vadd.f32 %v665, %v949
  %v978 = vadd.f32 %v494, %v950
  %v979 = vadd.f32 %v523, %v951
  %v980 = vadd.f32 %v552, %v952
  %v981 = vadd.f32 %v581, %v953
  %v982 = vadd.f32 %v610, %v954
  %v983 = vadd.f32 %v639, %v955
  %v984 = vadd.f32 %v668, %v956
  %v985 = vperm.slane %v225, 0
  %v986 = vperm.slane %v226, 0
  %v987 = vperm.slane %v227, 0
  %v988 = vperm.slane %v228, 0
  %v989 = vperm.slane %v229, 0
  %v990 = vperm.slane %v230, 0
  %v991 = vperm.slane %v231, 0
  %vm992 = vcmp.eq.s32.totalorder %v18, %v985
  %vm993 = vcmp.eq.s32.totalorder %v18, %v986
  %vm994 = vcmp.eq.s32.totalorder %v18, %v987
  %vm995 = vcmp.eq.s32.totalorder %v18, %v988
  %vm996 = vcmp.eq.s32.totalorder %v18, %v989
  %vm997 = vcmp.eq.s32.totalorder %v18, %v990
  %vm998 = vcmp.eq.s32.totalorder %v18, %v991
  %vm999 = vcmp.eq.s32.totalorder %v19, %v985
  %vm1000 = vcmp.eq.s32.totalorder %v19, %v986
  %vm1001 = vcmp.eq.s32.totalorder %v19, %v987
  %vm1002 = vcmp.eq.s32.totalorder %v19, %v988
  %vm1003 = vcmp.eq.s32.totalorder %v19, %v989
  %vm1004 = vcmp.eq.s32.totalorder %v19, %v990
  %vm1005 = vcmp.eq.s32.totalorder %v19, %v991
  %vm1006 = vcmp.eq.s32.totalorder %v20, %v985
  %vm1007 = vcmp.eq.s32.totalorder %v20, %v986
  %vm1008 = vcmp.eq.s32.totalorder %v20, %v987
  %vm1009 = vcmp.eq.s32.totalorder %v20, %v988
  %vm1010 = vcmp.eq.s32.totalorder %v20, %v989
  %vm1011 = vcmp.eq.s32.totalorder %v20, %v990
  %vm1012 = vcmp.eq.s32.totalorder %v20, %v991
  %vm1013 = vcmp.eq.s32.totalorder %v21, %v985
  %vm1014 = vcmp.eq.s32.totalorder %v21, %v986
  %vm1015 = vcmp.eq.s32.totalorder %v21, %v987
  %vm1016 = vcmp.eq.s32.totalorder %v21, %v988
  %vm1017 = vcmp.eq.s32.totalorder %v21, %v989
  %vm1018 = vcmp.eq.s32.totalorder %v21, %v990
  %vm1019 = vcmp.eq.s32.totalorder %v21, %v991
  %v1020 = vsel %vm992, 1, 0
  %v1021 = vsel %vm993, 1, 0
  %v1022 = vsel %vm994, 1, 0
  %v1023 = vsel %vm995, 1, 0
  %v1024 = vsel %vm996, 1, 0
  %v1025 = vsel %vm997, 1, 0
  %v1026 = vsel %vm998, 1, 0
  %v1027 = vsel %vm999, 1, 0
  %v1028 = vsel %vm1000, 1, 0
  %v1029 = vsel %vm1001, 1, 0
  %v1030 = vsel %vm1002, 1, 0
  %v1031 = vsel %vm1003, 1, 0
  %v1032 = vsel %vm1004, 1, 0
  %v1033 = vsel %vm1005, 1, 0
  %v1034 = vsel %vm1006, 1, 0
  %v1035 = vsel %vm1007, 1, 0
  %v1036 = vsel %vm1008, 1, 0
  %v1037 = vsel %vm1009, 1, 0
  %v1038 = vsel %vm1010, 1, 0
  %v1039 = vsel %vm1011, 1, 0
  %v1040 = vsel %vm1012, 1, 0
  %v1041 = vsel %vm1013, 1, 0
  %v1042 = vsel %vm1014, 1, 0
  %v1043 = vsel %vm1015, 1, 0
  %v1044 = vsel %vm1016, 1, 0
  %v1045 = vsel %vm1017, 1, 0
  %v1046 = vsel %vm1018, 1, 0
  %v1047 = vsel %vm1019, 1, 0
  %v1048 = vcvt.s32.f32 %v1020
  %v1049 = vcvt.s32.f32 %v1021
  %v1050 = vcvt.s32.f32 %v1022
  %v1051 = vcvt.s32.f32 %v1023
  %v1052 = vcvt.s32.f32 %v1024
  %v1053 = vcvt.s32.f32 %v1025
  %v1054 = vcvt.s32.f32 %v1026
  %v1055 = vcvt.s32.f32 %v1027
  %v1056 = vcvt.s32.f32 %v1028
  %v1057 = vcvt.s32.f32 %v1029
  %v1058 = vcvt.s32.f32 %v1030
  %v1059 = vcvt.s32.f32 %v1031
  %v1060 = vcvt.s32.f32 %v1032
  %v1061 = vcvt.s32.f32 %v1033
  %v1062 = vcvt.s32.f32 %v1034
  %v1063 = vcvt.s32.f32 %v1035
  %v1064 = vcvt.s32.f32 %v1036
  %v1065 = vcvt.s32.f32 %v1037
  %v1066 = vcvt.s32.f32 %v1038
  %v1067 = vcvt.s32.f32 %v1039
  %v1068 = vcvt.s32.f32 %v1040
  %v1069 = vcvt.s32.f32 %v1041
  %v1070 = vcvt.s32.f32 %v1042
  %v1071 = vcvt.s32.f32 %v1043
  %v1072 = vcvt.s32.f32 %v1044
  %v1073 = vcvt.s32.f32 %v1045
  %v1074 = vcvt.s32.f32 %v1046
  %v1075 = vcvt.s32.f32 %v1047
  %v1076 = vperm.slane %v239, 0
  %v1077 = vperm.slane %v240, 0
  %v1078 = vperm.slane %v241, 0
  %v1079 = vperm.slane %v242, 0
  %v1080 = vperm.slane %v243, 0
  %v1081 = vperm.slane %v244, 0
  %v1082 = vperm.slane %v245, 0
  %vm1083 = vcmp.eq.s32.totalorder %v18, %v1076
  %vm1084 = vcmp.eq.s32.totalorder %v18, %v1077
  %vm1085 = vcmp.eq.s32.totalorder %v18, %v1078
  %vm1086 = vcmp.eq.s32.totalorder %v18, %v1079
  %vm1087 = vcmp.eq.s32.totalorder %v18, %v1080
  %vm1088 = vcmp.eq.s32.totalorder %v18, %v1081
  %vm1089 = vcmp.eq.s32.totalorder %v18, %v1082
  %vm1090 = vcmp.eq.s32.totalorder %v19, %v1076
  %vm1091 = vcmp.eq.s32.totalorder %v19, %v1077
  %vm1092 = vcmp.eq.s32.totalorder %v19, %v1078
  %vm1093 = vcmp.eq.s32.totalorder %v19, %v1079
  %vm1094 = vcmp.eq.s32.totalorder %v19, %v1080
  %vm1095 = vcmp.eq.s32.totalorder %v19, %v1081
  %vm1096 = vcmp.eq.s32.totalorder %v19, %v1082
  %vm1097 = vcmp.eq.s32.totalorder %v20, %v1076
  %vm1098 = vcmp.eq.s32.totalorder %v20, %v1077
  %vm1099 = vcmp.eq.s32.totalorder %v20, %v1078
  %vm1100 = vcmp.eq.s32.totalorder %v20, %v1079
  %vm1101 = vcmp.eq.s32.totalorder %v20, %v1080
  %vm1102 = vcmp.eq.s32.totalorder %v20, %v1081
  %vm1103 = vcmp.eq.s32.totalorder %v20, %v1082
  %vm1104 = vcmp.eq.s32.totalorder %v21, %v1076
  %vm1105 = vcmp.eq.s32.totalorder %v21, %v1077
  %vm1106 = vcmp.eq.s32.totalorder %v21, %v1078
  %vm1107 = vcmp.eq.s32.totalorder %v21, %v1079
  %vm1108 = vcmp.eq.s32.totalorder %v21, %v1080
  %vm1109 = vcmp.eq.s32.totalorder %v21, %v1081
  %vm1110 = vcmp.eq.s32.totalorder %v21, %v1082
  %v1111 = vsel %vm1083, 1, 0
  %v1112 = vsel %vm1084, 1, 0
  %v1113 = vsel %vm1085, 1, 0
  %v1114 = vsel %vm1086, 1, 0
  %v1115 = vsel %vm1087, 1, 0
  %v1116 = vsel %vm1088, 1, 0
  %v1117 = vsel %vm1089, 1, 0
  %v1118 = vsel %vm1090, 1, 0
  %v1119 = vsel %vm1091, 1, 0
  %v1120 = vsel %vm1092, 1, 0
  %v1121 = vsel %vm1093, 1, 0
  %v1122 = vsel %vm1094, 1, 0
  %v1123 = vsel %vm1095, 1, 0
  %v1124 = vsel %vm1096, 1, 0
  %v1125 = vsel %vm1097, 1, 0
  %v1126 = vsel %vm1098, 1, 0
  %v1127 = vsel %vm1099, 1, 0
  %v1128 = vsel %vm1100, 1, 0
  %v1129 = vsel %vm1101, 1, 0
  %v1130 = vsel %vm1102, 1, 0
  %v1131 = vsel %vm1103, 1, 0
  %v1132 = vsel %vm1104, 1, 0
  %v1133 = vsel %vm1105, 1, 0
  %v1134 = vsel %vm1106, 1, 0
  %v1135 = vsel %vm1107, 1, 0
  %v1136 = vsel %vm1108, 1, 0
  %v1137 = vsel %vm1109, 1, 0
  %v1138 = vsel %vm1110, 1, 0
  %v1139 = vcvt.s32.f32 %v1111
  %v1140 = vcvt.s32.f32 %v1112
  %v1141 = vcvt.s32.f32 %v1113
  %v1142 = vcvt.s32.f32 %v1114
  %v1143 = vcvt.s32.f32 %v1115
  %v1144 = vcvt.s32.f32 %v1116
  %v1145 = vcvt.s32.f32 %v1117
  %v1146 = vcvt.s32.f32 %v1118
  %v1147 = vcvt.s32.f32 %v1119
  %v1148 = vcvt.s32.f32 %v1120
  %v1149 = vcvt.s32.f32 %v1121
  %v1150 = vcvt.s32.f32 %v1122
  %v1151 = vcvt.s32.f32 %v1123
  %v1152 = vcvt.s32.f32 %v1124
  %v1153 = vcvt.s32.f32 %v1125
  %v1154 = vcvt.s32.f32 %v1126
  %v1155 = vcvt.s32.f32 %v1127
  %v1156 = vcvt.s32.f32 %v1128
  %v1157 = vcvt.s32.f32 %v1129
  %v1158 = vcvt.s32.f32 %v1130
  %v1159 = vcvt.s32.f32 %v1131
  %v1160 = vcvt.s32.f32 %v1132
  %v1161 = vcvt.s32.f32 %v1133
  %v1162 = vcvt.s32.f32 %v1134
  %v1163 = vcvt.s32.f32 %v1135
  %v1164 = vcvt.s32.f32 %v1136
  %v1165 = vcvt.s32.f32 %v1137
  %v1166 = vcvt.s32.f32 %v1138
  %v1167 = vsub.f32 %v1139, %v1048
  %v1168 = vsub.f32 %v1140, %v1049
  %v1169 = vsub.f32 %v1141, %v1050
  %v1170 = vsub.f32 %v1142, %v1051
  %v1171 = vsub.f32 %v1143, %v1052
  %v1172 = vsub.f32 %v1144, %v1053
  %v1173 = vsub.f32 %v1145, %v1054
  %v1174 = vsub.f32 %v1146, %v1055
  %v1175 = vsub.f32 %v1147, %v1056
  %v1176 = vsub.f32 %v1148, %v1057
  %v1177 = vsub.f32 %v1149, %v1058
  %v1178 = vsub.f32 %v1150, %v1059
  %v1179 = vsub.f32 %v1151, %v1060
  %v1180 = vsub.f32 %v1152, %v1061
  %v1181 = vsub.f32 %v1153, %v1062
  %v1182 = vsub.f32 %v1154, %v1063
  %v1183 = vsub.f32 %v1155, %v1064
  %v1184 = vsub.f32 %v1156, %v1065
  %v1185 = vsub.f32 %v1157, %v1066
  %v1186 = vsub.f32 %v1158, %v1067
  %v1187 = vsub.f32 %v1159, %v1068
  %v1188 = vsub.f32 %v1160, %v1069
  %v1189 = vsub.f32 %v1161, %v1070
  %v1190 = vsub.f32 %v1162, %v1071
  %v1191 = vsub.f32 %v1163, %v1072
  %v1192 = vsub.f32 %v1164, %v1073
  %v1193 = vsub.f32 %v1165, %v1074
  %v1194 = vsub.f32 %v1166, %v1075
  %v1195 = vperm.slane %v211, 0
  %v1196 = vperm.slane %v212, 0
  %v1197 = vperm.slane %v213, 0
  %v1198 = vperm.slane %v214, 0
  %v1199 = vperm.slane %v215, 0
  %v1200 = vperm.slane %v216, 0
  %v1201 = vperm.slane %v217, 0
  %v1202 = vmul.f32 %v1195, %v1167
  %v1203 = vmul.f32 %v1196, %v1168
  %v1204 = vmul.f32 %v1197, %v1169
  %v1205 = vmul.f32 %v1198, %v1170
  %v1206 = vmul.f32 %v1199, %v1171
  %v1207 = vmul.f32 %v1200, %v1172
  %v1208 = vmul.f32 %v1201, %v1173
  %v1209 = vmul.f32 %v1195, %v1174
  %v1210 = vmul.f32 %v1196, %v1175
  %v1211 = vmul.f32 %v1197, %v1176
  %v1212 = vmul.f32 %v1198, %v1177
  %v1213 = vmul.f32 %v1199, %v1178
  %v1214 = vmul.f32 %v1200, %v1179
  %v1215 = vmul.f32 %v1201, %v1180
  %v1216 = vmul.f32 %v1195, %v1181
  %v1217 = vmul.f32 %v1196, %v1182
  %v1218 = vmul.f32 %v1197, %v1183
  %v1219 = vmul.f32 %v1198, %v1184
  %v1220 = vmul.f32 %v1199, %v1185
  %v1221 = vmul.f32 %v1200, %v1186
  %v1222 = vmul.f32 %v1201, %v1187
  %v1223 = vmul.f32 %v1195, %v1188
  %v1224 = vmul.f32 %v1196, %v1189
  %v1225 = vmul.f32 %v1197, %v1190
  %v1226 = vmul.f32 %v1198, %v1191
  %v1227 = vmul.f32 %v1199, %v1192
  %v1228 = vmul.f32 %v1200, %v1193
  %v1229 = vmul.f32 %v1201, %v1194
  %v1230 = vadd.f32 %v1048, %v1202
  %v1231 = vadd.f32 %v1049, %v1203
  %v1232 = vadd.f32 %v1050, %v1204
  %v1233 = vadd.f32 %v1051, %v1205
  %v1234 = vadd.f32 %v1052, %v1206
  %v1235 = vadd.f32 %v1053, %v1207
  %v1236 = vadd.f32 %v1054, %v1208
  %v1237 = vadd.f32 %v1055, %v1209
  %v1238 = vadd.f32 %v1056, %v1210
  %v1239 = vadd.f32 %v1057, %v1211
  %v1240 = vadd.f32 %v1058, %v1212
  %v1241 = vadd.f32 %v1059, %v1213
  %v1242 = vadd.f32 %v1060, %v1214
  %v1243 = vadd.f32 %v1061, %v1215
  %v1244 = vadd.f32 %v1062, %v1216
  %v1245 = vadd.f32 %v1063, %v1217
  %v1246 = vadd.f32 %v1064, %v1218
  %v1247 = vadd.f32 %v1065, %v1219
  %v1248 = vadd.f32 %v1066, %v1220
  %v1249 = vadd.f32 %v1067, %v1221
  %v1250 = vadd.f32 %v1068, %v1222
  %v1251 = vadd.f32 %v1069, %v1223
  %v1252 = vadd.f32 %v1070, %v1224
  %v1253 = vadd.f32 %v1071, %v1225
  %v1254 = vadd.f32 %v1072, %v1226
  %v1255 = vadd.f32 %v1073, %v1227
  %v1256 = vadd.f32 %v1074, %v1228
  %v1257 = vadd.f32 %v1075, %v1229
  %v1258 = vmul.f32 %v1230, %v957
  %v1259 = vmul.f32 %v1231, %v958
  %v1260 = vmul.f32 %v1232, %v959
  %v1261 = vmul.f32 %v1233, %v960
  %v1262 = vmul.f32 %v1234, %v961
  %v1263 = vmul.f32 %v1235, %v962
  %v1264 = vmul.f32 %v1236, %v963
  %v1265 = vmul.f32 %v1237, %v964
  %v1266 = vmul.f32 %v1238, %v965
  %v1267 = vmul.f32 %v1239, %v966
  %v1268 = vmul.f32 %v1240, %v967
  %v1269 = vmul.f32 %v1241, %v968
  %v1270 = vmul.f32 %v1242, %v969
  %v1271 = vmul.f32 %v1243, %v970
  %v1272 = vmul.f32 %v1244, %v971
  %v1273 = vmul.f32 %v1245, %v972
  %v1274 = vmul.f32 %v1246, %v973
  %v1275 = vmul.f32 %v1247, %v974
  %v1276 = vmul.f32 %v1248, %v975
  %v1277 = vmul.f32 %v1249, %v976
  %v1278 = vmul.f32 %v1250, %v977
  %v1279 = vmul.f32 %v1251, %v978
  %v1280 = vmul.f32 %v1252, %v979
  %v1281 = vmul.f32 %v1253, %v980
  %v1282 = vmul.f32 %v1254, %v981
  %v1283 = vmul.f32 %v1255, %v982
  %v1284 = vmul.f32 %v1256, %v983
  %v1285 = vmul.f32 %v1257, %v984
  %v1286 = vadd.f32 %v1258, %v1265
  %v1287 = vadd.f32 %v1286, %v1272
  %v1288 = vsel %vm445, %v1279, 0.0
  %v1289 = vadd.f32 %v1287, %v1288
  %v1290 = vrot.slane %v1289, 4
  %v1291 = vadd.f32 %v1289, %v1290
  %v1292 = vrot.slane %v1291, 2
  %v1293 = vadd.f32 %v1291, %v1292
  %v1294 = vrot.slane %v1293, 1
  %v1295 = vadd.f32 %v1293, %v1294
  %v1296 = vadd.f32 %v1259, %v1266
  %v1297 = vadd.f32 %v1296, %v1273
  %v1298 = vsel %vm445, %v1280, 0.0
  %v1299 = vadd.f32 %v1297, %v1298
  %v1300 = vrot.slane %v1299, 4
  %v1301 = vadd.f32 %v1299, %v1300
  %v1302 = vrot.slane %v1301, 2
  %v1303 = vadd.f32 %v1301, %v1302
  %v1304 = vrot.slane %v1303, 1
  %v1305 = vadd.f32 %v1303, %v1304
  %v1306 = vadd.f32 %v1260, %v1267
  %v1307 = vadd.f32 %v1306, %v1274
  %v1308 = vsel %vm445, %v1281, 0.0
  %v1309 = vadd.f32 %v1307, %v1308
  %v1310 = vrot.slane %v1309, 4
  %v1311 = vadd.f32 %v1309, %v1310
  %v1312 = vrot.slane %v1311, 2
  %v1313 = vadd.f32 %v1311, %v1312
  %v1314 = vrot.slane %v1313, 1
  %v1315 = vadd.f32 %v1313, %v1314
  %v1316 = vadd.f32 %v1261, %v1268
  %v1317 = vadd.f32 %v1316, %v1275
  %v1318 = vsel %vm445, %v1282, 0.0
  %v1319 = vadd.f32 %v1317, %v1318
  %v1320 = vrot.slane %v1319, 4
  %v1321 = vadd.f32 %v1319, %v1320
  %v1322 = vrot.slane %v1321, 2
  %v1323 = vadd.f32 %v1321, %v1322
  %v1324 = vrot.slane %v1323, 1
  %v1325 = vadd.f32 %v1323, %v1324
  %v1326 = vadd.f32 %v1262, %v1269
  %v1327 = vadd.f32 %v1326, %v1276
  %v1328 = vsel %vm445, %v1283, 0.0
  %v1329 = vadd.f32 %v1327, %v1328
  %v1330 = vrot.slane %v1329, 4
  %v1331 = vadd.f32 %v1329, %v1330
  %v1332 = vrot.slane %v1331, 2
  %v1333 = vadd.f32 %v1331, %v1332
  %v1334 = vrot.slane %v1333, 1
  %v1335 = vadd.f32 %v1333, %v1334
  %v1336 = vadd.f32 %v1263, %v1270
  %v1337 = vadd.f32 %v1336, %v1277
  %v1338 = vsel %vm445, %v1284, 0.0
  %v1339 = vadd.f32 %v1337, %v1338
  %v1340 = vrot.slane %v1339, 4
  %v1341 = vadd.f32 %v1339, %v1340
  %v1342 = vrot.slane %v1341, 2
  %v1343 = vadd.f32 %v1341, %v1342
  %v1344 = vrot.slane %v1343, 1
  %v1345 = vadd.f32 %v1343, %v1344
  %vm1346 = vcmask 130048
  %v1347 = vsel %vm1346, %v1264, 0.0
  %v1348 = vsel %vm1346, %v1271, 0.0
  %v1349 = vadd.f32 %v1347, %v1348
  %v1350 = vsel %vm1346, %v1278, 0.0
  %v1351 = vadd.f32 %v1349, %v1350
  %vm1352 = vcmask 125952
  %v1353 = vsel %vm1352, %v1285, 0.0
  %v1354 = vadd.f32 %v1351, %v1353
  %v1355 = vrot.slane %v1354, 4
  %v1356 = vadd.f32 %v1354, %v1355
  %v1357 = vrot.slane %v1356, 2
  %v1358 = vadd.f32 %v1356, %v1357
  %v1359 = vrot.slane %v1358, 1
  %v1360 = vadd.f32 %v1358, %v1359
  %v1368 = vrot.slane %v1305, 7
  %v1369 = vrot.slane %v1315, 6
  %v1370 = vrot.slane %v1325, 5
  %v1371 = vrot.slane %v1335, 4
  %v1372 = vrot.slane %v1345, 3
  %v1373 = vrot.slane %v1360, 2
  %vm1374 = vcmask 1040384
  %v1375 = vsel %vm1374, %v1295, %v1368
  %vm1376 = vcmask 1042434
  %v1377 = vsel %vm1376, %v1369, %v1370
  %vm1378 = vcmask 1041408
  %v1379 = vsel %vm1378, %v1375, %v1377
  %vm1380 = vcmask 1044484
  %v1381 = vsel %vm1380, %v1371, %v1372
  %vm1382 = vcmask 1045508
  %v1383 = vsel %vm1382, %v1381, %v1373
  %v1384 = vsel %vm445, %v1379, %v1383
  %v1386 = vlaneseq
  %vm1387 = vcmp.ge.s32.totalorder %v1386, 0
  %vm1388 = vcmp.lt.s32.totalorder %v1386, 784
  %vm1389 = vmand %vm1387, %vm1388
  %1390 = vst.msk [vmem:[%s3] sm:$0x7f] %vm1389, %v1384
  %s1391 = scalar_lea.vmem %s2, 32
  %v1392 = vld [vmem:[%s1391] sm:$0xff]
  %v1393 = vld [vmem:[%s1391 + $0x8] sm:$0xff]
  %v1394 = vld [vmem:[%s1391 + $0x10] sm:$0xff]
  %v1395 = vld [vmem:[%s1391 + $0x18] sm:$0xf]
  %v1396 = vperm.slane %v218, 1
  %v1397 = vperm.slane %v219, 1
  %v1398 = vperm.slane %v220, 1
  %v1399 = vperm.slane %v221, 1
  %v1400 = vperm.slane %v222, 1
  %v1401 = vperm.slane %v223, 1
  %v1402 = vperm.slane %v224, 1
  %vm1403 = vcmp.eq.s32.totalorder %v18, %v1396
  %vm1404 = vcmp.eq.s32.totalorder %v18, %v1397
  %vm1405 = vcmp.eq.s32.totalorder %v18, %v1398
  %vm1406 = vcmp.eq.s32.totalorder %v18, %v1399
  %vm1407 = vcmp.eq.s32.totalorder %v18, %v1400
  %vm1408 = vcmp.eq.s32.totalorder %v18, %v1401
  %vm1409 = vcmp.eq.s32.totalorder %v18, %v1402
  %vm1410 = vcmp.eq.s32.totalorder %v19, %v1396
  %vm1411 = vcmp.eq.s32.totalorder %v19, %v1397
  %vm1412 = vcmp.eq.s32.totalorder %v19, %v1398
  %vm1413 = vcmp.eq.s32.totalorder %v19, %v1399
  %vm1414 = vcmp.eq.s32.totalorder %v19, %v1400
  %vm1415 = vcmp.eq.s32.totalorder %v19, %v1401
  %vm1416 = vcmp.eq.s32.totalorder %v19, %v1402
  %vm1417 = vcmp.eq.s32.totalorder %v20, %v1396
  %vm1418 = vcmp.eq.s32.totalorder %v20, %v1397
  %vm1419 = vcmp.eq.s32.totalorder %v20, %v1398
  %vm1420 = vcmp.eq.s32.totalorder %v20, %v1399
  %vm1421 = vcmp.eq.s32.totalorder %v20, %v1400
  %vm1422 = vcmp.eq.s32.totalorder %v20, %v1401
  %vm1423 = vcmp.eq.s32.totalorder %v20, %v1402
  %vm1424 = vcmp.eq.s32.totalorder %v21, %v1396
  %vm1425 = vcmp.eq.s32.totalorder %v21, %v1397
  %vm1426 = vcmp.eq.s32.totalorder %v21, %v1398
  %vm1427 = vcmp.eq.s32.totalorder %v21, %v1399
  %vm1428 = vcmp.eq.s32.totalorder %v21, %v1400
  %vm1429 = vcmp.eq.s32.totalorder %v21, %v1401
  %vm1430 = vcmp.eq.s32.totalorder %v21, %v1402
  %v1431 = vsel %vm1403, 1, 0
  %v1432 = vsel %vm1404, 1, 0
  %v1433 = vsel %vm1405, 1, 0
  %v1434 = vsel %vm1406, 1, 0
  %v1435 = vsel %vm1407, 1, 0
  %v1436 = vsel %vm1408, 1, 0
  %v1437 = vsel %vm1409, 1, 0
  %v1438 = vsel %vm1410, 1, 0
  %v1439 = vsel %vm1411, 1, 0
  %v1440 = vsel %vm1412, 1, 0
  %v1441 = vsel %vm1413, 1, 0
  %v1442 = vsel %vm1414, 1, 0
  %v1443 = vsel %vm1415, 1, 0
  %v1444 = vsel %vm1416, 1, 0
  %v1445 = vsel %vm1417, 1, 0
  %v1446 = vsel %vm1418, 1, 0
  %v1447 = vsel %vm1419, 1, 0
  %v1448 = vsel %vm1420, 1, 0
  %v1449 = vsel %vm1421, 1, 0
  %v1450 = vsel %vm1422, 1, 0
  %v1451 = vsel %vm1423, 1, 0
  %v1452 = vsel %vm1424, 1, 0
  %v1453 = vsel %vm1425, 1, 0
  %v1454 = vsel %vm1426, 1, 0
  %v1455 = vsel %vm1427, 1, 0
  %v1456 = vsel %vm1428, 1, 0
  %v1457 = vsel %vm1429, 1, 0
  %v1458 = vsel %vm1430, 1, 0
  %v1459 = vcvt.s32.f32 %v1431
  %v1460 = vcvt.s32.f32 %v1432
  %v1461 = vcvt.s32.f32 %v1433
  %v1462 = vcvt.s32.f32 %v1434
  %v1463 = vcvt.s32.f32 %v1435
  %v1464 = vcvt.s32.f32 %v1436
  %v1465 = vcvt.s32.f32 %v1437
  %v1466 = vcvt.s32.f32 %v1438
  %v1467 = vcvt.s32.f32 %v1439
  %v1468 = vcvt.s32.f32 %v1440
  %v1469 = vcvt.s32.f32 %v1441
  %v1470 = vcvt.s32.f32 %v1442
  %v1471 = vcvt.s32.f32 %v1443
  %v1472 = vcvt.s32.f32 %v1444
  %v1473 = vcvt.s32.f32 %v1445
  %v1474 = vcvt.s32.f32 %v1446
  %v1475 = vcvt.s32.f32 %v1447
  %v1476 = vcvt.s32.f32 %v1448
  %v1477 = vcvt.s32.f32 %v1449
  %v1478 = vcvt.s32.f32 %v1450
  %v1479 = vcvt.s32.f32 %v1451
  %v1480 = vcvt.s32.f32 %v1452
  %v1481 = vcvt.s32.f32 %v1453
  %v1482 = vcvt.s32.f32 %v1454
  %v1483 = vcvt.s32.f32 %v1455
  %v1484 = vcvt.s32.f32 %v1456
  %v1485 = vcvt.s32.f32 %v1457
  %v1486 = vcvt.s32.f32 %v1458
  %v1487 = vperm.slane %v232, 1
  %v1488 = vperm.slane %v233, 1
  %v1489 = vperm.slane %v234, 1
  %v1490 = vperm.slane %v235, 1
  %v1491 = vperm.slane %v236, 1
  %v1492 = vperm.slane %v237, 1
  %v1493 = vperm.slane %v238, 1
  %vm1494 = vcmp.eq.s32.totalorder %v18, %v1487
  %vm1495 = vcmp.eq.s32.totalorder %v18, %v1488
  %vm1496 = vcmp.eq.s32.totalorder %v18, %v1489
  %vm1497 = vcmp.eq.s32.totalorder %v18, %v1490
  %vm1498 = vcmp.eq.s32.totalorder %v18, %v1491
  %vm1499 = vcmp.eq.s32.totalorder %v18, %v1492
  %vm1500 = vcmp.eq.s32.totalorder %v18, %v1493
  %vm1501 = vcmp.eq.s32.totalorder %v19, %v1487
  %vm1502 = vcmp.eq.s32.totalorder %v19, %v1488
  %vm1503 = vcmp.eq.s32.totalorder %v19, %v1489
  %vm1504 = vcmp.eq.s32.totalorder %v19, %v1490
  %vm1505 = vcmp.eq.s32.totalorder %v19, %v1491
  %vm1506 = vcmp.eq.s32.totalorder %v19, %v1492
  %vm1507 = vcmp.eq.s32.totalorder %v19, %v1493
  %vm1508 = vcmp.eq.s32.totalorder %v20, %v1487
  %vm1509 = vcmp.eq.s32.totalorder %v20, %v1488
  %vm1510 = vcmp.eq.s32.totalorder %v20, %v1489
  %vm1511 = vcmp.eq.s32.totalorder %v20, %v1490
  %vm1512 = vcmp.eq.s32.totalorder %v20, %v1491
  %vm1513 = vcmp.eq.s32.totalorder %v20, %v1492
  %vm1514 = vcmp.eq.s32.totalorder %v20, %v1493
  %vm1515 = vcmp.eq.s32.totalorder %v21, %v1487
  %vm1516 = vcmp.eq.s32.totalorder %v21, %v1488
  %vm1517 = vcmp.eq.s32.totalorder %v21, %v1489
  %vm1518 = vcmp.eq.s32.totalorder %v21, %v1490
  %vm1519 = vcmp.eq.s32.totalorder %v21, %v1491
  %vm1520 = vcmp.eq.s32.totalorder %v21, %v1492
  %vm1521 = vcmp.eq.s32.totalorder %v21, %v1493
  %v1522 = vsel %vm1494, 1, 0
  %v1523 = vsel %vm1495, 1, 0
  %v1524 = vsel %vm1496, 1, 0
  %v1525 = vsel %vm1497, 1, 0
  %v1526 = vsel %vm1498, 1, 0
  %v1527 = vsel %vm1499, 1, 0
  %v1528 = vsel %vm1500, 1, 0
  %v1529 = vsel %vm1501, 1, 0
  %v1530 = vsel %vm1502, 1, 0
  %v1531 = vsel %vm1503, 1, 0
  %v1532 = vsel %vm1504, 1, 0
  %v1533 = vsel %vm1505, 1, 0
  %v1534 = vsel %vm1506, 1, 0
  %v1535 = vsel %vm1507, 1, 0
  %v1536 = vsel %vm1508, 1, 0
  %v1537 = vsel %vm1509, 1, 0
  %v1538 = vsel %vm1510, 1, 0
  %v1539 = vsel %vm1511, 1, 0
  %v1540 = vsel %vm1512, 1, 0
  %v1541 = vsel %vm1513, 1, 0
  %v1542 = vsel %vm1514, 1, 0
  %v1543 = vsel %vm1515, 1, 0
  %v1544 = vsel %vm1516, 1, 0
  %v1545 = vsel %vm1517, 1, 0
  %v1546 = vsel %vm1518, 1, 0
  %v1547 = vsel %vm1519, 1, 0
  %v1548 = vsel %vm1520, 1, 0
  %v1549 = vsel %vm1521, 1, 0
  %v1550 = vcvt.s32.f32 %v1522
  %v1551 = vcvt.s32.f32 %v1523
  %v1552 = vcvt.s32.f32 %v1524
  %v1553 = vcvt.s32.f32 %v1525
  %v1554 = vcvt.s32.f32 %v1526
  %v1555 = vcvt.s32.f32 %v1527
  %v1556 = vcvt.s32.f32 %v1528
  %v1557 = vcvt.s32.f32 %v1529
  %v1558 = vcvt.s32.f32 %v1530
  %v1559 = vcvt.s32.f32 %v1531
  %v1560 = vcvt.s32.f32 %v1532
  %v1561 = vcvt.s32.f32 %v1533
  %v1562 = vcvt.s32.f32 %v1534
  %v1563 = vcvt.s32.f32 %v1535
  %v1564 = vcvt.s32.f32 %v1536
  %v1565 = vcvt.s32.f32 %v1537
  %v1566 = vcvt.s32.f32 %v1538
  %v1567 = vcvt.s32.f32 %v1539
  %v1568 = vcvt.s32.f32 %v1540
  %v1569 = vcvt.s32.f32 %v1541
  %v1570 = vcvt.s32.f32 %v1542
  %v1571 = vcvt.s32.f32 %v1543
  %v1572 = vcvt.s32.f32 %v1544
  %v1573 = vcvt.s32.f32 %v1545
  %v1574 = vcvt.s32.f32 %v1546
  %v1575 = vcvt.s32.f32 %v1547
  %v1576 = vcvt.s32.f32 %v1548
  %v1577 = vcvt.s32.f32 %v1549
  %v1579 = vsel %vm432, %v1392, 0
  %v1582 = vsel %vm432, %v1393, 0
  %v1585 = vsel %vm432, %v1394, 0
  %v1588 = vsel %vm432, %v1395, 0
  %v1591 = vsel %vm445, %v1480, 0
  %v1594 = vsel %vm445, %v1481, 0
  %v1597 = vsel %vm445, %v1482, 0
  %v1600 = vsel %vm445, %v1483, 0
  %v1603 = vsel %vm445, %v1484, 0
  %v1606 = vsel %vm445, %v1485, 0
  %v1609 = vsel %vm445, %v1486, 0
  %1611 = vmatpush.msra.mxu0 0.0
  %1612 = vmatpush.msra.mxu0 0.0
  %1613 = vmatpush.msra.mxu0 0.0
  %1614 = vmatpush.msra.mxu0 0.0
  %1615 = vmatpush.msra.mxu0 0.0
  %1616 = vmatpush.msra.mxu0 0.0
  %1617 = vmatpush.msra.mxu0 0.0
  %1618 = vmatpush.msra.mxu0 0.0
  %1619 = vmatpush.msra.mxu0 0.0
  %1620 = vmatpush.msra.mxu0 0.0
  %1621 = vmatpush.msra.mxu0 0.0
  %1622 = vmatpush.msra.mxu0 0.0
  %1623 = vmatpush.msra.mxu0 %v1591
  %1624 = vmatpush.msra.mxu0 %v1473
  %1625 = vmatpush.msra.mxu0 %v1466
  %1626 = vmatpush.msra.mxu0 %v1459
  %1627 = vmatmul.f32.gmra.mxu0 %v1579
  %v1628 = vpop.f32.mrf.mxu0
  %v1629 = vadd.f32 0.0, %v1628
  %1630 = vmatmul.f32.gmra.mxu0 %v1582
  %v1631 = vpop.f32.mrf.mxu0
  %v1632 = vadd.f32 0.0, %v1631
  %1633 = vmatmul.f32.gmra.mxu0 %v1585
  %v1634 = vpop.f32.mrf.mxu0
  %v1635 = vadd.f32 0.0, %v1634
  %1636 = vmatmul.f32.gmra.mxu0 %v1588
  %v1637 = vpop.f32.mrf.mxu0
  %v1638 = vadd.f32 0.0, %v1637
  %1639 = vdwg.mxu0
  %1640 = vmatpush.msra.mxu0 0.0
  %1641 = vmatpush.msra.mxu0 0.0
  %1642 = vmatpush.msra.mxu0 0.0
  %1643 = vmatpush.msra.mxu0 0.0
  %1644 = vmatpush.msra.mxu0 0.0
  %1645 = vmatpush.msra.mxu0 0.0
  %1646 = vmatpush.msra.mxu0 0.0
  %1647 = vmatpush.msra.mxu0 0.0
  %1648 = vmatpush.msra.mxu0 0.0
  %1649 = vmatpush.msra.mxu0 0.0
  %1650 = vmatpush.msra.mxu0 0.0
  %1651 = vmatpush.msra.mxu0 0.0
  %1652 = vmatpush.msra.mxu0 %v1594
  %1653 = vmatpush.msra.mxu0 %v1474
  %1654 = vmatpush.msra.mxu0 %v1467
  %1655 = vmatpush.msra.mxu0 %v1460
  %1656 = vmatmul.f32.gmra.mxu0 %v1579
  %v1657 = vpop.f32.mrf.mxu0
  %v1658 = vadd.f32 0.0, %v1657
  %1659 = vmatmul.f32.gmra.mxu0 %v1582
  %v1660 = vpop.f32.mrf.mxu0
  %v1661 = vadd.f32 0.0, %v1660
  %1662 = vmatmul.f32.gmra.mxu0 %v1585
  %v1663 = vpop.f32.mrf.mxu0
  %v1664 = vadd.f32 0.0, %v1663
  %1665 = vmatmul.f32.gmra.mxu0 %v1588
  %v1666 = vpop.f32.mrf.mxu0
  %v1667 = vadd.f32 0.0, %v1666
  %1668 = vdwg.mxu0
  %1669 = vmatpush.msra.mxu0 0.0
  %1670 = vmatpush.msra.mxu0 0.0
  %1671 = vmatpush.msra.mxu0 0.0
  %1672 = vmatpush.msra.mxu0 0.0
  %1673 = vmatpush.msra.mxu0 0.0
  %1674 = vmatpush.msra.mxu0 0.0
  %1675 = vmatpush.msra.mxu0 0.0
  %1676 = vmatpush.msra.mxu0 0.0
  %1677 = vmatpush.msra.mxu0 0.0
  %1678 = vmatpush.msra.mxu0 0.0
  %1679 = vmatpush.msra.mxu0 0.0
  %1680 = vmatpush.msra.mxu0 0.0
  %1681 = vmatpush.msra.mxu0 %v1597
  %1682 = vmatpush.msra.mxu0 %v1475
  %1683 = vmatpush.msra.mxu0 %v1468
  %1684 = vmatpush.msra.mxu0 %v1461
  %1685 = vmatmul.f32.gmra.mxu0 %v1579
  %v1686 = vpop.f32.mrf.mxu0
  %v1687 = vadd.f32 0.0, %v1686
  %1688 = vmatmul.f32.gmra.mxu0 %v1582
  %v1689 = vpop.f32.mrf.mxu0
  %v1690 = vadd.f32 0.0, %v1689
  %1691 = vmatmul.f32.gmra.mxu0 %v1585
  %v1692 = vpop.f32.mrf.mxu0
  %v1693 = vadd.f32 0.0, %v1692
  %1694 = vmatmul.f32.gmra.mxu0 %v1588
  %v1695 = vpop.f32.mrf.mxu0
  %v1696 = vadd.f32 0.0, %v1695
  %1697 = vdwg.mxu0
  %1698 = vmatpush.msra.mxu0 0.0
  %1699 = vmatpush.msra.mxu0 0.0
  %1700 = vmatpush.msra.mxu0 0.0
  %1701 = vmatpush.msra.mxu0 0.0
  %1702 = vmatpush.msra.mxu0 0.0
  %1703 = vmatpush.msra.mxu0 0.0
  %1704 = vmatpush.msra.mxu0 0.0
  %1705 = vmatpush.msra.mxu0 0.0
  %1706 = vmatpush.msra.mxu0 0.0
  %1707 = vmatpush.msra.mxu0 0.0
  %1708 = vmatpush.msra.mxu0 0.0
  %1709 = vmatpush.msra.mxu0 0.0
  %1710 = vmatpush.msra.mxu0 %v1600
  %1711 = vmatpush.msra.mxu0 %v1476
  %1712 = vmatpush.msra.mxu0 %v1469
  %1713 = vmatpush.msra.mxu0 %v1462
  %1714 = vmatmul.f32.gmra.mxu0 %v1579
  %v1715 = vpop.f32.mrf.mxu0
  %v1716 = vadd.f32 0.0, %v1715
  %1717 = vmatmul.f32.gmra.mxu0 %v1582
  %v1718 = vpop.f32.mrf.mxu0
  %v1719 = vadd.f32 0.0, %v1718
  %1720 = vmatmul.f32.gmra.mxu0 %v1585
  %v1721 = vpop.f32.mrf.mxu0
  %v1722 = vadd.f32 0.0, %v1721
  %1723 = vmatmul.f32.gmra.mxu0 %v1588
  %v1724 = vpop.f32.mrf.mxu0
  %v1725 = vadd.f32 0.0, %v1724
  %1726 = vdwg.mxu0
  %1727 = vmatpush.msra.mxu0 0.0
  %1728 = vmatpush.msra.mxu0 0.0
  %1729 = vmatpush.msra.mxu0 0.0
  %1730 = vmatpush.msra.mxu0 0.0
  %1731 = vmatpush.msra.mxu0 0.0
  %1732 = vmatpush.msra.mxu0 0.0
  %1733 = vmatpush.msra.mxu0 0.0
  %1734 = vmatpush.msra.mxu0 0.0
  %1735 = vmatpush.msra.mxu0 0.0
  %1736 = vmatpush.msra.mxu0 0.0
  %1737 = vmatpush.msra.mxu0 0.0
  %1738 = vmatpush.msra.mxu0 0.0
  %1739 = vmatpush.msra.mxu0 %v1603
  %1740 = vmatpush.msra.mxu0 %v1477
  %1741 = vmatpush.msra.mxu0 %v1470
  %1742 = vmatpush.msra.mxu0 %v1463
  %1743 = vmatmul.f32.gmra.mxu0 %v1579
  %v1744 = vpop.f32.mrf.mxu0
  %v1745 = vadd.f32 0.0, %v1744
  %1746 = vmatmul.f32.gmra.mxu0 %v1582
  %v1747 = vpop.f32.mrf.mxu0
  %v1748 = vadd.f32 0.0, %v1747
  %1749 = vmatmul.f32.gmra.mxu0 %v1585
  %v1750 = vpop.f32.mrf.mxu0
  %v1751 = vadd.f32 0.0, %v1750
  %1752 = vmatmul.f32.gmra.mxu0 %v1588
  %v1753 = vpop.f32.mrf.mxu0
  %v1754 = vadd.f32 0.0, %v1753
  %1755 = vdwg.mxu0
  %1756 = vmatpush.msra.mxu0 0.0
  %1757 = vmatpush.msra.mxu0 0.0
  %1758 = vmatpush.msra.mxu0 0.0
  %1759 = vmatpush.msra.mxu0 0.0
  %1760 = vmatpush.msra.mxu0 0.0
  %1761 = vmatpush.msra.mxu0 0.0
  %1762 = vmatpush.msra.mxu0 0.0
  %1763 = vmatpush.msra.mxu0 0.0
  %1764 = vmatpush.msra.mxu0 0.0
  %1765 = vmatpush.msra.mxu0 0.0
  %1766 = vmatpush.msra.mxu0 0.0
  %1767 = vmatpush.msra.mxu0 0.0
  %1768 = vmatpush.msra.mxu0 %v1606
  %1769 = vmatpush.msra.mxu0 %v1478
  %1770 = vmatpush.msra.mxu0 %v1471
  %1771 = vmatpush.msra.mxu0 %v1464
  %1772 = vmatmul.f32.gmra.mxu0 %v1579
  %v1773 = vpop.f32.mrf.mxu0
  %v1774 = vadd.f32 0.0, %v1773
  %1775 = vmatmul.f32.gmra.mxu0 %v1582
  %v1776 = vpop.f32.mrf.mxu0
  %v1777 = vadd.f32 0.0, %v1776
  %1778 = vmatmul.f32.gmra.mxu0 %v1585
  %v1779 = vpop.f32.mrf.mxu0
  %v1780 = vadd.f32 0.0, %v1779
  %1781 = vmatmul.f32.gmra.mxu0 %v1588
  %v1782 = vpop.f32.mrf.mxu0
  %v1783 = vadd.f32 0.0, %v1782
  %1784 = vdwg.mxu0
  %1785 = vmatpush.msra.mxu0 0.0
  %1786 = vmatpush.msra.mxu0 0.0
  %1787 = vmatpush.msra.mxu0 0.0
  %1788 = vmatpush.msra.mxu0 0.0
  %1789 = vmatpush.msra.mxu0 0.0
  %1790 = vmatpush.msra.mxu0 0.0
  %1791 = vmatpush.msra.mxu0 0.0
  %1792 = vmatpush.msra.mxu0 0.0
  %1793 = vmatpush.msra.mxu0 0.0
  %1794 = vmatpush.msra.mxu0 0.0
  %1795 = vmatpush.msra.mxu0 0.0
  %1796 = vmatpush.msra.mxu0 0.0
  %1797 = vmatpush.msra.mxu0 %v1609
  %1798 = vmatpush.msra.mxu0 %v1479
  %1799 = vmatpush.msra.mxu0 %v1472
  %1800 = vmatpush.msra.mxu0 %v1465
  %1801 = vmatmul.f32.gmra.mxu0 %v1579
  %v1802 = vpop.f32.mrf.mxu0
  %v1803 = vadd.f32 0.0, %v1802
  %1804 = vmatmul.f32.gmra.mxu0 %v1582
  %v1805 = vpop.f32.mrf.mxu0
  %v1806 = vadd.f32 0.0, %v1805
  %1807 = vmatmul.f32.gmra.mxu0 %v1585
  %v1808 = vpop.f32.mrf.mxu0
  %v1809 = vadd.f32 0.0, %v1808
  %1810 = vmatmul.f32.gmra.mxu0 %v1588
  %v1811 = vpop.f32.mrf.mxu0
  %v1812 = vadd.f32 0.0, %v1811
  %1813 = vdwg.mxu0
  %v1815 = vsel %vm445, %v1571, 0
  %v1818 = vsel %vm445, %v1572, 0
  %v1821 = vsel %vm445, %v1573, 0
  %v1824 = vsel %vm445, %v1574, 0
  %v1827 = vsel %vm445, %v1575, 0
  %v1830 = vsel %vm445, %v1576, 0
  %v1833 = vsel %vm445, %v1577, 0
  %1835 = vmatpush.msra.mxu0 0.0
  %1836 = vmatpush.msra.mxu0 0.0
  %1837 = vmatpush.msra.mxu0 0.0
  %1838 = vmatpush.msra.mxu0 0.0
  %1839 = vmatpush.msra.mxu0 0.0
  %1840 = vmatpush.msra.mxu0 0.0
  %1841 = vmatpush.msra.mxu0 0.0
  %1842 = vmatpush.msra.mxu0 0.0
  %1843 = vmatpush.msra.mxu0 0.0
  %1844 = vmatpush.msra.mxu0 0.0
  %1845 = vmatpush.msra.mxu0 0.0
  %1846 = vmatpush.msra.mxu0 0.0
  %1847 = vmatpush.msra.mxu0 %v1815
  %1848 = vmatpush.msra.mxu0 %v1564
  %1849 = vmatpush.msra.mxu0 %v1557
  %1850 = vmatpush.msra.mxu0 %v1550
  %1851 = vmatmul.f32.gmra.mxu0 %v1579
  %v1852 = vpop.f32.mrf.mxu0
  %v1853 = vadd.f32 0.0, %v1852
  %1854 = vmatmul.f32.gmra.mxu0 %v1582
  %v1855 = vpop.f32.mrf.mxu0
  %v1856 = vadd.f32 0.0, %v1855
  %1857 = vmatmul.f32.gmra.mxu0 %v1585
  %v1858 = vpop.f32.mrf.mxu0
  %v1859 = vadd.f32 0.0, %v1858
  %1860 = vmatmul.f32.gmra.mxu0 %v1588
  %v1861 = vpop.f32.mrf.mxu0
  %v1862 = vadd.f32 0.0, %v1861
  %1863 = vdwg.mxu0
  %1864 = vmatpush.msra.mxu0 0.0
  %1865 = vmatpush.msra.mxu0 0.0
  %1866 = vmatpush.msra.mxu0 0.0
  %1867 = vmatpush.msra.mxu0 0.0
  %1868 = vmatpush.msra.mxu0 0.0
  %1869 = vmatpush.msra.mxu0 0.0
  %1870 = vmatpush.msra.mxu0 0.0
  %1871 = vmatpush.msra.mxu0 0.0
  %1872 = vmatpush.msra.mxu0 0.0
  %1873 = vmatpush.msra.mxu0 0.0
  %1874 = vmatpush.msra.mxu0 0.0
  %1875 = vmatpush.msra.mxu0 0.0
  %1876 = vmatpush.msra.mxu0 %v1818
  %1877 = vmatpush.msra.mxu0 %v1565
  %1878 = vmatpush.msra.mxu0 %v1558
  %1879 = vmatpush.msra.mxu0 %v1551
  %1880 = vmatmul.f32.gmra.mxu0 %v1579
  %v1881 = vpop.f32.mrf.mxu0
  %v1882 = vadd.f32 0.0, %v1881
  %1883 = vmatmul.f32.gmra.mxu0 %v1582
  %v1884 = vpop.f32.mrf.mxu0
  %v1885 = vadd.f32 0.0, %v1884
  %1886 = vmatmul.f32.gmra.mxu0 %v1585
  %v1887 = vpop.f32.mrf.mxu0
  %v1888 = vadd.f32 0.0, %v1887
  %1889 = vmatmul.f32.gmra.mxu0 %v1588
  %v1890 = vpop.f32.mrf.mxu0
  %v1891 = vadd.f32 0.0, %v1890
  %1892 = vdwg.mxu0
  %1893 = vmatpush.msra.mxu0 0.0
  %1894 = vmatpush.msra.mxu0 0.0
  %1895 = vmatpush.msra.mxu0 0.0
  %1896 = vmatpush.msra.mxu0 0.0
  %1897 = vmatpush.msra.mxu0 0.0
  %1898 = vmatpush.msra.mxu0 0.0
  %1899 = vmatpush.msra.mxu0 0.0
  %1900 = vmatpush.msra.mxu0 0.0
  %1901 = vmatpush.msra.mxu0 0.0
  %1902 = vmatpush.msra.mxu0 0.0
  %1903 = vmatpush.msra.mxu0 0.0
  %1904 = vmatpush.msra.mxu0 0.0
  %1905 = vmatpush.msra.mxu0 %v1821
  %1906 = vmatpush.msra.mxu0 %v1566
  %1907 = vmatpush.msra.mxu0 %v1559
  %1908 = vmatpush.msra.mxu0 %v1552
  %1909 = vmatmul.f32.gmra.mxu0 %v1579
  %v1910 = vpop.f32.mrf.mxu0
  %v1911 = vadd.f32 0.0, %v1910
  %1912 = vmatmul.f32.gmra.mxu0 %v1582
  %v1913 = vpop.f32.mrf.mxu0
  %v1914 = vadd.f32 0.0, %v1913
  %1915 = vmatmul.f32.gmra.mxu0 %v1585
  %v1916 = vpop.f32.mrf.mxu0
  %v1917 = vadd.f32 0.0, %v1916
  %1918 = vmatmul.f32.gmra.mxu0 %v1588
  %v1919 = vpop.f32.mrf.mxu0
  %v1920 = vadd.f32 0.0, %v1919
  %1921 = vdwg.mxu0
  %1922 = vmatpush.msra.mxu0 0.0
  %1923 = vmatpush.msra.mxu0 0.0
  %1924 = vmatpush.msra.mxu0 0.0
  %1925 = vmatpush.msra.mxu0 0.0
  %1926 = vmatpush.msra.mxu0 0.0
  %1927 = vmatpush.msra.mxu0 0.0
  %1928 = vmatpush.msra.mxu0 0.0
  %1929 = vmatpush.msra.mxu0 0.0
  %1930 = vmatpush.msra.mxu0 0.0
  %1931 = vmatpush.msra.mxu0 0.0
  %1932 = vmatpush.msra.mxu0 0.0
  %1933 = vmatpush.msra.mxu0 0.0
  %1934 = vmatpush.msra.mxu0 %v1824
  %1935 = vmatpush.msra.mxu0 %v1567
  %1936 = vmatpush.msra.mxu0 %v1560
  %1937 = vmatpush.msra.mxu0 %v1553
  %1938 = vmatmul.f32.gmra.mxu0 %v1579
  %v1939 = vpop.f32.mrf.mxu0
  %v1940 = vadd.f32 0.0, %v1939
  %1941 = vmatmul.f32.gmra.mxu0 %v1582
  %v1942 = vpop.f32.mrf.mxu0
  %v1943 = vadd.f32 0.0, %v1942
  %1944 = vmatmul.f32.gmra.mxu0 %v1585
  %v1945 = vpop.f32.mrf.mxu0
  %v1946 = vadd.f32 0.0, %v1945
  %1947 = vmatmul.f32.gmra.mxu0 %v1588
  %v1948 = vpop.f32.mrf.mxu0
  %v1949 = vadd.f32 0.0, %v1948
  %1950 = vdwg.mxu0
  %1951 = vmatpush.msra.mxu0 0.0
  %1952 = vmatpush.msra.mxu0 0.0
  %1953 = vmatpush.msra.mxu0 0.0
  %1954 = vmatpush.msra.mxu0 0.0
  %1955 = vmatpush.msra.mxu0 0.0
  %1956 = vmatpush.msra.mxu0 0.0
  %1957 = vmatpush.msra.mxu0 0.0
  %1958 = vmatpush.msra.mxu0 0.0
  %1959 = vmatpush.msra.mxu0 0.0
  %1960 = vmatpush.msra.mxu0 0.0
  %1961 = vmatpush.msra.mxu0 0.0
  %1962 = vmatpush.msra.mxu0 0.0
  %1963 = vmatpush.msra.mxu0 %v1827
  %1964 = vmatpush.msra.mxu0 %v1568
  %1965 = vmatpush.msra.mxu0 %v1561
  %1966 = vmatpush.msra.mxu0 %v1554
  %1967 = vmatmul.f32.gmra.mxu0 %v1579
  %v1968 = vpop.f32.mrf.mxu0
  %v1969 = vadd.f32 0.0, %v1968
  %1970 = vmatmul.f32.gmra.mxu0 %v1582
  %v1971 = vpop.f32.mrf.mxu0
  %v1972 = vadd.f32 0.0, %v1971
  %1973 = vmatmul.f32.gmra.mxu0 %v1585
  %v1974 = vpop.f32.mrf.mxu0
  %v1975 = vadd.f32 0.0, %v1974
  %1976 = vmatmul.f32.gmra.mxu0 %v1588
  %v1977 = vpop.f32.mrf.mxu0
  %v1978 = vadd.f32 0.0, %v1977
  %1979 = vdwg.mxu0
  %1980 = vmatpush.msra.mxu0 0.0
  %1981 = vmatpush.msra.mxu0 0.0
  %1982 = vmatpush.msra.mxu0 0.0
  %1983 = vmatpush.msra.mxu0 0.0
  %1984 = vmatpush.msra.mxu0 0.0
  %1985 = vmatpush.msra.mxu0 0.0
  %1986 = vmatpush.msra.mxu0 0.0
  %1987 = vmatpush.msra.mxu0 0.0
  %1988 = vmatpush.msra.mxu0 0.0
  %1989 = vmatpush.msra.mxu0 0.0
  %1990 = vmatpush.msra.mxu0 0.0
  %1991 = vmatpush.msra.mxu0 0.0
  %1992 = vmatpush.msra.mxu0 %v1830
  %1993 = vmatpush.msra.mxu0 %v1569
  %1994 = vmatpush.msra.mxu0 %v1562
  %1995 = vmatpush.msra.mxu0 %v1555
  %1996 = vmatmul.f32.gmra.mxu0 %v1579
  %v1997 = vpop.f32.mrf.mxu0
  %v1998 = vadd.f32 0.0, %v1997
  %1999 = vmatmul.f32.gmra.mxu0 %v1582
  %v2000 = vpop.f32.mrf.mxu0
  %v2001 = vadd.f32 0.0, %v2000
  %2002 = vmatmul.f32.gmra.mxu0 %v1585
  %v2003 = vpop.f32.mrf.mxu0
  %v2004 = vadd.f32 0.0, %v2003
  %2005 = vmatmul.f32.gmra.mxu0 %v1588
  %v2006 = vpop.f32.mrf.mxu0
  %v2007 = vadd.f32 0.0, %v2006
  %2008 = vdwg.mxu0
  %2009 = vmatpush.msra.mxu0 0.0
  %2010 = vmatpush.msra.mxu0 0.0
  %2011 = vmatpush.msra.mxu0 0.0
  %2012 = vmatpush.msra.mxu0 0.0
  %2013 = vmatpush.msra.mxu0 0.0
  %2014 = vmatpush.msra.mxu0 0.0
  %2015 = vmatpush.msra.mxu0 0.0
  %2016 = vmatpush.msra.mxu0 0.0
  %2017 = vmatpush.msra.mxu0 0.0
  %2018 = vmatpush.msra.mxu0 0.0
  %2019 = vmatpush.msra.mxu0 0.0
  %2020 = vmatpush.msra.mxu0 0.0
  %2021 = vmatpush.msra.mxu0 %v1833
  %2022 = vmatpush.msra.mxu0 %v1570
  %2023 = vmatpush.msra.mxu0 %v1563
  %2024 = vmatpush.msra.mxu0 %v1556
  %2025 = vmatmul.f32.gmra.mxu0 %v1579
  %v2026 = vpop.f32.mrf.mxu0
  %v2027 = vadd.f32 0.0, %v2026
  %2028 = vmatmul.f32.gmra.mxu0 %v1582
  %v2029 = vpop.f32.mrf.mxu0
  %v2030 = vadd.f32 0.0, %v2029
  %2031 = vmatmul.f32.gmra.mxu0 %v1585
  %v2032 = vpop.f32.mrf.mxu0
  %v2033 = vadd.f32 0.0, %v2032
  %2034 = vmatmul.f32.gmra.mxu0 %v1588
  %v2035 = vpop.f32.mrf.mxu0
  %v2036 = vadd.f32 0.0, %v2035
  %2037 = vdwg.mxu0
  %v2038 = vsub.f32 %v1853, %v1629
  %v2039 = vsub.f32 %v1882, %v1658
  %v2040 = vsub.f32 %v1911, %v1687
  %v2041 = vsub.f32 %v1940, %v1716
  %v2042 = vsub.f32 %v1969, %v1745
  %v2043 = vsub.f32 %v1998, %v1774
  %v2044 = vsub.f32 %v2027, %v1803
  %v2045 = vsub.f32 %v1856, %v1632
  %v2046 = vsub.f32 %v1885, %v1661
  %v2047 = vsub.f32 %v1914, %v1690
  %v2048 = vsub.f32 %v1943, %v1719
  %v2049 = vsub.f32 %v1972, %v1748
  %v2050 = vsub.f32 %v2001, %v1777
  %v2051 = vsub.f32 %v2030, %v1806
  %v2052 = vsub.f32 %v1859, %v1635
  %v2053 = vsub.f32 %v1888, %v1664
  %v2054 = vsub.f32 %v1917, %v1693
  %v2055 = vsub.f32 %v1946, %v1722
  %v2056 = vsub.f32 %v1975, %v1751
  %v2057 = vsub.f32 %v2004, %v1780
  %v2058 = vsub.f32 %v2033, %v1809
  %v2059 = vsub.f32 %v1862, %v1638
  %v2060 = vsub.f32 %v1891, %v1667
  %v2061 = vsub.f32 %v1920, %v1696
  %v2062 = vsub.f32 %v1949, %v1725
  %v2063 = vsub.f32 %v1978, %v1754
  %v2064 = vsub.f32 %v2007, %v1783
  %v2065 = vsub.f32 %v2036, %v1812
  %v2066 = vperm.slane %v204, 1
  %v2067 = vperm.slane %v205, 1
  %v2068 = vperm.slane %v206, 1
  %v2069 = vperm.slane %v207, 1
  %v2070 = vperm.slane %v208, 1
  %v2071 = vperm.slane %v209, 1
  %v2072 = vperm.slane %v210, 1
  %v2073 = vmul.f32 %v2066, %v2038
  %v2074 = vmul.f32 %v2067, %v2039
  %v2075 = vmul.f32 %v2068, %v2040
  %v2076 = vmul.f32 %v2069, %v2041
  %v2077 = vmul.f32 %v2070, %v2042
  %v2078 = vmul.f32 %v2071, %v2043
  %v2079 = vmul.f32 %v2072, %v2044
  %v2080 = vmul.f32 %v2066, %v2045
  %v2081 = vmul.f32 %v2067, %v2046
  %v2082 = vmul.f32 %v2068, %v2047
  %v2083 = vmul.f32 %v2069, %v2048
  %v2084 = vmul.f32 %v2070, %v2049
  %v2085 = vmul.f32 %v2071, %v2050
  %v2086 = vmul.f32 %v2072, %v2051
  %v2087 = vmul.f32 %v2066, %v2052
  %v2088 = vmul.f32 %v2067, %v2053
  %v2089 = vmul.f32 %v2068, %v2054
  %v2090 = vmul.f32 %v2069, %v2055
  %v2091 = vmul.f32 %v2070, %v2056
  %v2092 = vmul.f32 %v2071, %v2057
  %v2093 = vmul.f32 %v2072, %v2058
  %v2094 = vmul.f32 %v2066, %v2059
  %v2095 = vmul.f32 %v2067, %v2060
  %v2096 = vmul.f32 %v2068, %v2061
  %v2097 = vmul.f32 %v2069, %v2062
  %v2098 = vmul.f32 %v2070, %v2063
  %v2099 = vmul.f32 %v2071, %v2064
  %v2100 = vmul.f32 %v2072, %v2065
  %v2101 = vadd.f32 %v1629, %v2073
  %v2102 = vadd.f32 %v1658, %v2074
  %v2103 = vadd.f32 %v1687, %v2075
  %v2104 = vadd.f32 %v1716, %v2076
  %v2105 = vadd.f32 %v1745, %v2077
  %v2106 = vadd.f32 %v1774, %v2078
  %v2107 = vadd.f32 %v1803, %v2079
  %v2108 = vadd.f32 %v1632, %v2080
  %v2109 = vadd.f32 %v1661, %v2081
  %v2110 = vadd.f32 %v1690, %v2082
  %v2111 = vadd.f32 %v1719, %v2083
  %v2112 = vadd.f32 %v1748, %v2084
  %v2113 = vadd.f32 %v1777, %v2085
  %v2114 = vadd.f32 %v1806, %v2086
  %v2115 = vadd.f32 %v1635, %v2087
  %v2116 = vadd.f32 %v1664, %v2088
  %v2117 = vadd.f32 %v1693, %v2089
  %v2118 = vadd.f32 %v1722, %v2090
  %v2119 = vadd.f32 %v1751, %v2091
  %v2120 = vadd.f32 %v1780, %v2092
  %v2121 = vadd.f32 %v1809, %v2093
  %v2122 = vadd.f32 %v1638, %v2094
  %v2123 = vadd.f32 %v1667, %v2095
  %v2124 = vadd.f32 %v1696, %v2096
  %v2125 = vadd.f32 %v1725, %v2097
  %v2126 = vadd.f32 %v1754, %v2098
  %v2127 = vadd.f32 %v1783, %v2099
  %v2128 = vadd.f32 %v1812, %v2100
  %v2129 = vperm.slane %v225, 1
  %v2130 = vperm.slane %v226, 1
  %v2131 = vperm.slane %v227, 1
  %v2132 = vperm.slane %v228, 1
  %v2133 = vperm.slane %v229, 1
  %v2134 = vperm.slane %v230, 1
  %v2135 = vperm.slane %v231, 1
  %vm2136 = vcmp.eq.s32.totalorder %v18, %v2129
  %vm2137 = vcmp.eq.s32.totalorder %v18, %v2130
  %vm2138 = vcmp.eq.s32.totalorder %v18, %v2131
  %vm2139 = vcmp.eq.s32.totalorder %v18, %v2132
  %vm2140 = vcmp.eq.s32.totalorder %v18, %v2133
  %vm2141 = vcmp.eq.s32.totalorder %v18, %v2134
  %vm2142 = vcmp.eq.s32.totalorder %v18, %v2135
  %vm2143 = vcmp.eq.s32.totalorder %v19, %v2129
  %vm2144 = vcmp.eq.s32.totalorder %v19, %v2130
  %vm2145 = vcmp.eq.s32.totalorder %v19, %v2131
  %vm2146 = vcmp.eq.s32.totalorder %v19, %v2132
  %vm2147 = vcmp.eq.s32.totalorder %v19, %v2133
  %vm2148 = vcmp.eq.s32.totalorder %v19, %v2134
  %vm2149 = vcmp.eq.s32.totalorder %v19, %v2135
  %vm2150 = vcmp.eq.s32.totalorder %v20, %v2129
  %vm2151 = vcmp.eq.s32.totalorder %v20, %v2130
  %vm2152 = vcmp.eq.s32.totalorder %v20, %v2131
  %vm2153 = vcmp.eq.s32.totalorder %v20, %v2132
  %vm2154 = vcmp.eq.s32.totalorder %v20, %v2133
  %vm2155 = vcmp.eq.s32.totalorder %v20, %v2134
  %vm2156 = vcmp.eq.s32.totalorder %v20, %v2135
  %vm2157 = vcmp.eq.s32.totalorder %v21, %v2129
  %vm2158 = vcmp.eq.s32.totalorder %v21, %v2130
  %vm2159 = vcmp.eq.s32.totalorder %v21, %v2131
  %vm2160 = vcmp.eq.s32.totalorder %v21, %v2132
  %vm2161 = vcmp.eq.s32.totalorder %v21, %v2133
  %vm2162 = vcmp.eq.s32.totalorder %v21, %v2134
  %vm2163 = vcmp.eq.s32.totalorder %v21, %v2135
  %v2164 = vsel %vm2136, 1, 0
  %v2165 = vsel %vm2137, 1, 0
  %v2166 = vsel %vm2138, 1, 0
  %v2167 = vsel %vm2139, 1, 0
  %v2168 = vsel %vm2140, 1, 0
  %v2169 = vsel %vm2141, 1, 0
  %v2170 = vsel %vm2142, 1, 0
  %v2171 = vsel %vm2143, 1, 0
  %v2172 = vsel %vm2144, 1, 0
  %v2173 = vsel %vm2145, 1, 0
  %v2174 = vsel %vm2146, 1, 0
  %v2175 = vsel %vm2147, 1, 0
  %v2176 = vsel %vm2148, 1, 0
  %v2177 = vsel %vm2149, 1, 0
  %v2178 = vsel %vm2150, 1, 0
  %v2179 = vsel %vm2151, 1, 0
  %v2180 = vsel %vm2152, 1, 0
  %v2181 = vsel %vm2153, 1, 0
  %v2182 = vsel %vm2154, 1, 0
  %v2183 = vsel %vm2155, 1, 0
  %v2184 = vsel %vm2156, 1, 0
  %v2185 = vsel %vm2157, 1, 0
  %v2186 = vsel %vm2158, 1, 0
  %v2187 = vsel %vm2159, 1, 0
  %v2188 = vsel %vm2160, 1, 0
  %v2189 = vsel %vm2161, 1, 0
  %v2190 = vsel %vm2162, 1, 0
  %v2191 = vsel %vm2163, 1, 0
  %v2192 = vcvt.s32.f32 %v2164
  %v2193 = vcvt.s32.f32 %v2165
  %v2194 = vcvt.s32.f32 %v2166
  %v2195 = vcvt.s32.f32 %v2167
  %v2196 = vcvt.s32.f32 %v2168
  %v2197 = vcvt.s32.f32 %v2169
  %v2198 = vcvt.s32.f32 %v2170
  %v2199 = vcvt.s32.f32 %v2171
  %v2200 = vcvt.s32.f32 %v2172
  %v2201 = vcvt.s32.f32 %v2173
  %v2202 = vcvt.s32.f32 %v2174
  %v2203 = vcvt.s32.f32 %v2175
  %v2204 = vcvt.s32.f32 %v2176
  %v2205 = vcvt.s32.f32 %v2177
  %v2206 = vcvt.s32.f32 %v2178
  %v2207 = vcvt.s32.f32 %v2179
  %v2208 = vcvt.s32.f32 %v2180
  %v2209 = vcvt.s32.f32 %v2181
  %v2210 = vcvt.s32.f32 %v2182
  %v2211 = vcvt.s32.f32 %v2183
  %v2212 = vcvt.s32.f32 %v2184
  %v2213 = vcvt.s32.f32 %v2185
  %v2214 = vcvt.s32.f32 %v2186
  %v2215 = vcvt.s32.f32 %v2187
  %v2216 = vcvt.s32.f32 %v2188
  %v2217 = vcvt.s32.f32 %v2189
  %v2218 = vcvt.s32.f32 %v2190
  %v2219 = vcvt.s32.f32 %v2191
  %v2220 = vperm.slane %v239, 1
  %v2221 = vperm.slane %v240, 1
  %v2222 = vperm.slane %v241, 1
  %v2223 = vperm.slane %v242, 1
  %v2224 = vperm.slane %v243, 1
  %v2225 = vperm.slane %v244, 1
  %v2226 = vperm.slane %v245, 1
  %vm2227 = vcmp.eq.s32.totalorder %v18, %v2220
  %vm2228 = vcmp.eq.s32.totalorder %v18, %v2221
  %vm2229 = vcmp.eq.s32.totalorder %v18, %v2222
  %vm2230 = vcmp.eq.s32.totalorder %v18, %v2223
  %vm2231 = vcmp.eq.s32.totalorder %v18, %v2224
  %vm2232 = vcmp.eq.s32.totalorder %v18, %v2225
  %vm2233 = vcmp.eq.s32.totalorder %v18, %v2226
  %vm2234 = vcmp.eq.s32.totalorder %v19, %v2220
  %vm2235 = vcmp.eq.s32.totalorder %v19, %v2221
  %vm2236 = vcmp.eq.s32.totalorder %v19, %v2222
  %vm2237 = vcmp.eq.s32.totalorder %v19, %v2223
  %vm2238 = vcmp.eq.s32.totalorder %v19, %v2224
  %vm2239 = vcmp.eq.s32.totalorder %v19, %v2225
  %vm2240 = vcmp.eq.s32.totalorder %v19, %v2226
  %vm2241 = vcmp.eq.s32.totalorder %v20, %v2220
  %vm2242 = vcmp.eq.s32.totalorder %v20, %v2221
  %vm2243 = vcmp.eq.s32.totalorder %v20, %v2222
  %vm2244 = vcmp.eq.s32.totalorder %v20, %v2223
  %vm2245 = vcmp.eq.s32.totalorder %v20, %v2224
  %vm2246 = vcmp.eq.s32.totalorder %v20, %v2225
  %vm2247 = vcmp.eq.s32.totalorder %v20, %v2226
  %vm2248 = vcmp.eq.s32.totalorder %v21, %v2220
  %vm2249 = vcmp.eq.s32.totalorder %v21, %v2221
  %vm2250 = vcmp.eq.s32.totalorder %v21, %v2222
  %vm2251 = vcmp.eq.s32.totalorder %v21, %v2223
  %vm2252 = vcmp.eq.s32.totalorder %v21, %v2224
  %vm2253 = vcmp.eq.s32.totalorder %v21, %v2225
  %vm2254 = vcmp.eq.s32.totalorder %v21, %v2226
  %v2255 = vsel %vm2227, 1, 0
  %v2256 = vsel %vm2228, 1, 0
  %v2257 = vsel %vm2229, 1, 0
  %v2258 = vsel %vm2230, 1, 0
  %v2259 = vsel %vm2231, 1, 0
  %v2260 = vsel %vm2232, 1, 0
  %v2261 = vsel %vm2233, 1, 0
  %v2262 = vsel %vm2234, 1, 0
  %v2263 = vsel %vm2235, 1, 0
  %v2264 = vsel %vm2236, 1, 0
  %v2265 = vsel %vm2237, 1, 0
  %v2266 = vsel %vm2238, 1, 0
  %v2267 = vsel %vm2239, 1, 0
  %v2268 = vsel %vm2240, 1, 0
  %v2269 = vsel %vm2241, 1, 0
  %v2270 = vsel %vm2242, 1, 0
  %v2271 = vsel %vm2243, 1, 0
  %v2272 = vsel %vm2244, 1, 0
  %v2273 = vsel %vm2245, 1, 0
  %v2274 = vsel %vm2246, 1, 0
  %v2275 = vsel %vm2247, 1, 0
  %v2276 = vsel %vm2248, 1, 0
  %v2277 = vsel %vm2249, 1, 0
  %v2278 = vsel %vm2250, 1, 0
  %v2279 = vsel %vm2251, 1, 0
  %v2280 = vsel %vm2252, 1, 0
  %v2281 = vsel %vm2253, 1, 0
  %v2282 = vsel %vm2254, 1, 0
  %v2283 = vcvt.s32.f32 %v2255
  %v2284 = vcvt.s32.f32 %v2256
  %v2285 = vcvt.s32.f32 %v2257
  %v2286 = vcvt.s32.f32 %v2258
  %v2287 = vcvt.s32.f32 %v2259
  %v2288 = vcvt.s32.f32 %v2260
  %v2289 = vcvt.s32.f32 %v2261
  %v2290 = vcvt.s32.f32 %v2262
  %v2291 = vcvt.s32.f32 %v2263
  %v2292 = vcvt.s32.f32 %v2264
  %v2293 = vcvt.s32.f32 %v2265
  %v2294 = vcvt.s32.f32 %v2266
  %v2295 = vcvt.s32.f32 %v2267
  %v2296 = vcvt.s32.f32 %v2268
  %v2297 = vcvt.s32.f32 %v2269
  %v2298 = vcvt.s32.f32 %v2270
  %v2299 = vcvt.s32.f32 %v2271
  %v2300 = vcvt.s32.f32 %v2272
  %v2301 = vcvt.s32.f32 %v2273
  %v2302 = vcvt.s32.f32 %v2274
  %v2303 = vcvt.s32.f32 %v2275
  %v2304 = vcvt.s32.f32 %v2276
  %v2305 = vcvt.s32.f32 %v2277
  %v2306 = vcvt.s32.f32 %v2278
  %v2307 = vcvt.s32.f32 %v2279
  %v2308 = vcvt.s32.f32 %v2280
  %v2309 = vcvt.s32.f32 %v2281
  %v2310 = vcvt.s32.f32 %v2282
  %v2311 = vsub.f32 %v2283, %v2192
  %v2312 = vsub.f32 %v2284, %v2193
  %v2313 = vsub.f32 %v2285, %v2194
  %v2314 = vsub.f32 %v2286, %v2195
  %v2315 = vsub.f32 %v2287, %v2196
  %v2316 = vsub.f32 %v2288, %v2197
  %v2317 = vsub.f32 %v2289, %v2198
  %v2318 = vsub.f32 %v2290, %v2199
  %v2319 = vsub.f32 %v2291, %v2200
  %v2320 = vsub.f32 %v2292, %v2201
  %v2321 = vsub.f32 %v2293, %v2202
  %v2322 = vsub.f32 %v2294, %v2203
  %v2323 = vsub.f32 %v2295, %v2204
  %v2324 = vsub.f32 %v2296, %v2205
  %v2325 = vsub.f32 %v2297, %v2206
  %v2326 = vsub.f32 %v2298, %v2207
  %v2327 = vsub.f32 %v2299, %v2208
  %v2328 = vsub.f32 %v2300, %v2209
  %v2329 = vsub.f32 %v2301, %v2210
  %v2330 = vsub.f32 %v2302, %v2211
  %v2331 = vsub.f32 %v2303, %v2212
  %v2332 = vsub.f32 %v2304, %v2213
  %v2333 = vsub.f32 %v2305, %v2214
  %v2334 = vsub.f32 %v2306, %v2215
  %v2335 = vsub.f32 %v2307, %v2216
  %v2336 = vsub.f32 %v2308, %v2217
  %v2337 = vsub.f32 %v2309, %v2218
  %v2338 = vsub.f32 %v2310, %v2219
  %v2339 = vperm.slane %v211, 1
  %v2340 = vperm.slane %v212, 1
  %v2341 = vperm.slane %v213, 1
  %v2342 = vperm.slane %v214, 1
  %v2343 = vperm.slane %v215, 1
  %v2344 = vperm.slane %v216, 1
  %v2345 = vperm.slane %v217, 1
  %v2346 = vmul.f32 %v2339, %v2311
  %v2347 = vmul.f32 %v2340, %v2312
  %v2348 = vmul.f32 %v2341, %v2313
  %v2349 = vmul.f32 %v2342, %v2314
  %v2350 = vmul.f32 %v2343, %v2315
  %v2351 = vmul.f32 %v2344, %v2316
  %v2352 = vmul.f32 %v2345, %v2317
  %v2353 = vmul.f32 %v2339, %v2318
  %v2354 = vmul.f32 %v2340, %v2319
  %v2355 = vmul.f32 %v2341, %v2320
  %v2356 = vmul.f32 %v2342, %v2321
  %v2357 = vmul.f32 %v2343, %v2322
  %v2358 = vmul.f32 %v2344, %v2323
  %v2359 = vmul.f32 %v2345, %v2324
  %v2360 = vmul.f32 %v2339, %v2325
  %v2361 = vmul.f32 %v2340, %v2326
  %v2362 = vmul.f32 %v2341, %v2327
  %v2363 = vmul.f32 %v2342, %v2328
  %v2364 = vmul.f32 %v2343, %v2329
  %v2365 = vmul.f32 %v2344, %v2330
  %v2366 = vmul.f32 %v2345, %v2331
  %v2367 = vmul.f32 %v2339, %v2332
  %v2368 = vmul.f32 %v2340, %v2333
  %v2369 = vmul.f32 %v2341, %v2334
  %v2370 = vmul.f32 %v2342, %v2335
  %v2371 = vmul.f32 %v2343, %v2336
  %v2372 = vmul.f32 %v2344, %v2337
  %v2373 = vmul.f32 %v2345, %v2338
  %v2374 = vadd.f32 %v2192, %v2346
  %v2375 = vadd.f32 %v2193, %v2347
  %v2376 = vadd.f32 %v2194, %v2348
  %v2377 = vadd.f32 %v2195, %v2349
  %v2378 = vadd.f32 %v2196, %v2350
  %v2379 = vadd.f32 %v2197, %v2351
  %v2380 = vadd.f32 %v2198, %v2352
  %v2381 = vadd.f32 %v2199, %v2353
  %v2382 = vadd.f32 %v2200, %v2354
  %v2383 = vadd.f32 %v2201, %v2355
  %v2384 = vadd.f32 %v2202, %v2356
  %v2385 = vadd.f32 %v2203, %v2357
  %v2386 = vadd.f32 %v2204, %v2358
  %v2387 = vadd.f32 %v2205, %v2359
  %v2388 = vadd.f32 %v2206, %v2360
  %v2389 = vadd.f32 %v2207, %v2361
  %v2390 = vadd.f32 %v2208, %v2362
  %v2391 = vadd.f32 %v2209, %v2363
  %v2392 = vadd.f32 %v2210, %v2364
  %v2393 = vadd.f32 %v2211, %v2365
  %v2394 = vadd.f32 %v2212, %v2366
  %v2395 = vadd.f32 %v2213, %v2367
  %v2396 = vadd.f32 %v2214, %v2368
  %v2397 = vadd.f32 %v2215, %v2369
  %v2398 = vadd.f32 %v2216, %v2370
  %v2399 = vadd.f32 %v2217, %v2371
  %v2400 = vadd.f32 %v2218, %v2372
  %v2401 = vadd.f32 %v2219, %v2373
  %v2402 = vmul.f32 %v2374, %v2101
  %v2403 = vmul.f32 %v2375, %v2102
  %v2404 = vmul.f32 %v2376, %v2103
  %v2405 = vmul.f32 %v2377, %v2104
  %v2406 = vmul.f32 %v2378, %v2105
  %v2407 = vmul.f32 %v2379, %v2106
  %v2408 = vmul.f32 %v2380, %v2107
  %v2409 = vmul.f32 %v2381, %v2108
  %v2410 = vmul.f32 %v2382, %v2109
  %v2411 = vmul.f32 %v2383, %v2110
  %v2412 = vmul.f32 %v2384, %v2111
  %v2413 = vmul.f32 %v2385, %v2112
  %v2414 = vmul.f32 %v2386, %v2113
  %v2415 = vmul.f32 %v2387, %v2114
  %v2416 = vmul.f32 %v2388, %v2115
  %v2417 = vmul.f32 %v2389, %v2116
  %v2418 = vmul.f32 %v2390, %v2117
  %v2419 = vmul.f32 %v2391, %v2118
  %v2420 = vmul.f32 %v2392, %v2119
  %v2421 = vmul.f32 %v2393, %v2120
  %v2422 = vmul.f32 %v2394, %v2121
  %v2423 = vmul.f32 %v2395, %v2122
  %v2424 = vmul.f32 %v2396, %v2123
  %v2425 = vmul.f32 %v2397, %v2124
  %v2426 = vmul.f32 %v2398, %v2125
  %v2427 = vmul.f32 %v2399, %v2126
  %v2428 = vmul.f32 %v2400, %v2127
  %v2429 = vmul.f32 %v2401, %v2128
  %v2430 = vadd.f32 %v2402, %v2409
  %v2431 = vadd.f32 %v2430, %v2416
  %v2432 = vsel %vm445, %v2423, 0.0
  %v2433 = vadd.f32 %v2431, %v2432
  %v2434 = vrot.slane %v2433, 4
  %v2435 = vadd.f32 %v2433, %v2434
  %v2436 = vrot.slane %v2435, 2
  %v2437 = vadd.f32 %v2435, %v2436
  %v2438 = vrot.slane %v2437, 1
  %v2439 = vadd.f32 %v2437, %v2438
  %v2440 = vadd.f32 %v2403, %v2410
  %v2441 = vadd.f32 %v2440, %v2417
  %v2442 = vsel %vm445, %v2424, 0.0
  %v2443 = vadd.f32 %v2441, %v2442
  %v2444 = vrot.slane %v2443, 4
  %v2445 = vadd.f32 %v2443, %v2444
  %v2446 = vrot.slane %v2445, 2
  %v2447 = vadd.f32 %v2445, %v2446
  %v2448 = vrot.slane %v2447, 1
  %v2449 = vadd.f32 %v2447, %v2448
  %v2450 = vadd.f32 %v2404, %v2411
  %v2451 = vadd.f32 %v2450, %v2418
  %v2452 = vsel %vm445, %v2425, 0.0
  %v2453 = vadd.f32 %v2451, %v2452
  %v2454 = vrot.slane %v2453, 4
  %v2455 = vadd.f32 %v2453, %v2454
  %v2456 = vrot.slane %v2455, 2
  %v2457 = vadd.f32 %v2455, %v2456
  %v2458 = vrot.slane %v2457, 1
  %v2459 = vadd.f32 %v2457, %v2458
  %v2460 = vadd.f32 %v2405, %v2412
  %v2461 = vadd.f32 %v2460, %v2419
  %v2462 = vsel %vm445, %v2426, 0.0
  %v2463 = vadd.f32 %v2461, %v2462
  %v2464 = vrot.slane %v2463, 4
  %v2465 = vadd.f32 %v2463, %v2464
  %v2466 = vrot.slane %v2465, 2
  %v2467 = vadd.f32 %v2465, %v2466
  %v2468 = vrot.slane %v2467, 1
  %v2469 = vadd.f32 %v2467, %v2468
  %v2470 = vadd.f32 %v2406, %v2413
  %v2471 = vadd.f32 %v2470, %v2420
  %v2472 = vsel %vm445, %v2427, 0.0
  %v2473 = vadd.f32 %v2471, %v2472
  %v2474 = vrot.slane %v2473, 4
  %v2475 = vadd.f32 %v2473, %v2474
  %v2476 = vrot.slane %v2475, 2
  %v2477 = vadd.f32 %v2475, %v2476
  %v2478 = vrot.slane %v2477, 1
  %v2479 = vadd.f32 %v2477, %v2478
  %v2480 = vadd.f32 %v2407, %v2414
  %v2481 = vadd.f32 %v2480, %v2421
  %v2482 = vsel %vm445, %v2428, 0.0
  %v2483 = vadd.f32 %v2481, %v2482
  %v2484 = vrot.slane %v2483, 4
  %v2485 = vadd.f32 %v2483, %v2484
  %v2486 = vrot.slane %v2485, 2
  %v2487 = vadd.f32 %v2485, %v2486
  %v2488 = vrot.slane %v2487, 1
  %v2489 = vadd.f32 %v2487, %v2488
  %v2490 = vsel %vm1346, %v2408, 0.0
  %v2491 = vsel %vm1346, %v2415, 0.0
  %v2492 = vadd.f32 %v2490, %v2491
  %v2493 = vsel %vm1346, %v2422, 0.0
  %v2494 = vadd.f32 %v2492, %v2493
  %v2495 = vsel %vm1352, %v2429, 0.0
  %v2496 = vadd.f32 %v2494, %v2495
  %v2497 = vrot.slane %v2496, 4
  %v2498 = vadd.f32 %v2496, %v2497
  %v2499 = vrot.slane %v2498, 2
  %v2500 = vadd.f32 %v2498, %v2499
  %v2501 = vrot.slane %v2500, 1
  %v2502 = vadd.f32 %v2500, %v2501
  %v2510 = vrot.slane %v2449, 7
  %v2511 = vrot.slane %v2459, 6
  %v2512 = vrot.slane %v2469, 5
  %v2513 = vrot.slane %v2479, 4
  %v2514 = vrot.slane %v2489, 3
  %v2515 = vrot.slane %v2502, 2
  %v2516 = vsel %vm1374, %v2439, %v2510
  %v2517 = vsel %vm1376, %v2511, %v2512
  %v2518 = vsel %vm1378, %v2516, %v2517
  %v2519 = vsel %vm1380, %v2513, %v2514
  %v2520 = vsel %vm1382, %v2519, %v2515
  %v2521 = vsel %vm445, %v2518, %v2520
  %s2523 = scalar_lea.vmem %s3, 7
  %2524 = vst.msk [vmem:[%s2523] sm:$0x7f] %vm1389, %v2521
  // Predicated region
  $region14: #{net_with_stn_forward.10} parent=0 // pred_check
    _
  $region15: #{net_with_stn_forward.10} parent=0 // pred_check_branch
    %2526 = sbr.rel (0) target = $region17
  $region16: #{net_with_stn_forward.10} parent=0 // pred_region
    _
  $region17: #{net_with_stn_forward.10} parent=0 // pred_fallthru
    _
  // Predicated region
  $region18: #{net_with_stn_forward.10} parent=0 // pred_check
    _
  $region19: #{net_with_stn_forward.10} parent=0 // pred_check_branch
    %2528 = sbr.rel (0) target = $region21
  $region20: #{net_with_stn_forward.10} parent=0 // pred_region
    _
  $region21: #{net_with_stn_forward.10} parent=0 // pred_fallthru
    _

</llo_original>
